<compile_context>
chip_gen: v6e
topology: v6e:2x2x1
jax: 0.10.0
libtpu: 0.0.40
codegen_flags: <defaults>
</compile_context>

<pallas_src>
import jax
import jax.numpy as jnp
from jax.experimental import pallas as pl
from jax.experimental.pallas import tpu as pltpu


# ---------------------------------------------------------------------------
# Fixed LeNet geometry (dictated by the PyTorch module: fc1 expects 16*5*5,
# which forces a 32x32 spatial input).
# ---------------------------------------------------------------------------
_C1, _OC1, _K1 = 3, 6, 5          # conv1: 3 -> 6, 5x5, valid
_C2, _OC2, _K2 = 6, 16, 5         # conv2: 6 -> 16, 5x5, valid
_H0 = _W0 = 32                    # input spatial
_H1 = _W1 = _H0 - _K1 + 1         # 28   conv1 output
_PH1 = _PW1 = _H1 // 2            # 14   after pool
_H2 = _W2 = _PH1 - _K2 + 1        # 10   conv2 output
_PH2 = _PW2 = _H2 // 2            # 5    after pool
_FC1, _FC2, _FC3 = 120, 84, 10


# ---------------------------------------------------------------------------
# The fused kernel (one grid step == one batch element).
# ---------------------------------------------------------------------------
def _lenet_kernel(x_ref, t1_ref, bb1_ref, g1_ref, s1_ref,
                  t2_ref, bb2_ref, g2_ref, s2_ref,
                  w1_ref, b1_ref, w2_ref, b2_ref, w3_ref, b3_ref, o_ref):
    f32 = jnp.float32

    def conv_relu_pool(x2d, t_ref, brow_ref, g_ref, s_ref, kh_total, oh):
        # x2d: (H, W*C) rows of the NHWC image.  For each kh, rows [kh, kh+OH)
        # hit a (W*C, OW*OC) Toeplitz table -> conv output in (OH, OW*OC).
        acc = jnp.dot(x2d[0:oh, :], t_ref[0], preferred_element_type=f32)
        for kh in range(1, kh_total):
            acc = acc + jnp.dot(x2d[kh:kh + oh, :], t_ref[kh],
                                preferred_element_type=f32)
        y = jnp.maximum(acc + brow_ref[...], 0.0)          # bias + ReLU
        # 2x2 max pool via exact 0/1 selection matmuls:
        #   columns (ow pairs): y @ G_even / y @ G_odd, then max
        yw = jnp.maximum(jnp.dot(y, g_ref[0], preferred_element_type=f32),
                         jnp.dot(y, g_ref[1], preferred_element_type=f32))
        #   rows (oh pairs): S_even @ yw / S_odd @ yw, then max
        return jnp.maximum(jnp.dot(s_ref[0], yw, preferred_element_type=f32),
                           jnp.dot(s_ref[1], yw, preferred_element_type=f32))

    x0 = x_ref[0]                                                       # (32, 96)
    p1 = conv_relu_pool(x0, t1_ref, bb1_ref, g1_ref, s1_ref, _K1, _H1)  # (14, 84)
    p2 = conv_relu_pool(p1, t2_ref, bb2_ref, g2_ref, s2_ref, _K2, _H2)  # (5, 80)

    # fc1 on the (h, w*c) layout: contract row-by-row against (5, 80, 120).
    h1 = jnp.dot(p2[0:1, :], w1_ref[0], preferred_element_type=f32)
    for r in range(1, _PH2):
        h1 = h1 + jnp.dot(p2[r:r + 1, :], w1_ref[r], preferred_element_type=f32)
    h1 = jnp.maximum(h1 + b1_ref[...], 0.0)                             # (1, 120)
    h2 = jnp.maximum(jnp.dot(h1, w2_ref[...], preferred_element_type=f32)
                     + b2_ref[...], 0.0)                                # (1, 84)
    out = jnp.dot(h2, w3_ref[...], preferred_element_type=f32) + b3_ref[...]
    o_ref[0] = out.astype(o_ref.dtype)                                  # (1, 10)


# ---------------------------------------------------------------------------
# One-time parameter preparation (outside the hot path).
# ---------------------------------------------------------------------------
def _conv_tables(w, b, w_in):
    """PyTorch (OC, C, KH, KW) conv weights -> per-kh Toeplitz matmul tables,
    tiled bias row, and even/odd pooling selection matrices."""
    oc, c, khn, kwn = w.shape
    ow = w_in - kwn + 1
    oh = ow                       # square images throughout this model
    t_list = []
    for kh in range(khn):
        t = jnp.zeros((w_in * c, ow * oc), jnp.float32)
        for kw in range(kwn):
            sel = jnp.eye(w_in, ow, k=-kw, dtype=jnp.float32)   # sel[j+kw, j] = 1
            t = t + jnp.kron(sel, w[:, :, kh, kw].T.astype(jnp.float32))
        t_list.append(t)
    t = jnp.stack(t_list, axis=0)                               # (KH, W*C, OW*OC)
    brow = jnp.tile(b.astype(jnp.float32), ow).reshape(1, ow * oc)
    eye_ow = jnp.eye(ow, dtype=jnp.float32)
    eye_oc = jnp.eye(oc, dtype=jnp.float32)
    g = jnp.stack([jnp.kron(eye_ow[:, 0::2], eye_oc),           # even ow columns
                   jnp.kron(eye_ow[:, 1::2], eye_oc)], axis=0)  # odd  ow columns
    eye_oh = jnp.eye(oh, dtype=jnp.float32)
    s = jnp.stack([eye_oh[0::2, :], eye_oh[1::2, :]], axis=0)   # even/odd oh rows
    return t, brow, g, s


def prepare_params(params):
    t1, bb1, g1, s1 = _conv_tables(params["conv1_w"], params["conv1_b"], _W0)
    t2, bb2, g2, s2 = _conv_tables(params["conv2_w"], params["conv2_b"], _PW1)
    # PyTorch fc1 columns are flattened in (c, h, w) order; our activations are
    # (h, w, c) -> permute once here, then split into per-row (h) slabs.
    w1 = params["fc1_w"].reshape(_FC1, _OC2, _PH2, _PW2).transpose(0, 2, 3, 1)
    w1 = w1.reshape(_FC1, _PH2 * _PW2 * _OC2).T.reshape(_PH2, _PW2 * _OC2, _FC1)
    return {
        "t1": t1, "bb1": bb1, "g1": g1, "s1": s1,
        "t2": t2, "bb2": bb2, "g2": g2, "s2": s2,
        "w1": w1.astype(jnp.float32),
        "b1": params["fc1_b"].reshape(1, _FC1).astype(jnp.float32),
        "w2": params["fc2_w"].T.astype(jnp.float32),
        "b2": params["fc2_b"].reshape(1, _FC2).astype(jnp.float32),
        "w3": params["fc3_w"].T.astype(jnp.float32),
        "b3": params["fc3_b"].reshape(1, _FC3).astype(jnp.float32),
    }


# ---------------------------------------------------------------------------
# Forward pass: one pallas_call over a batch-parallel grid.
# ---------------------------------------------------------------------------
_WEIGHT_ORDER = ("t1", "bb1", "g1", "s1", "t2", "bb2", "g2", "s2",
                 "w1", "b1", "w2", "b2", "w3", "b3")


def _const_spec(a):
    zeros = (0,) * a.ndim
    return pl.BlockSpec(a.shape, lambda b: zeros)


def the_model_forward(x, prep):
    B = x.shape[0]
    # Model boundary: NCHW -> NHWC, collapsed to lane-dense (H, W*C) rows.
    x_rows = jnp.transpose(x, (0, 2, 3, 1)).reshape(B, _H0, _W0 * _C1)
    weights = [prep[k] for k in _WEIGHT_ORDER]

    out = pl.pallas_call(
        _lenet_kernel,
        out_shape=jax.ShapeDtypeStruct((B, 1, _FC3), jnp.float32),
        grid=(B,),
        in_specs=[pl.BlockSpec((1, _H0, _W0 * _C1), lambda b: (b, 0, 0))]
                 + [_const_spec(a) for a in weights],
        out_specs=pl.BlockSpec((1, 1, _FC3), lambda b: (b, 0, 0)),
        compiler_params=pltpu.CompilerParams(
            dimension_semantics=("parallel",)),
    )(x_rows, *weights)
    return out.reshape(B, _FC3)


# ---------------------------------------------------------------------------
# Pure-JAX reference (independent code path) and synthetic weights.
# ---------------------------------------------------------------------------
def _reference_forward(x, params):
    hi = jax.lax.Precision.HIGHEST
    dn1 = jax.lax.conv_dimension_numbers(x.shape, params["conv1_w"].shape,
                                         ("NCHW", "OIHW", "NCHW"))
    y = jax.lax.conv_general_dilated(x, params["conv1_w"], (1, 1), "VALID",
                                     dimension_numbers=dn1, precision=hi)
    y = jnp.maximum(y + params["conv1_b"][None, :, None, None], 0.0)
    y = jax.lax.reduce_window(y, -jnp.inf, jax.lax.max,
                              (1, 1, 2, 2), (1, 1, 2, 2), "VALID")
    dn2 = jax.lax.conv_dimension_numbers(y.shape, params["conv2_w"].shape,
                                         ("NCHW", "OIHW", "NCHW"))
    y = jax.lax.conv_general_dilated(y, params["conv2_w"], (1, 1), "VALID",
                                     dimension_numbers=dn2, precision=hi)
    y = jnp.maximum(y + params["conv2_b"][None, :, None, None], 0.0)
    y = jax.lax.reduce_window(y, -jnp.inf, jax.lax.max,
                              (1, 1, 2, 2), (1, 1, 2, 2), "VALID")
    y = y.reshape(y.shape[0], -1)
    y = jnp.maximum(jnp.dot(y, params["fc1_w"].T, precision=hi) + params["fc1_b"], 0.0)
    y = jnp.maximum(jnp.dot(y, params["fc2_w"].T, precision=hi) + params["fc2_b"], 0.0)
    return jnp.dot(y, params["fc3_w"].T, precision=hi) + params["fc3_b"]


def init_params(key):
    ks = jax.random.split(key, 10)
    def u(k, shape, fan_in):
        bound = 1.0 / jnp.sqrt(fan_in)
        return jax.random.uniform(k, shape, jnp.float32, -bound, bound)
    return {
        "conv1_w": u(ks[0], (_OC1, _C1, _K1, _K1), _C1 * _K1 * _K1),
        "conv1_b": u(ks[1], (_OC1,), _C1 * _K1 * _K1),
        "conv2_w": u(ks[2], (_OC2, _C2, _K2, _K2), _C2 * _K2 * _K2),
        "conv2_b": u(ks[3], (_OC2,), _C2 * _K2 * _K2),
        "fc1_w":   u(ks[4], (_FC1, _OC2 * _PH2 * _PW2), _OC2 * _PH2 * _PW2),
        "fc1_b":   u(ks[5], (_FC1,), _OC2 * _PH2 * _PW2),
        "fc2_w":   u(ks[6], (_FC2, _FC1), _FC1),
        "fc2_b":   u(ks[7], (_FC2,), _FC1),
        "fc3_w":   u(ks[8], (_FC3, _FC2), _FC2),
        "fc3_b":   u(ks[9], (_FC3,), _FC2),
    }


if __name__ == "__main__":
    key = jax.random.PRNGKey(0)
    k_x, k_p = jax.random.split(key)
    # 32x32 spatial is required by the module's own geometry (16*5*5 flatten).
    x = jax.random.normal(k_x, (2, _C1, _H0, _W0), dtype=jnp.float32)
    params = init_params(k_p)

    prep = prepare_params(params)              # one-time weight prep (not hot path)
    fwd = jax.jit(the_model_forward)
    out = jax.block_until_ready(fwd(x, prep))
    assert out.shape == (2, _FC3) and out.dtype == jnp.float32

    ref = _reference_forward(x, params)
    max_err = float(jnp.max(jnp.abs(out - ref)))
    assert jnp.allclose(out, ref, atol=5e-2, rtol=5e-2), max_err
    print("KERNEL_OK")
</pallas_src>

<mosaic_0001>
module attributes {stable_mosaic.version = 11 : i64} {
  func.func @_lenet_kernel(%arg0: i32, %arg1: memref<1x32x96xf32, #tpu.memory_space<vmem>>, %arg2: memref<5x96x168xf32, #tpu.memory_space<vmem>>, %arg3: memref<1x168xf32, #tpu.memory_space<vmem>>, %arg4: memref<2x168x84xf32, #tpu.memory_space<vmem>>, %arg5: memref<2x14x28xf32, #tpu.memory_space<vmem>>, %arg6: memref<5x84x160xf32, #tpu.memory_space<vmem>>, %arg7: memref<1x160xf32, #tpu.memory_space<vmem>>, %arg8: memref<2x160x80xf32, #tpu.memory_space<vmem>>, %arg9: memref<2x5x10xf32, #tpu.memory_space<vmem>>, %arg10: memref<5x80x120xf32, #tpu.memory_space<vmem>>, %arg11: memref<1x120xf32, #tpu.memory_space<vmem>>, %arg12: memref<120x84xf32, #tpu.memory_space<vmem>>, %arg13: memref<1x84xf32, #tpu.memory_space<vmem>>, %arg14: memref<84x10xf32, #tpu.memory_space<vmem>>, %arg15: memref<1x10xf32, #tpu.memory_space<vmem>>, %arg16: memref<1x1x10xf32, #tpu.memory_space<vmem>>) attributes {dimension_semantics = [#tpu.dimension_semantics<parallel>], iteration_bounds = array<i64: 2>, scalar_prefetch = 0 : i64, scratch_operands = 0 : i64, tpu.core_type = #tpu.core_type<tc>, window_params = [{transform_indices = @transform_0, window_bounds = array<i64: 1, 32, 96>}, {pipeline_mode = #tpu.pipeline_mode<synchronous>, transform_indices = @transform_1, window_bounds = array<i64: 5, 96, 168>}, {pipeline_mode = #tpu.pipeline_mode<synchronous>, transform_indices = @transform_2, window_bounds = array<i64: 1, 168>}, {pipeline_mode = #tpu.pipeline_mode<synchronous>, transform_indices = @transform_3, window_bounds = array<i64: 2, 168, 84>}, {pipeline_mode = #tpu.pipeline_mode<synchronous>, transform_indices = @transform_4, window_bounds = array<i64: 2, 14, 28>}, {pipeline_mode = #tpu.pipeline_mode<synchronous>, transform_indices = @transform_5, window_bounds = array<i64: 5, 84, 160>}, {pipeline_mode = #tpu.pipeline_mode<synchronous>, transform_indices = @transform_6, window_bounds = array<i64: 1, 160>}, {pipeline_mode = #tpu.pipeline_mode<synchronous>, transform_indices = @transform_7, window_bounds = array<i64: 2, 160, 80>}, {pipeline_mode = #tpu.pipeline_mode<synchronous>, transform_indices = @transform_8, window_bounds = array<i64: 2, 5, 10>}, {pipeline_mode = #tpu.pipeline_mode<synchronous>, transform_indices = @transform_9, window_bounds = array<i64: 5, 80, 120>}, {pipeline_mode = #tpu.pipeline_mode<synchronous>, transform_indices = @transform_10, window_bounds = array<i64: 1, 120>}, {pipeline_mode = #tpu.pipeline_mode<synchronous>, transform_indices = @transform_11, window_bounds = array<i64: 120, 84>}, {pipeline_mode = #tpu.pipeline_mode<synchronous>, transform_indices = @transform_12, window_bounds = array<i64: 1, 84>}, {pipeline_mode = #tpu.pipeline_mode<synchronous>, transform_indices = @transform_13, window_bounds = array<i64: 84, 10>}, {pipeline_mode = #tpu.pipeline_mode<synchronous>, transform_indices = @transform_14, window_bounds = array<i64: 1, 10>}, {transform_indices = @transform_15, window_bounds = array<i64: 1, 1, 10>}]} {
    %c0 = arith.constant 0 : index
    %c0_0 = arith.constant 0 : index
    %c0_1 = arith.constant 0 : index
    %0 = vector.load %arg1[%c0, %c0_0, %c0_1] : memref<1x32x96xf32, #tpu.memory_space<vmem>>, vector<1x32x96xf32>
    %1 = vector.shape_cast %0 : vector<1x32x96xf32> to vector<32x96xf32>
    %2 = vector.extract_strided_slice %1 {offsets = [0, 0], sizes = [28, 96], strides = [1, 1]} : vector<32x96xf32> to vector<28x96xf32>
    %c0_2 = arith.constant 0 : index
    %c0_3 = arith.constant 0 : index
    %c0_4 = arith.constant 0 : index
    %3 = vector.load %arg2[%c0_2, %c0_3, %c0_4] : memref<5x96x168xf32, #tpu.memory_space<vmem>>, vector<1x96x168xf32>
    %4 = vector.shape_cast %3 : vector<1x96x168xf32> to vector<96x168xf32>
    %cst = arith.constant dense<0.000000e+00> : vector<28x168xf32>
    %5 = tpu.matmul %2, %4, %cst {dimension_numbers = #tpu.dot_dimension_numbers<[1], [0], [0], [1], [0, 0, 1, 1], [], []>} : vector<28x96xf32>, vector<96x168xf32>, vector<28x168xf32> -> vector<28x168xf32>
    %6 = vector.extract_strided_slice %1 {offsets = [1, 0], sizes = [28, 96], strides = [1, 1]} : vector<32x96xf32> to vector<28x96xf32>
    %c1 = arith.constant 1 : index
    %c0_5 = arith.constant 0 : index
    %c0_6 = arith.constant 0 : index
    %7 = vector.load %arg2[%c1, %c0_5, %c0_6] : memref<5x96x168xf32, #tpu.memory_space<vmem>>, vector<1x96x168xf32>
    %8 = vector.shape_cast %7 : vector<1x96x168xf32> to vector<96x168xf32>
    %cst_7 = arith.constant dense<0.000000e+00> : vector<28x168xf32>
    %9 = tpu.matmul %6, %8, %cst_7 {dimension_numbers = #tpu.dot_dimension_numbers<[1], [0], [0], [1], [0, 0, 1, 1], [], []>} : vector<28x96xf32>, vector<96x168xf32>, vector<28x168xf32> -> vector<28x168xf32>
    %10 = arith.addf %5, %9 : vector<28x168xf32>
    %11 = vector.extract_strided_slice %1 {offsets = [2, 0], sizes = [28, 96], strides = [1, 1]} : vector<32x96xf32> to vector<28x96xf32>
    %c2 = arith.constant 2 : index
    %c0_8 = arith.constant 0 : index
    %c0_9 = arith.constant 0 : index
    %12 = vector.load %arg2[%c2, %c0_8, %c0_9] : memref<5x96x168xf32, #tpu.memory_space<vmem>>, vector<1x96x168xf32>
    %13 = vector.shape_cast %12 : vector<1x96x168xf32> to vector<96x168xf32>
    %cst_10 = arith.constant dense<0.000000e+00> : vector<28x168xf32>
    %14 = tpu.matmul %11, %13, %cst_10 {dimension_numbers = #tpu.dot_dimension_numbers<[1], [0], [0], [1], [0, 0, 1, 1], [], []>} : vector<28x96xf32>, vector<96x168xf32>, vector<28x168xf32> -> vector<28x168xf32>
    %15 = arith.addf %10, %14 : vector<28x168xf32>
    %16 = vector.extract_strided_slice %1 {offsets = [3, 0], sizes = [28, 96], strides = [1, 1]} : vector<32x96xf32> to vector<28x96xf32>
    %c3 = arith.constant 3 : index
    %c0_11 = arith.constant 0 : index
    %c0_12 = arith.constant 0 : index
    %17 = vector.load %arg2[%c3, %c0_11, %c0_12] : memref<5x96x168xf32, #tpu.memory_space<vmem>>, vector<1x96x168xf32>
    %18 = vector.shape_cast %17 : vector<1x96x168xf32> to vector<96x168xf32>
    %cst_13 = arith.constant dense<0.000000e+00> : vector<28x168xf32>
    %19 = tpu.matmul %16, %18, %cst_13 {dimension_numbers = #tpu.dot_dimension_numbers<[1], [0], [0], [1], [0, 0, 1, 1], [], []>} : vector<28x96xf32>, vector<96x168xf32>, vector<28x168xf32> -> vector<28x168xf32>
    %20 = arith.addf %15, %19 : vector<28x168xf32>
    %21 = vector.extract_strided_slice %1 {offsets = [4, 0], sizes = [28, 96], strides = [1, 1]} : vector<32x96xf32> to vector<28x96xf32>
    %c4 = arith.constant 4 : index
    %c0_14 = arith.constant 0 : index
    %c0_15 = arith.constant 0 : index
    %22 = vector.load %arg2[%c4, %c0_14, %c0_15] : memref<5x96x168xf32, #tpu.memory_space<vmem>>, vector<1x96x168xf32>
    %23 = vector.shape_cast %22 : vector<1x96x168xf32> to vector<96x168xf32>
    %cst_16 = arith.constant dense<0.000000e+00> : vector<28x168xf32>
    %24 = tpu.matmul %21, %23, %cst_16 {dimension_numbers = #tpu.dot_dimension_numbers<[1], [0], [0], [1], [0, 0, 1, 1], [], []>} : vector<28x96xf32>, vector<96x168xf32>, vector<28x168xf32> -> vector<28x168xf32>
    %25 = arith.addf %20, %24 : vector<28x168xf32>
    %c0_17 = arith.constant 0 : index
    %c0_18 = arith.constant 0 : index
    %26 = vector.load %arg3[%c0_17, %c0_18] : memref<1x168xf32, #tpu.memory_space<vmem>>, vector<1x168xf32>
    %27 = vector.broadcast %26 : vector<1x168xf32> to vector<28x168xf32>
    %28 = arith.addf %25, %27 : vector<28x168xf32>
    %cst_19 = arith.constant 0.000000e+00 : f32
    %29 = vector.broadcast %cst_19 : f32 to vector<28x168xf32>
    %30 = arith.maximumf %28, %29 : vector<28x168xf32>
    %c0_20 = arith.constant 0 : index
    %c0_21 = arith.constant 0 : index
    %c0_22 = arith.constant 0 : index
    %31 = vector.load %arg4[%c0_20, %c0_21, %c0_22] : memref<2x168x84xf32, #tpu.memory_space<vmem>>, vector<1x168x84xf32>
    %32 = vector.shape_cast %31 : vector<1x168x84xf32> to vector<168x84xf32>
    %cst_23 = arith.constant dense<0.000000e+00> : vector<28x84xf32>
    %33 = tpu.matmul %30, %32, %cst_23 {dimension_numbers = #tpu.dot_dimension_numbers<[1], [0], [0], [1], [0, 0, 1, 1], [], []>} : vector<28x168xf32>, vector<168x84xf32>, vector<28x84xf32> -> vector<28x84xf32>
    %c1_24 = arith.constant 1 : index
    %c0_25 = arith.constant 0 : index
    %c0_26 = arith.constant 0 : index
    %34 = vector.load %arg4[%c1_24, %c0_25, %c0_26] : memref<2x168x84xf32, #tpu.memory_space<vmem>>, vector<1x168x84xf32>
    %35 = vector.shape_cast %34 : vector<1x168x84xf32> to vector<168x84xf32>
    %cst_27 = arith.constant dense<0.000000e+00> : vector<28x84xf32>
    %36 = tpu.matmul %30, %35, %cst_27 {dimension_numbers = #tpu.dot_dimension_numbers<[1], [0], [0], [1], [0, 0, 1, 1], [], []>} : vector<28x168xf32>, vector<168x84xf32>, vector<28x84xf32> -> vector<28x84xf32>
    %37 = arith.maximumf %33, %36 : vector<28x84xf32>
    %c0_28 = arith.constant 0 : index
    %c0_29 = arith.constant 0 : index
    %c0_30 = arith.constant 0 : index
    %38 = vector.load %arg5[%c0_28, %c0_29, %c0_30] : memref<2x14x28xf32, #tpu.memory_space<vmem>>, vector<1x14x28xf32>
    %39 = vector.shape_cast %38 : vector<1x14x28xf32> to vector<14x28xf32>
    %cst_31 = arith.constant dense<0.000000e+00> : vector<14x84xf32>
    %40 = tpu.matmul %39, %37, %cst_31 {dimension_numbers = #tpu.dot_dimension_numbers<[1], [0], [0], [1], [0, 0, 1, 1], [], []>} : vector<14x28xf32>, vector<28x84xf32>, vector<14x84xf32> -> vector<14x84xf32>
    %c1_32 = arith.constant 1 : index
    %c0_33 = arith.constant 0 : index
    %c0_34 = arith.constant 0 : index
    %41 = vector.load %arg5[%c1_32, %c0_33, %c0_34] : memref<2x14x28xf32, #tpu.memory_space<vmem>>, vector<1x14x28xf32>
    %42 = vector.shape_cast %41 : vector<1x14x28xf32> to vector<14x28xf32>
    %cst_35 = arith.constant dense<0.000000e+00> : vector<14x84xf32>
    %43 = tpu.matmul %42, %37, %cst_35 {dimension_numbers = #tpu.dot_dimension_numbers<[1], [0], [0], [1], [0, 0, 1, 1], [], []>} : vector<14x28xf32>, vector<28x84xf32>, vector<14x84xf32> -> vector<14x84xf32>
    %44 = arith.maximumf %40, %43 : vector<14x84xf32>
    %45 = vector.extract_strided_slice %44 {offsets = [0, 0], sizes = [10, 84], strides = [1, 1]} : vector<14x84xf32> to vector<10x84xf32>
    %c0_36 = arith.constant 0 : index
    %c0_37 = arith.constant 0 : index
    %c0_38 = arith.constant 0 : index
    %46 = vector.load %arg6[%c0_36, %c0_37, %c0_38] : memref<5x84x160xf32, #tpu.memory_space<vmem>>, vector<1x84x160xf32>
    %47 = vector.shape_cast %46 : vector<1x84x160xf32> to vector<84x160xf32>
    %cst_39 = arith.constant dense<0.000000e+00> : vector<10x160xf32>
    %48 = tpu.matmul %45, %47, %cst_39 {dimension_numbers = #tpu.dot_dimension_numbers<[1], [0], [0], [1], [0, 0, 1, 1], [], []>} : vector<10x84xf32>, vector<84x160xf32>, vector<10x160xf32> -> vector<10x160xf32>
    %49 = vector.extract_strided_slice %44 {offsets = [1, 0], sizes = [10, 84], strides = [1, 1]} : vector<14x84xf32> to vector<10x84xf32>
    %c1_40 = arith.constant 1 : index
    %c0_41 = arith.constant 0 : index
    %c0_42 = arith.constant 0 : index
    %50 = vector.load %arg6[%c1_40, %c0_41, %c0_42] : memref<5x84x160xf32, #tpu.memory_space<vmem>>, vector<1x84x160xf32>
    %51 = vector.shape_cast %50 : vector<1x84x160xf32> to vector<84x160xf32>
    %cst_43 = arith.constant dense<0.000000e+00> : vector<10x160xf32>
    %52 = tpu.matmul %49, %51, %cst_43 {dimension_numbers = #tpu.dot_dimension_numbers<[1], [0], [0], [1], [0, 0, 1, 1], [], []>} : vector<10x84xf32>, vector<84x160xf32>, vector<10x160xf32> -> vector<10x160xf32>
    %53 = arith.addf %48, %52 : vector<10x160xf32>
    %54 = vector.extract_strided_slice %44 {offsets = [2, 0], sizes = [10, 84], strides = [1, 1]} : vector<14x84xf32> to vector<10x84xf32>
    %c2_44 = arith.constant 2 : index
    %c0_45 = arith.constant 0 : index
    %c0_46 = arith.constant 0 : index
    %55 = vector.load %arg6[%c2_44, %c0_45, %c0_46] : memref<5x84x160xf32, #tpu.memory_space<vmem>>, vector<1x84x160xf32>
    %56 = vector.shape_cast %55 : vector<1x84x160xf32> to vector<84x160xf32>
    %cst_47 = arith.constant dense<0.000000e+00> : vector<10x160xf32>
    %57 = tpu.matmul %54, %56, %cst_47 {dimension_numbers = #tpu.dot_dimension_numbers<[1], [0], [0], [1], [0, 0, 1, 1], [], []>} : vector<10x84xf32>, vector<84x160xf32>, vector<10x160xf32> -> vector<10x160xf32>
    %58 = arith.addf %53, %57 : vector<10x160xf32>
    %59 = vector.extract_strided_slice %44 {offsets = [3, 0], sizes = [10, 84], strides = [1, 1]} : vector<14x84xf32> to vector<10x84xf32>
    %c3_48 = arith.constant 3 : index
    %c0_49 = arith.constant 0 : index
    %c0_50 = arith.constant 0 : index
    %60 = vector.load %arg6[%c3_48, %c0_49, %c0_50] : memref<5x84x160xf32, #tpu.memory_space<vmem>>, vector<1x84x160xf32>
    %61 = vector.shape_cast %60 : vector<1x84x160xf32> to vector<84x160xf32>
    %cst_51 = arith.constant dense<0.000000e+00> : vector<10x160xf32>
    %62 = tpu.matmul %59, %61, %cst_51 {dimension_numbers = #tpu.dot_dimension_numbers<[1], [0], [0], [1], [0, 0, 1, 1], [], []>} : vector<10x84xf32>, vector<84x160xf32>, vector<10x160xf32> -> vector<10x160xf32>
    %63 = arith.addf %58, %62 : vector<10x160xf32>
    %64 = vector.extract_strided_slice %44 {offsets = [4, 0], sizes = [10, 84], strides = [1, 1]} : vector<14x84xf32> to vector<10x84xf32>
    %c4_52 = arith.constant 4 : index
    %c0_53 = arith.constant 0 : index
    %c0_54 = arith.constant 0 : index
    %65 = vector.load %arg6[%c4_52, %c0_53, %c0_54] : memref<5x84x160xf32, #tpu.memory_space<vmem>>, vector<1x84x160xf32>
    %66 = vector.shape_cast %65 : vector<1x84x160xf32> to vector<84x160xf32>
    %cst_55 = arith.constant dense<0.000000e+00> : vector<10x160xf32>
    %67 = tpu.matmul %64, %66, %cst_55 {dimension_numbers = #tpu.dot_dimension_numbers<[1], [0], [0], [1], [0, 0, 1, 1], [], []>} : vector<10x84xf32>, vector<84x160xf32>, vector<10x160xf32> -> vector<10x160xf32>
    %68 = arith.addf %63, %67 : vector<10x160xf32>
    %c0_56 = arith.constant 0 : index
    %c0_57 = arith.constant 0 : index
    %69 = vector.load %arg7[%c0_56, %c0_57] : memref<1x160xf32, #tpu.memory_space<vmem>>, vector<1x160xf32>
    %70 = vector.broadcast %69 : vector<1x160xf32> to vector<10x160xf32>
    %71 = arith.addf %68, %70 : vector<10x160xf32>
    %cst_58 = arith.constant 0.000000e+00 : f32
    %72 = vector.broadcast %cst_58 : f32 to vector<10x160xf32>
    %73 = arith.maximumf %71, %72 : vector<10x160xf32>
    %c0_59 = arith.constant 0 : index
    %c0_60 = arith.constant 0 : index
    %c0_61 = arith.constant 0 : index
    %74 = vector.load %arg8[%c0_59, %c0_60, %c0_61] : memref<2x160x80xf32, #tpu.memory_space<vmem>>, vector<1x160x80xf32>
    %75 = vector.shape_cast %74 : vector<1x160x80xf32> to vector<160x80xf32>
    %cst_62 = arith.constant dense<0.000000e+00> : vector<10x80xf32>
    %76 = tpu.matmul %73, %75, %cst_62 {dimension_numbers = #tpu.dot_dimension_numbers<[1], [0], [0], [1], [0, 0, 1, 1], [], []>} : vector<10x160xf32>, vector<160x80xf32>, vector<10x80xf32> -> vector<10x80xf32>
    %c1_63 = arith.constant 1 : index
    %c0_64 = arith.constant 0 : index
    %c0_65 = arith.constant 0 : index
    %77 = vector.load %arg8[%c1_63, %c0_64, %c0_65] : memref<2x160x80xf32, #tpu.memory_space<vmem>>, vector<1x160x80xf32>
    %78 = vector.shape_cast %77 : vector<1x160x80xf32> to vector<160x80xf32>
    %cst_66 = arith.constant dense<0.000000e+00> : vector<10x80xf32>
    %79 = tpu.matmul %73, %78, %cst_66 {dimension_numbers = #tpu.dot_dimension_numbers<[1], [0], [0], [1], [0, 0, 1, 1], [], []>} : vector<10x160xf32>, vector<160x80xf32>, vector<10x80xf32> -> vector<10x80xf32>
    %80 = arith.maximumf %76, %79 : vector<10x80xf32>
    %c0_67 = arith.constant 0 : index
    %c0_68 = arith.constant 0 : index
    %c0_69 = arith.constant 0 : index
    %81 = vector.load %arg9[%c0_67, %c0_68, %c0_69] : memref<2x5x10xf32, #tpu.memory_space<vmem>>, vector<1x5x10xf32>
    %82 = vector.shape_cast %81 : vector<1x5x10xf32> to vector<5x10xf32>
    %cst_70 = arith.constant dense<0.000000e+00> : vector<5x80xf32>
    %83 = tpu.matmul %82, %80, %cst_70 {dimension_numbers = #tpu.dot_dimension_numbers<[1], [0], [0], [1], [0, 0, 1, 1], [], []>} : vector<5x10xf32>, vector<10x80xf32>, vector<5x80xf32> -> vector<5x80xf32>
    %c1_71 = arith.constant 1 : index
    %c0_72 = arith.constant 0 : index
    %c0_73 = arith.constant 0 : index
    %84 = vector.load %arg9[%c1_71, %c0_72, %c0_73] : memref<2x5x10xf32, #tpu.memory_space<vmem>>, vector<1x5x10xf32>
    %85 = vector.shape_cast %84 : vector<1x5x10xf32> to vector<5x10xf32>
    %cst_74 = arith.constant dense<0.000000e+00> : vector<5x80xf32>
    %86 = tpu.matmul %85, %80, %cst_74 {dimension_numbers = #tpu.dot_dimension_numbers<[1], [0], [0], [1], [0, 0, 1, 1], [], []>} : vector<5x10xf32>, vector<10x80xf32>, vector<5x80xf32> -> vector<5x80xf32>
    %87 = arith.maximumf %83, %86 : vector<5x80xf32>
    %88 = vector.extract_strided_slice %87 {offsets = [0, 0], sizes = [1, 80], strides = [1, 1]} : vector<5x80xf32> to vector<1x80xf32>
    %c0_75 = arith.constant 0 : index
    %c0_76 = arith.constant 0 : index
    %c0_77 = arith.constant 0 : index
    %89 = vector.load %arg10[%c0_75, %c0_76, %c0_77] : memref<5x80x120xf32, #tpu.memory_space<vmem>>, vector<1x80x120xf32>
    %90 = vector.shape_cast %89 : vector<1x80x120xf32> to vector<80x120xf32>
    %cst_78 = arith.constant dense<0.000000e+00> : vector<1x120xf32>
    %91 = tpu.matmul %88, %90, %cst_78 {dimension_numbers = #tpu.dot_dimension_numbers<[1], [0], [0], [1], [0, 0, 1, 1], [], []>} : vector<1x80xf32>, vector<80x120xf32>, vector<1x120xf32> -> vector<1x120xf32>
    %92 = vector.extract_strided_slice %87 {offsets = [1, 0], sizes = [1, 80], strides = [1, 1]} : vector<5x80xf32> to vector<1x80xf32>
    %c1_79 = arith.constant 1 : index
    %c0_80 = arith.constant 0 : index
    %c0_81 = arith.constant 0 : index
    %93 = vector.load %arg10[%c1_79, %c0_80, %c0_81] : memref<5x80x120xf32, #tpu.memory_space<vmem>>, vector<1x80x120xf32>
    %94 = vector.shape_cast %93 : vector<1x80x120xf32> to vector<80x120xf32>
    %cst_82 = arith.constant dense<0.000000e+00> : vector<1x120xf32>
    %95 = tpu.matmul %92, %94, %cst_82 {dimension_numbers = #tpu.dot_dimension_numbers<[1], [0], [0], [1], [0, 0, 1, 1], [], []>} : vector<1x80xf32>, vector<80x120xf32>, vector<1x120xf32> -> vector<1x120xf32>
    %96 = arith.addf %91, %95 : vector<1x120xf32>
    %97 = vector.extract_strided_slice %87 {offsets = [2, 0], sizes = [1, 80], strides = [1, 1]} : vector<5x80xf32> to vector<1x80xf32>
    %c2_83 = arith.constant 2 : index
    %c0_84 = arith.constant 0 : index
    %c0_85 = arith.constant 0 : index
    %98 = vector.load %arg10[%c2_83, %c0_84, %c0_85] : memref<5x80x120xf32, #tpu.memory_space<vmem>>, vector<1x80x120xf32>
    %99 = vector.shape_cast %98 : vector<1x80x120xf32> to vector<80x120xf32>
    %cst_86 = arith.constant dense<0.000000e+00> : vector<1x120xf32>
    %100 = tpu.matmul %97, %99, %cst_86 {dimension_numbers = #tpu.dot_dimension_numbers<[1], [0], [0], [1], [0, 0, 1, 1], [], []>} : vector<1x80xf32>, vector<80x120xf32>, vector<1x120xf32> -> vector<1x120xf32>
    %101 = arith.addf %96, %100 : vector<1x120xf32>
    %102 = vector.extract_strided_slice %87 {offsets = [3, 0], sizes = [1, 80], strides = [1, 1]} : vector<5x80xf32> to vector<1x80xf32>
    %c3_87 = arith.constant 3 : index
    %c0_88 = arith.constant 0 : index
    %c0_89 = arith.constant 0 : index
    %103 = vector.load %arg10[%c3_87, %c0_88, %c0_89] : memref<5x80x120xf32, #tpu.memory_space<vmem>>, vector<1x80x120xf32>
    %104 = vector.shape_cast %103 : vector<1x80x120xf32> to vector<80x120xf32>
    %cst_90 = arith.constant dense<0.000000e+00> : vector<1x120xf32>
    %105 = tpu.matmul %102, %104, %cst_90 {dimension_numbers = #tpu.dot_dimension_numbers<[1], [0], [0], [1], [0, 0, 1, 1], [], []>} : vector<1x80xf32>, vector<80x120xf32>, vector<1x120xf32> -> vector<1x120xf32>
    %106 = arith.addf %101, %105 : vector<1x120xf32>
    %107 = vector.extract_strided_slice %87 {offsets = [4, 0], sizes = [1, 80], strides = [1, 1]} : vector<5x80xf32> to vector<1x80xf32>
    %c4_91 = arith.constant 4 : index
    %c0_92 = arith.constant 0 : index
    %c0_93 = arith.constant 0 : index
    %108 = vector.load %arg10[%c4_91, %c0_92, %c0_93] : memref<5x80x120xf32, #tpu.memory_space<vmem>>, vector<1x80x120xf32>
    %109 = vector.shape_cast %108 : vector<1x80x120xf32> to vector<80x120xf32>
    %cst_94 = arith.constant dense<0.000000e+00> : vector<1x120xf32>
    %110 = tpu.matmul %107, %109, %cst_94 {dimension_numbers = #tpu.dot_dimension_numbers<[1], [0], [0], [1], [0, 0, 1, 1], [], []>} : vector<1x80xf32>, vector<80x120xf32>, vector<1x120xf32> -> vector<1x120xf32>
    %111 = arith.addf %106, %110 : vector<1x120xf32>
    %c0_95 = arith.constant 0 : index
    %c0_96 = arith.constant 0 : index
    %112 = vector.load %arg11[%c0_95, %c0_96] : memref<1x120xf32, #tpu.memory_space<vmem>>, vector<1x120xf32>
    %113 = arith.addf %111, %112 : vector<1x120xf32>
    %cst_97 = arith.constant 0.000000e+00 : f32
    %114 = vector.broadcast %cst_97 : f32 to vector<1x120xf32>
    %115 = arith.maximumf %113, %114 : vector<1x120xf32>
    %c0_98 = arith.constant 0 : index
    %c0_99 = arith.constant 0 : index
    %116 = vector.load %arg12[%c0_98, %c0_99] : memref<120x84xf32, #tpu.memory_space<vmem>>, vector<120x84xf32>
    %cst_100 = arith.constant dense<0.000000e+00> : vector<1x84xf32>
    %117 = tpu.matmul %115, %116, %cst_100 {dimension_numbers = #tpu.dot_dimension_numbers<[1], [0], [0], [1], [0, 0, 1, 1], [], []>} : vector<1x120xf32>, vector<120x84xf32>, vector<1x84xf32> -> vector<1x84xf32>
    %c0_101 = arith.constant 0 : index
    %c0_102 = arith.constant 0 : index
    %118 = vector.load %arg13[%c0_101, %c0_102] : memref<1x84xf32, #tpu.memory_space<vmem>>, vector<1x84xf32>
    %119 = arith.addf %117, %118 : vector<1x84xf32>
    %cst_103 = arith.constant 0.000000e+00 : f32
    %120 = vector.broadcast %cst_103 : f32 to vector<1x84xf32>
    %121 = arith.maximumf %119, %120 : vector<1x84xf32>
    %c0_104 = arith.constant 0 : index
    %c0_105 = arith.constant 0 : index
    %122 = vector.load %arg14[%c0_104, %c0_105] : memref<84x10xf32, #tpu.memory_space<vmem>>, vector<84x10xf32>
    %cst_106 = arith.constant dense<0.000000e+00> : vector<1x10xf32>
    %123 = tpu.matmul %121, %122, %cst_106 {dimension_numbers = #tpu.dot_dimension_numbers<[1], [0], [0], [1], [0, 0, 1, 1], [], []>} : vector<1x84xf32>, vector<84x10xf32>, vector<1x10xf32> -> vector<1x10xf32>
    %c0_107 = arith.constant 0 : index
    %c0_108 = arith.constant 0 : index
    %124 = vector.load %arg15[%c0_107, %c0_108] : memref<1x10xf32, #tpu.memory_space<vmem>>, vector<1x10xf32>
    %125 = arith.addf %123, %124 : vector<1x10xf32>
    %c0_109 = arith.constant 0 : index
    %c0_110 = arith.constant 0 : index
    %c0_111 = arith.constant 0 : index
    %126 = vector.load %arg16[%c0_109, %c0_110, %c0_111] : memref<1x1x10xf32, #tpu.memory_space<vmem>>, vector<1x1x10xf32>
    %127 = vector.shape_cast %126 : vector<1x1x10xf32> to vector<1x10xf32>
    %128 = vector.shape_cast %125 : vector<1x10xf32> to vector<1x1x10xf32>
    tpu.vector_store %arg16[%c0_109, %c0_110, %c0_111], %128 {strides = array<i32>} : memref<1x1x10xf32, #tpu.memory_space<vmem>>, vector<1x1x10xf32>,
    return
  }
  func.func @transform_0(%arg0: i32) -> (i32, i32, i32) {
    %c0_i32 = arith.constant 0 : i32
    %c0_i32_0 = arith.constant 0 : i32
    %c0_i32_1 = arith.constant 0 : i32
    return %arg0, %c0_i32, %c0_i32_0 : i32, i32, i32
  }
  func.func @transform_1(%arg0: i32) -> (i32, i32, i32) {
    %c0_i32 = arith.constant 0 : i32
    %c0_i32_0 = arith.constant 0 : i32
    %c0_i32_1 = arith.constant 0 : i32
    %c0_i32_2 = arith.constant 0 : i32
    return %c0_i32, %c0_i32_0, %c0_i32_1 : i32, i32, i32
  }
  func.func @transform_2(%arg0: i32) -> (i32, i32) {
    %c0_i32 = arith.constant 0 : i32
    %c0_i32_0 = arith.constant 0 : i32
    %c0_i32_1 = arith.constant 0 : i32
    return %c0_i32, %c0_i32_0 : i32, i32
  }
  func.func @transform_3(%arg0: i32) -> (i32, i32, i32) {
    %c0_i32 = arith.constant 0 : i32
    %c0_i32_0 = arith.constant 0 : i32
    %c0_i32_1 = arith.constant 0 : i32
    %c0_i32_2 = arith.constant 0 : i32
    return %c0_i32, %c0_i32_0, %c0_i32_1 : i32, i32, i32
  }
  func.func @transform_4(%arg0: i32) -> (i32, i32, i32) {
    %c0_i32 = arith.constant 0 : i32
    %c0_i32_0 = arith.constant 0 : i32
    %c0_i32_1 = arith.constant 0 : i32
    %c0_i32_2 = arith.constant 0 : i32
    return %c0_i32, %c0_i32_0, %c0_i32_1 : i32, i32, i32
  }
  func.func @transform_5(%arg0: i32) -> (i32, i32, i32) {
    %c0_i32 = arith.constant 0 : i32
    %c0_i32_0 = arith.constant 0 : i32
    %c0_i32_1 = arith.constant 0 : i32
    %c0_i32_2 = arith.constant 0 : i32
    return %c0_i32, %c0_i32_0, %c0_i32_1 : i32, i32, i32
  }
  func.func @transform_6(%arg0: i32) -> (i32, i32) {
    %c0_i32 = arith.constant 0 : i32
    %c0_i32_0 = arith.constant 0 : i32
    %c0_i32_1 = arith.constant 0 : i32
    return %c0_i32, %c0_i32_0 : i32, i32
  }
  func.func @transform_7(%arg0: i32) -> (i32, i32, i32) {
    %c0_i32 = arith.constant 0 : i32
    %c0_i32_0 = arith.constant 0 : i32
    %c0_i32_1 = arith.constant 0 : i32
    %c0_i32_2 = arith.constant 0 : i32
    return %c0_i32, %c0_i32_0, %c0_i32_1 : i32, i32, i32
  }
  func.func @transform_8(%arg0: i32) -> (i32, i32, i32) {
    %c0_i32 = arith.constant 0 : i32
    %c0_i32_0 = arith.constant 0 : i32
    %c0_i32_1 = arith.constant 0 : i32
    %c0_i32_2 = arith.constant 0 : i32
    return %c0_i32, %c0_i32_0, %c0_i32_1 : i32, i32, i32
  }
  func.func @transform_9(%arg0: i32) -> (i32, i32, i32) {
    %c0_i32 = arith.constant 0 : i32
    %c0_i32_0 = arith.constant 0 : i32
    %c0_i32_1 = arith.constant 0 : i32
    %c0_i32_2 = arith.constant 0 : i32
    return %c0_i32, %c0_i32_0, %c0_i32_1 : i32, i32, i32
  }
  func.func @transform_10(%arg0: i32) -> (i32, i32) {
    %c0_i32 = arith.constant 0 : i32
    %c0_i32_0 = arith.constant 0 : i32
    %c0_i32_1 = arith.constant 0 : i32
    return %c0_i32, %c0_i32_0 : i32, i32
  }
  func.func @transform_11(%arg0: i32) -> (i32, i32) {
    %c0_i32 = arith.constant 0 : i32
    %c0_i32_0 = arith.constant 0 : i32
    %c0_i32_1 = arith.constant 0 : i32
    return %c0_i32, %c0_i32_0 : i32, i32
  }
  func.func @transform_12(%arg0: i32) -> (i32, i32) {
    %c0_i32 = arith.constant 0 : i32
    %c0_i32_0 = arith.constant 0 : i32
    %c0_i32_1 = arith.constant 0 : i32
    return %c0_i32, %c0_i32_0 : i32, i32
  }
  func.func @transform_13(%arg0: i32) -> (i32, i32) {
    %c0_i32 = arith.constant 0 : i32
    %c0_i32_0 = arith.constant 0 : i32
    %c0_i32_1 = arith.constant 0 : i32
    return %c0_i32, %c0_i32_0 : i32, i32
  }
  func.func @transform_14(%arg0: i32) -> (i32, i32) {
    %c0_i32 = arith.constant 0 : i32
    %c0_i32_0 = arith.constant 0 : i32
    %c0_i32_1 = arith.constant 0 : i32
    return %c0_i32, %c0_i32_0 : i32, i32
  }
  func.func @transform_15(%arg0: i32) -> (i32, i32, i32) {
    %c0_i32 = arith.constant 0 : i32
    %c0_i32_0 = arith.constant 0 : i32
    %c0_i32_1 = arith.constant 0 : i32
    return %arg0, %c0_i32, %c0_i32_0 : i32, i32, i32
  }
}

</mosaic_0001>

<llo_original>
// kernel: the_model_forward.1
$region0: #{the_model_forward.1}
  #allocation0 [shape = 'u32[]', space=smem, size = 0x4, offset = 0x4, fixed_abs, tag = 'smem constant byte address 0x4 - core index']
  #allocation1 [shape = 'u32[144,128]{1,0:T(1,128)}', space=vmem, size = 0x12000, scoped, tag = 'internal scratch']
  %s0 = inlined_call_operand.vmem [shape: f32[2,32,96], index: 0, kind: input, shape index: {}]
  %s1 = inlined_call_operand.vmem [shape: f32[5,96,168], index: 1, kind: input, shape index: {}]
  %s2 = inlined_call_operand.vmem [shape: f32[1,168], index: 2, kind: input, shape index: {}]
  %s3 = inlined_call_operand.vmem [shape: f32[2,168,84], index: 3, kind: input, shape index: {}]
  %s4 = inlined_call_operand.vmem [shape: f32[2,14,28], index: 4, kind: input, shape index: {}]
  %s5 = inlined_call_operand.vmem [shape: f32[5,84,160], index: 5, kind: input, shape index: {}]
  %s6 = inlined_call_operand.vmem [shape: f32[1,160], index: 6, kind: input, shape index: {}]
  %s7 = inlined_call_operand.vmem [shape: f32[2,160,80], index: 7, kind: input, shape index: {}]
  %s8 = inlined_call_operand.vmem [shape: f32[2,5,10], index: 8, kind: input, shape index: {}]
  %s9 = inlined_call_operand.vmem [shape: f32[5,80,120], index: 9, kind: input, shape index: {}]
  %s10 = inlined_call_operand.vmem [shape: f32[1,120], index: 10, kind: input, shape index: {}]
  %s11 = inlined_call_operand.vmem [shape: f32[120,84], index: 11, kind: input, shape index: {}]
  %s12 = inlined_call_operand.vmem [shape: f32[1,84], index: 12, kind: input, shape index: {}]
  %s13 = inlined_call_operand.vmem [shape: f32[84,10], index: 13, kind: input, shape index: {}]
  %s14 = inlined_call_operand.vmem [shape: f32[1,10], index: 14, kind: input, shape index: {}]
  %s15 = inlined_call_operand.hbm [shape: f32[2,1,10], index: 15, kind: output, shape index: {}]
  %s16 = sld [smem:[#allocation0]]
  $region93: #{the_model_forward.1} parent=0
    _
  %s18 = ssub.s32 1, %s16
  %s19 = scalar_select 0, %s18, %s16
  $region1: #{the_model_forward.1} parent=0
    #allocation2 [shape = 'u8[1024]{0}', space=vmem, size = 0x400, scoped, tag = 'output window, operand 0']
    #allocation3 [shape = 's32[2]{0}', space=sflag, size = 0x8, scoped, tag = 'scoped memory for the_model_forward.1']
    %20 = vsyncpa [#allocation3], 0
    %s21 = scalar_lea.sflag [#allocation3], 1
    %22 = vsyncpa %s21, 0
    loop: start=0, step=1, limit=4
    $region2: #{the_model_forward.1} parent=1 // loop_pre_header
      _
    $region3: #{the_model_forward.1} parent=1 // loop_header
      %s24 = sphi 0, %s28
      %p25 = scmp.ge.s32.totalorder %s24, 4
      %s34 = sphi 0, %s36
      %s37 = sphi 0, %s34
      %s38 = sphi 0, %s37
      %s54 = sphi 0, %s38
      %s58 = sphi 0, %s58
      %s60 = sphi 0, %s58
      %s61 = sphi 0, %s60
      %s75 = sphi 0, %s61
      %s79 = sphi 0, %s79
      %s81 = sphi 0, %s79
      %s82 = sphi 0, %s81
      %s96 = sphi 0, %s82
      %s100 = sphi 0, %s100
      %s102 = sphi 0, %s100
      %s103 = sphi 0, %s102
      %s117 = sphi 0, %s103
      %s121 = sphi 0, %s121
      %s123 = sphi 0, %s121
      %s124 = sphi 0, %s123
      %s138 = sphi 0, %s124
      %s142 = sphi 0, %s142
      %s144 = sphi 0, %s142
      %s145 = sphi 0, %s144
      %s159 = sphi 0, %s145
      %s163 = sphi 0, %s163
      %s165 = sphi 0, %s163
      %s166 = sphi 0, %s165
      %s180 = sphi 0, %s166
      %s184 = sphi 0, %s184
      %s186 = sphi 0, %s184
      %s187 = sphi 0, %s186
      %s201 = sphi 0, %s187
      %s205 = sphi 0, %s205
      %s207 = sphi 0, %s205
      %s208 = sphi 0, %s207
      %s222 = sphi 0, %s208
      %s226 = sphi 0, %s226
      %s228 = sphi 0, %s226
      %s229 = sphi 0, %s228
      %s243 = sphi 0, %s229
      %s247 = sphi 0, %s247
      %s249 = sphi 0, %s247
      %s250 = sphi 0, %s249
      %s264 = sphi 0, %s250
      %s268 = sphi 0, %s268
      %s270 = sphi 0, %s268
      %s271 = sphi 0, %s270
      %s285 = sphi 0, %s271
      %s289 = sphi 0, %s289
      %s291 = sphi 0, %s289
      %s292 = sphi 0, %s291
      %s306 = sphi 0, %s292
      %s310 = sphi 0, %s310
      %s312 = sphi 0, %s310
      %s313 = sphi 0, %s312
      %s327 = sphi 0, %s313
      %s331 = sphi 0, %s331
      %s333 = sphi 0, %s331
      %s334 = sphi 0, %s333
      %s348 = sphi 0, %s334
      %s354 = sphi 0, %s356
      %s357 = sphi 0, %s354
      %s358 = sphi 0, %s357
      %s374 = sphi 0, %s358
    $region4: #{the_model_forward.1} parent=1 // loop_header_branch
      %27 = sbr.rel (%p25) target = $region8
    $region5: #{the_model_forward.1} parent=1 // loop_body
      %s29 = ssub.s32 %s24, 1
      %s30 = ssub.s32 %s24, 2
      %s31 = sadd.s32 %s24, 1
      %s32 = ssub.s32 %s24, %s31
      %p33 = scmp.eq.s32.totalorder %s32, 0
      %s35 = sadd.s32 %s34, 1
      %s36 = scalar_select %p33, %s34, %s35
      %p39 = pneg %p33
      %p40 = scmp.eq.s32.totalorder %s24, 1
      %p41 = por %p39, %p40
      %p42 = scmp.ne.s32.totalorder %s34, %s37
      %p43 = scmp.eq.s32.totalorder %s24, 0
      %p44 = por %p42, %p43
      %p45 = scmp.ne.s32.totalorder %s34, %s37
      %p46 = scmp.eq.s32.totalorder %s29, 1
      %p47 = por %p45, %p46
      %p48 = scmp.ne.s32.totalorder %s37, %s38
      %p49 = scmp.eq.s32.totalorder %s29, 0
      %p50 = por %p48, %p49
      %p51 = scmp.ne.s32.totalorder %s37, %s38
      %p52 = scmp.eq.s32.totalorder %s30, 1
      %p53 = por %p51, %p52
      %p55 = scmp.ne.s32.totalorder %s38, %s54
      %p56 = scmp.eq.s32.totalorder %s30, 0
      %p57 = por %p55, %p56
      %s59 = sadd.s32 %s58, 1
      %p62 = scmp.eq.s32.totalorder %s24, 1
      %p63 = scmp.ne.s32.totalorder %s58, %s60
      %p64 = scmp.eq.s32.totalorder %s24, 0
      %p65 = por %p63, %p64
      %p66 = scmp.ne.s32.totalorder %s58, %s60
      %p67 = scmp.eq.s32.totalorder %s29, 1
      %p68 = por %p66, %p67
      %p69 = scmp.ne.s32.totalorder %s60, %s61
      %p70 = scmp.eq.s32.totalorder %s29, 0
      %p71 = por %p69, %p70
      %p72 = scmp.ne.s32.totalorder %s60, %s61
      %p73 = scmp.eq.s32.totalorder %s30, 1
      %p74 = por %p72, %p73
      %p76 = scmp.ne.s32.totalorder %s61, %s75
      %p77 = scmp.eq.s32.totalorder %s30, 0
      %p78 = por %p76, %p77
      %s80 = sadd.s32 %s79, 1
      %p83 = scmp.eq.s32.totalorder %s24, 1
      %p84 = scmp.ne.s32.totalorder %s79, %s81
      %p85 = scmp.eq.s32.totalorder %s24, 0
      %p86 = por %p84, %p85
      %p87 = scmp.ne.s32.totalorder %s79, %s81
      %p88 = scmp.eq.s32.totalorder %s29, 1
      %p89 = por %p87, %p88
      %p90 = scmp.ne.s32.totalorder %s81, %s82
      %p91 = scmp.eq.s32.totalorder %s29, 0
      %p92 = por %p90, %p91
      %p93 = scmp.ne.s32.totalorder %s81, %s82
      %p94 = scmp.eq.s32.totalorder %s30, 1
      %p95 = por %p93, %p94
      %p97 = scmp.ne.s32.totalorder %s82, %s96
      %p98 = scmp.eq.s32.totalorder %s30, 0
      %p99 = por %p97, %p98
      %s101 = sadd.s32 %s100, 1
      %p104 = scmp.eq.s32.totalorder %s24, 1
      %p105 = scmp.ne.s32.totalorder %s100, %s102
      %p106 = scmp.eq.s32.totalorder %s24, 0
      %p107 = por %p105, %p106
      %p108 = scmp.ne.s32.totalorder %s100, %s102
      %p109 = scmp.eq.s32.totalorder %s29, 1
      %p110 = por %p108, %p109
      %p111 = scmp.ne.s32.totalorder %s102, %s103
      %p112 = scmp.eq.s32.totalorder %s29, 0
      %p113 = por %p111, %p112
      %p114 = scmp.ne.s32.totalorder %s102, %s103
      %p115 = scmp.eq.s32.totalorder %s30, 1
      %p116 = por %p114, %p115
      %p118 = scmp.ne.s32.totalorder %s103, %s117
      %p119 = scmp.eq.s32.totalorder %s30, 0
      %p120 = por %p118, %p119
      %s122 = sadd.s32 %s121, 1
      %p125 = scmp.eq.s32.totalorder %s24, 1
      %p126 = scmp.ne.s32.totalorder %s121, %s123
      %p127 = scmp.eq.s32.totalorder %s24, 0
      %p128 = por %p126, %p127
      %p129 = scmp.ne.s32.totalorder %s121, %s123
      %p130 = scmp.eq.s32.totalorder %s29, 1
      %p131 = por %p129, %p130
      %p132 = scmp.ne.s32.totalorder %s123, %s124
      %p133 = scmp.eq.s32.totalorder %s29, 0
      %p134 = por %p132, %p133
      %p135 = scmp.ne.s32.totalorder %s123, %s124
      %p136 = scmp.eq.s32.totalorder %s30, 1
      %p137 = por %p135, %p136
      %p139 = scmp.ne.s32.totalorder %s124, %s138
      %p140 = scmp.eq.s32.totalorder %s30, 0
      %p141 = por %p139, %p140
      %s143 = sadd.s32 %s142, 1
      %p146 = scmp.eq.s32.totalorder %s24, 1
      %p147 = scmp.ne.s32.totalorder %s142, %s144
      %p148 = scmp.eq.s32.totalorder %s24, 0
      %p149 = por %p147, %p148
      %p150 = scmp.ne.s32.totalorder %s142, %s144
      %p151 = scmp.eq.s32.totalorder %s29, 1
      %p152 = por %p150, %p151
      %p153 = scmp.ne.s32.totalorder %s144, %s145
      %p154 = scmp.eq.s32.totalorder %s29, 0
      %p155 = por %p153, %p154
      %p156 = scmp.ne.s32.totalorder %s144, %s145
      %p157 = scmp.eq.s32.totalorder %s30, 1
      %p158 = por %p156, %p157
      %p160 = scmp.ne.s32.totalorder %s145, %s159
      %p161 = scmp.eq.s32.totalorder %s30, 0
      %p162 = por %p160, %p161
      %s164 = sadd.s32 %s163, 1
      %p167 = scmp.eq.s32.totalorder %s24, 1
      %p168 = scmp.ne.s32.totalorder %s163, %s165
      %p169 = scmp.eq.s32.totalorder %s24, 0
      %p170 = por %p168, %p169
      %p171 = scmp.ne.s32.totalorder %s163, %s165
      %p172 = scmp.eq.s32.totalorder %s29, 1
      %p173 = por %p171, %p172
      %p174 = scmp.ne.s32.totalorder %s165, %s166
      %p175 = scmp.eq.s32.totalorder %s29, 0
      %p176 = por %p174, %p175
      %p177 = scmp.ne.s32.totalorder %s165, %s166
      %p178 = scmp.eq.s32.totalorder %s30, 1
      %p179 = por %p177, %p178
      %p181 = scmp.ne.s32.totalorder %s166, %s180
      %p182 = scmp.eq.s32.totalorder %s30, 0
      %p183 = por %p181, %p182
      %s185 = sadd.s32 %s184, 1
      %p188 = scmp.eq.s32.totalorder %s24, 1
      %p189 = scmp.ne.s32.totalorder %s184, %s186
      %p190 = scmp.eq.s32.totalorder %s24, 0
      %p191 = por %p189, %p190
      %p192 = scmp.ne.s32.totalorder %s184, %s186
      %p193 = scmp.eq.s32.totalorder %s29, 1
      %p194 = por %p192, %p193
      %p195 = scmp.ne.s32.totalorder %s186, %s187
      %p196 = scmp.eq.s32.totalorder %s29, 0
      %p197 = por %p195, %p196
      %p198 = scmp.ne.s32.totalorder %s186, %s187
      %p199 = scmp.eq.s32.totalorder %s30, 1
      %p200 = por %p198, %p199
      %p202 = scmp.ne.s32.totalorder %s187, %s201
      %p203 = scmp.eq.s32.totalorder %s30, 0
      %p204 = por %p202, %p203
      %s206 = sadd.s32 %s205, 1
      %p209 = scmp.eq.s32.totalorder %s24, 1
      %p210 = scmp.ne.s32.totalorder %s205, %s207
      %p211 = scmp.eq.s32.totalorder %s24, 0
      %p212 = por %p210, %p211
      %p213 = scmp.ne.s32.totalorder %s205, %s207
      %p214 = scmp.eq.s32.totalorder %s29, 1
      %p215 = por %p213, %p214
      %p216 = scmp.ne.s32.totalorder %s207, %s208
      %p217 = scmp.eq.s32.totalorder %s29, 0
      %p218 = por %p216, %p217
      %p219 = scmp.ne.s32.totalorder %s207, %s208
      %p220 = scmp.eq.s32.totalorder %s30, 1
      %p221 = por %p219, %p220
      %p223 = scmp.ne.s32.totalorder %s208, %s222
      %p224 = scmp.eq.s32.totalorder %s30, 0
      %p225 = por %p223, %p224
      %s227 = sadd.s32 %s226, 1
      %p230 = scmp.eq.s32.totalorder %s24, 1
      %p231 = scmp.ne.s32.totalorder %s226, %s228
      %p232 = scmp.eq.s32.totalorder %s24, 0
      %p233 = por %p231, %p232
      %p234 = scmp.ne.s32.totalorder %s226, %s228
      %p235 = scmp.eq.s32.totalorder %s29, 1
      %p236 = por %p234, %p235
      %p237 = scmp.ne.s32.totalorder %s228, %s229
      %p238 = scmp.eq.s32.totalorder %s29, 0
      %p239 = por %p237, %p238
      %p240 = scmp.ne.s32.totalorder %s228, %s229
      %p241 = scmp.eq.s32.totalorder %s30, 1
      %p242 = por %p240, %p241
      %p244 = scmp.ne.s32.totalorder %s229, %s243
      %p245 = scmp.eq.s32.totalorder %s30, 0
      %p246 = por %p244, %p245
      %s248 = sadd.s32 %s247, 1
      %p251 = scmp.eq.s32.totalorder %s24, 1
      %p252 = scmp.ne.s32.totalorder %s247, %s249
      %p253 = scmp.eq.s32.totalorder %s24, 0
      %p254 = por %p252, %p253
      %p255 = scmp.ne.s32.totalorder %s247, %s249
      %p256 = scmp.eq.s32.totalorder %s29, 1
      %p257 = por %p255, %p256
      %p258 = scmp.ne.s32.totalorder %s249, %s250
      %p259 = scmp.eq.s32.totalorder %s29, 0
      %p260 = por %p258, %p259
      %p261 = scmp.ne.s32.totalorder %s249, %s250
      %p262 = scmp.eq.s32.totalorder %s30, 1
      %p263 = por %p261, %p262
      %p265 = scmp.ne.s32.totalorder %s250, %s264
      %p266 = scmp.eq.s32.totalorder %s30, 0
      %p267 = por %p265, %p266
      %s269 = sadd.s32 %s268, 1
      %p272 = scmp.eq.s32.totalorder %s24, 1
      %p273 = scmp.ne.s32.totalorder %s268, %s270
      %p274 = scmp.eq.s32.totalorder %s24, 0
      %p275 = por %p273, %p274
      %p276 = scmp.ne.s32.totalorder %s268, %s270
      %p277 = scmp.eq.s32.totalorder %s29, 1
      %p278 = por %p276, %p277
      %p279 = scmp.ne.s32.totalorder %s270, %s271
      %p280 = scmp.eq.s32.totalorder %s29, 0
      %p281 = por %p279, %p280
      %p282 = scmp.ne.s32.totalorder %s270, %s271
      %p283 = scmp.eq.s32.totalorder %s30, 1
      %p284 = por %p282, %p283
      %p286 = scmp.ne.s32.totalorder %s271, %s285
      %p287 = scmp.eq.s32.totalorder %s30, 0
      %p288 = por %p286, %p287
      %s290 = sadd.s32 %s289, 1
      %p293 = scmp.eq.s32.totalorder %s24, 1
      %p294 = scmp.ne.s32.totalorder %s289, %s291
      %p295 = scmp.eq.s32.totalorder %s24, 0
      %p296 = por %p294, %p295
      %p297 = scmp.ne.s32.totalorder %s289, %s291
      %p298 = scmp.eq.s32.totalorder %s29, 1
      %p299 = por %p297, %p298
      %p300 = scmp.ne.s32.totalorder %s291, %s292
      %p301 = scmp.eq.s32.totalorder %s29, 0
      %p302 = por %p300, %p301
      %p303 = scmp.ne.s32.totalorder %s291, %s292
      %p304 = scmp.eq.s32.totalorder %s30, 1
      %p305 = por %p303, %p304
      %p307 = scmp.ne.s32.totalorder %s292, %s306
      %p308 = scmp.eq.s32.totalorder %s30, 0
      %p309 = por %p307, %p308
      %s311 = sadd.s32 %s310, 1
      %p314 = scmp.eq.s32.totalorder %s24, 1
      %p315 = scmp.ne.s32.totalorder %s310, %s312
      %p316 = scmp.eq.s32.totalorder %s24, 0
      %p317 = por %p315, %p316
      %p318 = scmp.ne.s32.totalorder %s310, %s312
      %p319 = scmp.eq.s32.totalorder %s29, 1
      %p320 = por %p318, %p319
      %p321 = scmp.ne.s32.totalorder %s312, %s313
      %p322 = scmp.eq.s32.totalorder %s29, 0
      %p323 = por %p321, %p322
      %p324 = scmp.ne.s32.totalorder %s312, %s313
      %p325 = scmp.eq.s32.totalorder %s30, 1
      %p326 = por %p324, %p325
      %p328 = scmp.ne.s32.totalorder %s313, %s327
      %p329 = scmp.eq.s32.totalorder %s30, 0
      %p330 = por %p328, %p329
      %s332 = sadd.s32 %s331, 1
      %p335 = scmp.eq.s32.totalorder %s24, 1
      %p336 = scmp.ne.s32.totalorder %s331, %s333
      %p337 = scmp.eq.s32.totalorder %s24, 0
      %p338 = por %p336, %p337
      %p339 = scmp.ne.s32.totalorder %s331, %s333
      %p340 = scmp.eq.s32.totalorder %s29, 1
      %p341 = por %p339, %p340
      %p342 = scmp.ne.s32.totalorder %s333, %s334
      %p343 = scmp.eq.s32.totalorder %s29, 0
      %p344 = por %p342, %p343
      %p345 = scmp.ne.s32.totalorder %s333, %s334
      %p346 = scmp.eq.s32.totalorder %s30, 1
      %p347 = por %p345, %p346
      %p349 = scmp.ne.s32.totalorder %s334, %s348
      %p350 = scmp.eq.s32.totalorder %s30, 0
      %p351 = por %p349, %p350
      %s352 = ssub.s32 %s24, %s31
      %p353 = scmp.eq.s32.totalorder %s352, 0
      %s355 = sadd.s32 %s354, 1
      %s356 = scalar_select %p353, %s354, %s355
      %p359 = pneg %p353
      %p360 = scmp.eq.s32.totalorder %s24, 1
      %p361 = por %p359, %p360
      %p362 = scmp.ne.s32.totalorder %s354, %s357
      %p363 = scmp.eq.s32.totalorder %s24, 0
      %p364 = por %p362, %p363
      %p365 = scmp.ne.s32.totalorder %s354, %s357
      %p366 = scmp.eq.s32.totalorder %s29, 1
      %p367 = por %p365, %p366
      %p368 = scmp.ne.s32.totalorder %s357, %s358
      %p369 = scmp.eq.s32.totalorder %s29, 0
      %p370 = por %p368, %p369
      %p371 = scmp.ne.s32.totalorder %s357, %s358
      %p372 = scmp.eq.s32.totalorder %s30, 1
      %p373 = por %p371, %p372
      %p375 = scmp.ne.s32.totalorder %s358, %s374
      %p376 = scmp.eq.s32.totalorder %s30, 0
      %p377 = por %p375, %p376
      %p378 = scmp.le.s32.totalorder 1, %s24
      %p379 = scmp.lt.s32.totalorder %s24, 3
      %p380 = pnand %p378, %p379
      %p381 = pneg %p380
      // Predicated region
      $region9: #{the_model_forward.1} parent=5 // pred_check
        _
      $region10: #{the_model_forward.1} parent=5 // pred_check_branch
        %383 = sbr.rel (%p380) target = $region12
      $region11: #{the_model_forward.1} parent=5 // pred_region
        %s384 = ssub.s32 %s24, 1
        // Predicated region
        $region13: #{the_model_forward.1} parent=11 // pred_check
          %p385 = pneg %p71
        $region14: #{the_model_forward.1} parent=11 // pred_check_branch
          %387 = sbr.rel (%p385) target = $region16
        $region15: #{the_model_forward.1} parent=11 // pred_region
          _
        $region16: #{the_model_forward.1} parent=11 // pred_fallthru
          _
        // Predicated region
        $region17: #{the_model_forward.1} parent=11 // pred_check
          %p388 = pneg %p92
        $region18: #{the_model_forward.1} parent=11 // pred_check_branch
          %390 = sbr.rel (%p388) target = $region20
        $region19: #{the_model_forward.1} parent=11 // pred_region
          _
        $region20: #{the_model_forward.1} parent=11 // pred_fallthru
          _
        // Predicated region
        $region21: #{the_model_forward.1} parent=11 // pred_check
          %p391 = pneg %p113
        $region22: #{the_model_forward.1} parent=11 // pred_check_branch
          %393 = sbr.rel (%p391) target = $region24
        $region23: #{the_model_forward.1} parent=11 // pred_region
          _
        $region24: #{the_model_forward.1} parent=11 // pred_fallthru
          _
        // Predicated region
        $region25: #{the_model_forward.1} parent=11 // pred_check
          %p394 = pneg %p134
        $region26: #{the_model_forward.1} parent=11 // pred_check_branch
          %396 = sbr.rel (%p394) target = $region28
        $region27: #{the_model_forward.1} parent=11 // pred_region
          _
        $region28: #{the_model_forward.1} parent=11 // pred_fallthru
          _
        // Predicated region
        $region29: #{the_model_forward.1} parent=11 // pred_check
          %p397 = pneg %p155
        $region30: #{the_model_forward.1} parent=11 // pred_check_branch
          %399 = sbr.rel (%p397) target = $region32
        $region31: #{the_model_forward.1} parent=11 // pred_region
          _
        $region32: #{the_model_forward.1} parent=11 // pred_fallthru
          _
        // Predicated region
        $region33: #{the_model_forward.1} parent=11 // pred_check
          %p400 = pneg %p176
        $region34: #{the_model_forward.1} parent=11 // pred_check_branch
          %402 = sbr.rel (%p400) target = $region36
        $region35: #{the_model_forward.1} parent=11 // pred_region
          _
        $region36: #{the_model_forward.1} parent=11 // pred_fallthru
          _
        // Predicated region
        $region37: #{the_model_forward.1} parent=11 // pred_check
          %p403 = pneg %p197
        $region38: #{the_model_forward.1} parent=11 // pred_check_branch
          %405 = sbr.rel (%p403) target = $region40
        $region39: #{the_model_forward.1} parent=11 // pred_region
          _
        $region40: #{the_model_forward.1} parent=11 // pred_fallthru
          _
        // Predicated region
        $region41: #{the_model_forward.1} parent=11 // pred_check
          %p406 = pneg %p218
        $region42: #{the_model_forward.1} parent=11 // pred_check_branch
          %408 = sbr.rel (%p406) target = $region44
        $region43: #{the_model_forward.1} parent=11 // pred_region
          _
        $region44: #{the_model_forward.1} parent=11 // pred_fallthru
          _
        // Predicated region
        $region45: #{the_model_forward.1} parent=11 // pred_check
          %p409 = pneg %p239
        $region46: #{the_model_forward.1} parent=11 // pred_check_branch
          %411 = sbr.rel (%p409) target = $region48
        $region47: #{the_model_forward.1} parent=11 // pred_region
          _
        $region48: #{the_model_forward.1} parent=11 // pred_fallthru
          _
        // Predicated region
        $region49: #{the_model_forward.1} parent=11 // pred_check
          %p412 = pneg %p260
        $region50: #{the_model_forward.1} parent=11 // pred_check_branch
          %414 = sbr.rel (%p412) target = $region52
        $region51: #{the_model_forward.1} parent=11 // pred_region
          _
        $region52: #{the_model_forward.1} parent=11 // pred_fallthru
          _
        // Predicated region
        $region53: #{the_model_forward.1} parent=11 // pred_check
          %p415 = pneg %p281
        $region54: #{the_model_forward.1} parent=11 // pred_check_branch
          %417 = sbr.rel (%p415) target = $region56
        $region55: #{the_model_forward.1} parent=11 // pred_region
          _
        $region56: #{the_model_forward.1} parent=11 // pred_fallthru
          _
        // Predicated region
        $region57: #{the_model_forward.1} parent=11 // pred_check
          %p418 = pneg %p302
        $region58: #{the_model_forward.1} parent=11 // pred_check_branch
          %420 = sbr.rel (%p418) target = $region60
        $region59: #{the_model_forward.1} parent=11 // pred_region
          _
        $region60: #{the_model_forward.1} parent=11 // pred_fallthru
          _
        // Predicated region
        $region61: #{the_model_forward.1} parent=11 // pred_check
          %p421 = pneg %p323
        $region62: #{the_model_forward.1} parent=11 // pred_check_branch
          %423 = sbr.rel (%p421) target = $region64
        $region63: #{the_model_forward.1} parent=11 // pred_region
          _
        $region64: #{the_model_forward.1} parent=11 // pred_fallthru
          _
        // Predicated region
        $region65: #{the_model_forward.1} parent=11 // pred_check
          %p424 = pneg %p344
        $region66: #{the_model_forward.1} parent=11 // pred_check_branch
          %426 = sbr.rel (%p424) target = $region68
        $region67: #{the_model_forward.1} parent=11 // pred_region
          _
        $region68: #{the_model_forward.1} parent=11 // pred_fallthru
          _
      $region12: #{the_model_forward.1} parent=5 // pred_fallthru
        _
      %p427 = scmp.lt.s32.totalorder %s24, 2
      // Predicated region
      $region69: #{the_model_forward.1} parent=5 // pred_check
        %p428 = pneg %p427
      $region70: #{the_model_forward.1} parent=5 // pred_check_branch
        %430 = sbr.rel (%p428) target = $region72
      $region71: #{the_model_forward.1} parent=5 // pred_region
        // Predicated region
        $region73: #{the_model_forward.1} parent=71 // pred_check
          %p431 = pneg %p44
        $region74: #{the_model_forward.1} parent=71 // pred_check_branch
          %433 = sbr.rel (%p431) target = $region76
        $region75: #{the_model_forward.1} parent=71 // pred_region
          %p434 = scmp.lt.s32.totalorder %s24, 1
          %s435 = scalar_select %p434, %s24, 1
          %s436 = smul.addr %s435, 4
          %s437 = smul.addr %s436, 8
          %s438 = scalar_lea.vmem %s0, %s437
        $region76: #{the_model_forward.1} parent=71 // pred_fallthru
          _
      $region72: #{the_model_forward.1} parent=5 // pred_fallthru
        _
      %p439 = scmp.le.s32.totalorder 1, %s24
      %p440 = scmp.lt.s32.totalorder %s24, 3
      %p441 = pnand %p439, %p440
      %p442 = pneg %p441
      // Predicated region
      $region77: #{the_model_forward.1} parent=5 // pred_check
        _
      $region78: #{the_model_forward.1} parent=5 // pred_check_branch
        %444 = sbr.rel (%p441) target = $region80
      $region79: #{the_model_forward.1} parent=5 // pred_region
        %s445 = ssub.s32 %s24, 1
        %p446 = scmp.lt.s32.totalorder %s29, 1
        %s447 = scalar_select %p446, %s29, 1
        %s448 = smul.addr %s447, 4
        %s449 = smul.addr %s448, 8
        %s450 = scalar_lea.vmem %s0, %s449
        %p451 = pneg %p50
        %p452 = pneg %p47
        %p453 = pneg %p71
        %p454 = pneg %p68
        %p455 = pneg %p92
        %p456 = pneg %p89
        %p457 = pneg %p113
        %p458 = pneg %p110
        %p459 = pneg %p134
        %p460 = pneg %p131
        %p461 = pneg %p155
        %p462 = pneg %p152
        %p463 = pneg %p176
        %p464 = pneg %p173
        %p465 = pneg %p197
        %p466 = pneg %p194
        %p467 = pneg %p218
        %p468 = pneg %p215
        %p469 = pneg %p239
        %p470 = pneg %p236
        %p471 = pneg %p260
        %p472 = pneg %p257
        %p473 = pneg %p281
        %p474 = pneg %p278
        %p475 = pneg %p302
        %p476 = pneg %p299
        %p477 = pneg %p323
        %p478 = pneg %p320
        %p479 = pneg %p344
        %p480 = pneg %p341
        %p481 = pneg %p370
        %p482 = pneg %p367
        %s483 = sand.u32 %s357, 1
        %s484 = scalar_lea.sflag [#allocation3], %s483
        %s485 = sand.u32 %s357, 1
        %s486 = scalar_lea.vmem [#allocation2], %s485
        %p487 = scmp.lt.s32.totalorder %s29, 1
        %s488 = scalar_select %p487, %s29, 1
        %s489 = smul.addr %s488, 4
        %s490 = smul.addr %s489, 8
        %s491 = scalar_lea.vmem %s0, %s490
        %v492 = vld [vmem:[%s491] sm:$0xff]
        %v493 = vld [vmem:[%s491 + $0x8] sm:$0xff]
        %v494 = vld [vmem:[%s491 + $0x10] sm:$0xff]
        %v495 = vld [vmem:[%s491 + $0x18] sm:$0xff]
        %v496 = vld [vmem:[%s1] sm:$0xff]
        %v497 = vld [vmem:[%s1 + $0x8] sm:$0xff]
        %v498 = vld [vmem:[%s1 + $0x10] sm:$0xff]
        %v499 = vld [vmem:[%s1 + $0x18] sm:$0xff]
        %v500 = vld [vmem:[%s1 + $0x20] sm:$0xff]
        %v501 = vld [vmem:[%s1 + $0x28] sm:$0xff]
        %v502 = vld [vmem:[%s1 + $0x30] sm:$0xff]
        %v503 = vld [vmem:[%s1 + $0x38] sm:$0xff]
        %v504 = vld [vmem:[%s1 + $0x40] sm:$0xff]
        %v505 = vld [vmem:[%s1 + $0x48] sm:$0xff]
        %v506 = vld [vmem:[%s1 + $0x50] sm:$0xff]
        %v507 = vld [vmem:[%s1 + $0x58] sm:$0xff]
        %v508 = vld [vmem:[%s1 + $0x60] sm:$0xff]
        %v509 = vld [vmem:[%s1 + $0x68] sm:$0xff]
        %v510 = vld [vmem:[%s1 + $0x70] sm:$0xff]
        %v511 = vld [vmem:[%s1 + $0x78] sm:$0xff]
        %v512 = vld [vmem:[%s1 + $0x80] sm:$0xff]
        %v513 = vld [vmem:[%s1 + $0x88] sm:$0xff]
        %v514 = vld [vmem:[%s1 + $0x90] sm:$0xff]
        %v515 = vld [vmem:[%s1 + $0x98] sm:$0xff]
        %v516 = vld [vmem:[%s1 + $0xa0] sm:$0xff]
        %v517 = vld [vmem:[%s1 + $0xa8] sm:$0xff]
        %v518 = vld [vmem:[%s1 + $0xb0] sm:$0xff]
        %v519 = vld [vmem:[%s1 + $0xb8] sm:$0xff]
        %s520 = scalar_lea.vmem %s1, 192
        %v521 = vld [vmem:[%s520] sm:$0xff]
        %v522 = vld [vmem:[%s520 + $0x8] sm:$0xff]
        %v523 = vld [vmem:[%s520 + $0x10] sm:$0xff]
        %v524 = vld [vmem:[%s520 + $0x18] sm:$0xff]
        %v525 = vld [vmem:[%s520 + $0x20] sm:$0xff]
        %v526 = vld [vmem:[%s520 + $0x28] sm:$0xff]
        %v527 = vld [vmem:[%s520 + $0x30] sm:$0xff]
        %v528 = vld [vmem:[%s520 + $0x38] sm:$0xff]
        %v529 = vld [vmem:[%s520 + $0x40] sm:$0xff]
        %v530 = vld [vmem:[%s520 + $0x48] sm:$0xff]
        %v531 = vld [vmem:[%s520 + $0x50] sm:$0xff]
        %v532 = vld [vmem:[%s520 + $0x58] sm:$0xff]
        %v533 = vld [vmem:[%s520 + $0x60] sm:$0xff]
        %v534 = vld [vmem:[%s520 + $0x68] sm:$0xff]
        %v535 = vld [vmem:[%s520 + $0x70] sm:$0xff]
        %v536 = vld [vmem:[%s520 + $0x78] sm:$0xff]
        %v537 = vld [vmem:[%s520 + $0x80] sm:$0xff]
        %v538 = vld [vmem:[%s520 + $0x88] sm:$0xff]
        %v539 = vld [vmem:[%s520 + $0x90] sm:$0xff]
        %v540 = vld [vmem:[%s520 + $0x98] sm:$0xff]
        %v541 = vld [vmem:[%s520 + $0xa0] sm:$0xff]
        %v542 = vld [vmem:[%s520 + $0xa8] sm:$0xff]
        %v543 = vld [vmem:[%s520 + $0xb0] sm:$0xff]
        %v544 = vld [vmem:[%s520 + $0xb8] sm:$0xff]
        %vm549 = vcmask 1046528
        %v550 = vrot.slane %v492, 1
        %v551 = vrot.slane %v493, 1
        %v552 = vsel %vm549, %v550, %v551
        %v553 = vrot.slane %v494, 1
        %v554 = vsel %vm549, %v551, %v553
        %v555 = vrot.slane %v495, 1
        %v556 = vsel %vm549, %v553, %v555
        %vm557 = vcmask 785408
        %v558 = vsel %vm557, %v552, 0
        %v560 = vsel %vm557, %v554, 0
        %v562 = vsel %vm557, %v556, 0
        %v564 = vsel %vm557, %v555, 0
        %566 = vmatprep.subr.mxu0 0.0
        %567 = vmatpush1.msra.mxu0 0.0
        %568 = vmatprep.subr.mxu0 0.0
        %569 = vmatpush1.msra.mxu0 0.0
        %570 = vmatprep.subr.mxu0 0.0
        %571 = vmatpush1.msra.mxu0 0.0
        %572 = vmatprep.subr.mxu0 0.0
        %573 = vmatpush1.msra.mxu0 0.0
        %574 = vmatprep.subr.mxu0 %v544
        %575 = vmatpush1.msra.mxu0 %v543
        %576 = vmatprep.subr.mxu0 %v542
        %577 = vmatpush1.msra.mxu0 %v541
        %578 = vmatprep.subr.mxu0 %v540
        %579 = vmatpush1.msra.mxu0 %v539
        %580 = vmatprep.subr.mxu0 %v538
        %581 = vmatpush1.msra.mxu0 %v537
        %582 = vmatprep.subr.mxu0 %v536
        %583 = vmatpush1.msra.mxu0 %v535
        %584 = vmatprep.subr.mxu0 %v534
        %585 = vmatpush1.msra.mxu0 %v533
        %586 = vmatprep.subr.mxu0 %v532
        %587 = vmatpush1.msra.mxu0 %v531
        %588 = vmatprep.subr.mxu0 %v530
        %589 = vmatpush1.msra.mxu0 %v529
        %590 = vmatprep.subr.mxu0 %v528
        %591 = vmatpush1.msra.mxu0 %v527
        %592 = vmatprep.subr.mxu0 %v526
        %593 = vmatpush1.msra.mxu0 %v525
        %594 = vmatprep.subr.mxu0 %v524
        %595 = vmatpush1.msra.mxu0 %v523
        %596 = vmatprep.subr.mxu0 %v522
        %597 = vmatpush1.msra.mxu0 %v521
        %598 = vmatprep.subr.mxu0 0.0
        %599 = vmatpush2.msra.mxu0 0.0
        %600 = vmatprep.subr.mxu0 0.0
        %601 = vmatpush2.msra.mxu0 0.0
        %602 = vmatprep.subr.mxu0 0.0
        %603 = vmatpush2.msra.mxu0 0.0
        %604 = vmatprep.subr.mxu0 0.0
        %605 = vmatpush2.msra.mxu0 0.0
        %606 = vmatprep.subr.mxu0 0.0
        %607 = vmatpush2.msra.mxu0 0.0
        %608 = vmatprep.subr.mxu0 0.0
        %609 = vmatpush2.msra.mxu0 0.0
        %610 = vmatprep.subr.mxu0 0.0
        %611 = vmatpush2.msra.mxu0 0.0
        %612 = vmatprep.subr.mxu0 0.0
        %613 = vmatpush2.msra.mxu0 0.0
        %614 = vmatprep.subr.mxu0 0.0
        %615 = vmatpush2.msra.mxu0 0.0
        %616 = vmatprep.subr.mxu0 0.0
        %617 = vmatpush2.msra.mxu0 0.0
        %618 = vmatprep.subr.mxu0 0.0
        %619 = vmatpush2.msra.mxu0 0.0
        %620 = vmatprep.subr.mxu0 0.0
        %621 = vmatpush2.msra.mxu0 0.0
        %622 = vmatprep.subr.mxu0 0.0
        %623 = vmatpush2.msra.mxu0 0.0
        %624 = vmatprep.subr.mxu0 0.0
        %625 = vmatpush2.msra.mxu0 0.0
        %626 = vmatprep.subr.mxu0 0.0
        %627 = vmatpush2.msra.mxu0 0.0
        %628 = vmatprep.subr.mxu0 0.0
        %629 = vmatpush2.msra.mxu0 0.0
        %630 = vmatprep.mubr.f32.mxu0 0.0
        %631 = vmatmul.mubr.f32.gmra.mxu0 %v558
        %v632 = vpop.f32.mrf.mxu0
        %v633 = vadd.f32 0.0, %v632
        %v634 = vpop.f32.mrf.mxu0
        %v635 = vadd.f32 0.0, %v634
        %636 = vmatprep.mubr.f32.mxu0 0.0
        %637 = vmatmul.mubr.f32.gmra.mxu0 %v560
        %v638 = vpop.f32.mrf.mxu0
        %v639 = vadd.f32 0.0, %v638
        %v640 = vpop.f32.mrf.mxu0
        %v641 = vadd.f32 0.0, %v640
        %642 = vmatprep.mubr.f32.mxu0 0.0
        %643 = vmatmul.mubr.f32.gmra.mxu0 %v562
        %v644 = vpop.f32.mrf.mxu0
        %v645 = vadd.f32 0.0, %v644
        %v646 = vpop.f32.mrf.mxu0
        %v647 = vadd.f32 0.0, %v646
        %648 = vmatprep.mubr.f32.mxu0 0.0
        %649 = vmatmul.mubr.f32.gmra.mxu0 %v564
        %v650 = vpop.f32.mrf.mxu0
        %v651 = vadd.f32 0.0, %v650
        %v652 = vpop.f32.mrf.mxu0
        %v653 = vadd.f32 0.0, %v652
        %654 = vdwg.mxu0
        %v655 = vsel %vm557, %v492, 0
        %v657 = vsel %vm557, %v493, 0
        %v659 = vsel %vm557, %v494, 0
        %v661 = vsel %vm557, %v495, 0
        %663 = vmatprep.subr.mxu0 0.0
        %664 = vmatpush1.msra.mxu0 0.0
        %665 = vmatprep.subr.mxu0 0.0
        %666 = vmatpush1.msra.mxu0 0.0
        %667 = vmatprep.subr.mxu0 0.0
        %668 = vmatpush1.msra.mxu0 0.0
        %669 = vmatprep.subr.mxu0 0.0
        %670 = vmatpush1.msra.mxu0 0.0
        %671 = vmatprep.subr.mxu0 %v519
        %672 = vmatpush1.msra.mxu0 %v518
        %673 = vmatprep.subr.mxu0 %v517
        %674 = vmatpush1.msra.mxu0 %v516
        %675 = vmatprep.subr.mxu0 %v515
        %676 = vmatpush1.msra.mxu0 %v514
        %677 = vmatprep.subr.mxu0 %v513
        %678 = vmatpush1.msra.mxu0 %v512
        %679 = vmatprep.subr.mxu0 %v511
        %680 = vmatpush1.msra.mxu0 %v510
        %681 = vmatprep.subr.mxu0 %v509
        %682 = vmatpush1.msra.mxu0 %v508
        %683 = vmatprep.subr.mxu0 %v507
        %684 = vmatpush1.msra.mxu0 %v506
        %685 = vmatprep.subr.mxu0 %v505
        %686 = vmatpush1.msra.mxu0 %v504
        %687 = vmatprep.subr.mxu0 %v503
        %688 = vmatpush1.msra.mxu0 %v502
        %689 = vmatprep.subr.mxu0 %v501
        %690 = vmatpush1.msra.mxu0 %v500
        %691 = vmatprep.subr.mxu0 %v499
        %692 = vmatpush1.msra.mxu0 %v498
        %693 = vmatprep.subr.mxu0 %v497
        %694 = vmatpush1.msra.mxu0 %v496
        %695 = vmatprep.subr.mxu0 0.0
        %696 = vmatpush2.msra.mxu0 0.0
        %697 = vmatprep.subr.mxu0 0.0
        %698 = vmatpush2.msra.mxu0 0.0
        %699 = vmatprep.subr.mxu0 0.0
        %700 = vmatpush2.msra.mxu0 0.0
        %701 = vmatprep.subr.mxu0 0.0
        %702 = vmatpush2.msra.mxu0 0.0
        %703 = vmatprep.subr.mxu0 0.0
        %704 = vmatpush2.msra.mxu0 0.0
        %705 = vmatprep.subr.mxu0 0.0
        %706 = vmatpush2.msra.mxu0 0.0
        %707 = vmatprep.subr.mxu0 0.0
        %708 = vmatpush2.msra.mxu0 0.0
        %709 = vmatprep.subr.mxu0 0.0
        %710 = vmatpush2.msra.mxu0 0.0
        %711 = vmatprep.subr.mxu0 0.0
        %712 = vmatpush2.msra.mxu0 0.0
        %713 = vmatprep.subr.mxu0 0.0
        %714 = vmatpush2.msra.mxu0 0.0
        %715 = vmatprep.subr.mxu0 0.0
        %716 = vmatpush2.msra.mxu0 0.0
        %717 = vmatprep.subr.mxu0 0.0
        %718 = vmatpush2.msra.mxu0 0.0
        %719 = vmatprep.subr.mxu0 0.0
        %720 = vmatpush2.msra.mxu0 0.0
        %721 = vmatprep.subr.mxu0 0.0
        %722 = vmatpush2.msra.mxu0 0.0
        %723 = vmatprep.subr.mxu0 0.0
        %724 = vmatpush2.msra.mxu0 0.0
        %725 = vmatprep.subr.mxu0 0.0
        %726 = vmatpush2.msra.mxu0 0.0
        %727 = vmatprep.mubr.f32.mxu0 0.0
        %728 = vmatmul.mubr.f32.gmra.mxu0 %v655
        %v729 = vpop.f32.mrf.mxu0
        %v730 = vadd.f32 %v633, %v729
        %v731 = vpop.f32.mrf.mxu0
        %v732 = vadd.f32 %v635, %v731
        %733 = vmatprep.mubr.f32.mxu0 0.0
        %734 = vmatmul.mubr.f32.gmra.mxu0 %v657
        %v735 = vpop.f32.mrf.mxu0
        %v736 = vadd.f32 %v639, %v735
        %v737 = vpop.f32.mrf.mxu0
        %v738 = vadd.f32 %v641, %v737
        %739 = vmatprep.mubr.f32.mxu0 0.0
        %740 = vmatmul.mubr.f32.gmra.mxu0 %v659
        %v741 = vpop.f32.mrf.mxu0
        %v742 = vadd.f32 %v645, %v741
        %v743 = vpop.f32.mrf.mxu0
        %v744 = vadd.f32 %v647, %v743
        %745 = vmatprep.mubr.f32.mxu0 0.0
        %746 = vmatmul.mubr.f32.gmra.mxu0 %v661
        %v747 = vpop.f32.mrf.mxu0
        %v748 = vadd.f32 %v651, %v747
        %v749 = vpop.f32.mrf.mxu0
        %v750 = vadd.f32 %v653, %v749
        %751 = vdwg.mxu0
        %s752 = scalar_lea.vmem %s1, 384
        %v753 = vld [vmem:[%s752] sm:$0xff]
        %v754 = vld [vmem:[%s752 + $0x8] sm:$0xff]
        %v755 = vld [vmem:[%s752 + $0x10] sm:$0xff]
        %v756 = vld [vmem:[%s752 + $0x18] sm:$0xff]
        %v757 = vld [vmem:[%s752 + $0x20] sm:$0xff]
        %v758 = vld [vmem:[%s752 + $0x28] sm:$0xff]
        %v759 = vld [vmem:[%s752 + $0x30] sm:$0xff]
        %v760 = vld [vmem:[%s752 + $0x38] sm:$0xff]
        %v761 = vld [vmem:[%s752 + $0x40] sm:$0xff]
        %v762 = vld [vmem:[%s752 + $0x48] sm:$0xff]
        %v763 = vld [vmem:[%s752 + $0x50] sm:$0xff]
        %v764 = vld [vmem:[%s752 + $0x58] sm:$0xff]
        %v765 = vld [vmem:[%s752 + $0x60] sm:$0xff]
        %v766 = vld [vmem:[%s752 + $0x68] sm:$0xff]
        %v767 = vld [vmem:[%s752 + $0x70] sm:$0xff]
        %v768 = vld [vmem:[%s752 + $0x78] sm:$0xff]
        %v769 = vld [vmem:[%s752 + $0x80] sm:$0xff]
        %v770 = vld [vmem:[%s752 + $0x88] sm:$0xff]
        %v771 = vld [vmem:[%s752 + $0x90] sm:$0xff]
        %v772 = vld [vmem:[%s752 + $0x98] sm:$0xff]
        %v773 = vld [vmem:[%s752 + $0xa0] sm:$0xff]
        %v774 = vld [vmem:[%s752 + $0xa8] sm:$0xff]
        %v775 = vld [vmem:[%s752 + $0xb0] sm:$0xff]
        %v776 = vld [vmem:[%s752 + $0xb8] sm:$0xff]
        %vm777 = vcmask 1045504
        %v778 = vrot.slane %v492, 2
        %v779 = vrot.slane %v493, 2
        %v780 = vsel %vm777, %v778, %v779
        %v781 = vrot.slane %v494, 2
        %v782 = vsel %vm777, %v779, %v781
        %v783 = vrot.slane %v495, 2
        %v784 = vsel %vm777, %v781, %v783
        %v785 = vsel %vm557, %v780, 0
        %v787 = vsel %vm557, %v782, 0
        %v789 = vsel %vm557, %v784, 0
        %v791 = vsel %vm557, %v783, 0
        %793 = vmatprep.subr.mxu0 0.0
        %794 = vmatpush1.msra.mxu0 0.0
        %795 = vmatprep.subr.mxu0 0.0
        %796 = vmatpush1.msra.mxu0 0.0
        %797 = vmatprep.subr.mxu0 0.0
        %798 = vmatpush1.msra.mxu0 0.0
        %799 = vmatprep.subr.mxu0 0.0
        %800 = vmatpush1.msra.mxu0 0.0
        %801 = vmatprep.subr.mxu0 %v776
        %802 = vmatpush1.msra.mxu0 %v775
        %803 = vmatprep.subr.mxu0 %v774
        %804 = vmatpush1.msra.mxu0 %v773
        %805 = vmatprep.subr.mxu0 %v772
        %806 = vmatpush1.msra.mxu0 %v771
        %807 = vmatprep.subr.mxu0 %v770
        %808 = vmatpush1.msra.mxu0 %v769
        %809 = vmatprep.subr.mxu0 %v768
        %810 = vmatpush1.msra.mxu0 %v767
        %811 = vmatprep.subr.mxu0 %v766
        %812 = vmatpush1.msra.mxu0 %v765
        %813 = vmatprep.subr.mxu0 %v764
        %814 = vmatpush1.msra.mxu0 %v763
        %815 = vmatprep.subr.mxu0 %v762
        %816 = vmatpush1.msra.mxu0 %v761
        %817 = vmatprep.subr.mxu0 %v760
        %818 = vmatpush1.msra.mxu0 %v759
        %819 = vmatprep.subr.mxu0 %v758
        %820 = vmatpush1.msra.mxu0 %v757
        %821 = vmatprep.subr.mxu0 %v756
        %822 = vmatpush1.msra.mxu0 %v755
        %823 = vmatprep.subr.mxu0 %v754
        %824 = vmatpush1.msra.mxu0 %v753
        %825 = vmatprep.subr.mxu0 0.0
        %826 = vmatpush2.msra.mxu0 0.0
        %827 = vmatprep.subr.mxu0 0.0
        %828 = vmatpush2.msra.mxu0 0.0
        %829 = vmatprep.subr.mxu0 0.0
        %830 = vmatpush2.msra.mxu0 0.0
        %831 = vmatprep.subr.mxu0 0.0
        %832 = vmatpush2.msra.mxu0 0.0
        %833 = vmatprep.subr.mxu0 0.0
        %834 = vmatpush2.msra.mxu0 0.0
        %835 = vmatprep.subr.mxu0 0.0
        %836 = vmatpush2.msra.mxu0 0.0
        %837 = vmatprep.subr.mxu0 0.0
        %838 = vmatpush2.msra.mxu0 0.0
        %839 = vmatprep.subr.mxu0 0.0
        %840 = vmatpush2.msra.mxu0 0.0
        %841 = vmatprep.subr.mxu0 0.0
        %842 = vmatpush2.msra.mxu0 0.0
        %843 = vmatprep.subr.mxu0 0.0
        %844 = vmatpush2.msra.mxu0 0.0
        %845 = vmatprep.subr.mxu0 0.0
        %846 = vmatpush2.msra.mxu0 0.0
        %847 = vmatprep.subr.mxu0 0.0
        %848 = vmatpush2.msra.mxu0 0.0
        %849 = vmatprep.subr.mxu0 0.0
        %850 = vmatpush2.msra.mxu0 0.0
        %851 = vmatprep.subr.mxu0 0.0
        %852 = vmatpush2.msra.mxu0 0.0
        %853 = vmatprep.subr.mxu0 0.0
        %854 = vmatpush2.msra.mxu0 0.0
        %855 = vmatprep.subr.mxu0 0.0
        %856 = vmatpush2.msra.mxu0 0.0
        %857 = vmatprep.mubr.f32.mxu0 0.0
        %858 = vmatmul.mubr.f32.gmra.mxu0 %v785
        %v859 = vpop.f32.mrf.mxu0
        %v860 = vadd.f32 0.0, %v859
        %v861 = vpop.f32.mrf.mxu0
        %v862 = vadd.f32 0.0, %v861
        %863 = vmatprep.mubr.f32.mxu0 0.0
        %864 = vmatmul.mubr.f32.gmra.mxu0 %v787
        %v865 = vpop.f32.mrf.mxu0
        %v866 = vadd.f32 0.0, %v865
        %v867 = vpop.f32.mrf.mxu0
        %v868 = vadd.f32 0.0, %v867
        %869 = vmatprep.mubr.f32.mxu0 0.0
        %870 = vmatmul.mubr.f32.gmra.mxu0 %v789
        %v871 = vpop.f32.mrf.mxu0
        %v872 = vadd.f32 0.0, %v871
        %v873 = vpop.f32.mrf.mxu0
        %v874 = vadd.f32 0.0, %v873
        %875 = vmatprep.mubr.f32.mxu0 0.0
        %876 = vmatmul.mubr.f32.gmra.mxu0 %v791
        %v877 = vpop.f32.mrf.mxu0
        %v878 = vadd.f32 0.0, %v877
        %v879 = vpop.f32.mrf.mxu0
        %v880 = vadd.f32 0.0, %v879
        %881 = vdwg.mxu0
        %v882 = vadd.f32 %v730, %v860
        %v883 = vadd.f32 %v732, %v862
        %v884 = vadd.f32 %v736, %v866
        %v885 = vadd.f32 %v738, %v868
        %v886 = vadd.f32 %v742, %v872
        %v887 = vadd.f32 %v744, %v874
        %v888 = vadd.f32 %v748, %v878
        %v889 = vadd.f32 %v750, %v880
        %s890 = scalar_lea.vmem %s1, 576
        %v891 = vld [vmem:[%s890] sm:$0xff]
        %v892 = vld [vmem:[%s890 + $0x8] sm:$0xff]
        %v893 = vld [vmem:[%s890 + $0x10] sm:$0xff]
        %v894 = vld [vmem:[%s890 + $0x18] sm:$0xff]
        %v895 = vld [vmem:[%s890 + $0x20] sm:$0xff]
        %v896 = vld [vmem:[%s890 + $0x28] sm:$0xff]
        %v897 = vld [vmem:[%s890 + $0x30] sm:$0xff]
        %v898 = vld [vmem:[%s890 + $0x38] sm:$0xff]
        %v899 = vld [vmem:[%s890 + $0x40] sm:$0xff]
        %v900 = vld [vmem:[%s890 + $0x48] sm:$0xff]
        %v901 = vld [vmem:[%s890 + $0x50] sm:$0xff]
        %v902 = vld [vmem:[%s890 + $0x58] sm:$0xff]
        %v903 = vld [vmem:[%s890 + $0x60] sm:$0xff]
        %v904 = vld [vmem:[%s890 + $0x68] sm:$0xff]
        %v905 = vld [vmem:[%s890 + $0x70] sm:$0xff]
        %v906 = vld [vmem:[%s890 + $0x78] sm:$0xff]
        %v907 = vld [vmem:[%s890 + $0x80] sm:$0xff]
        %v908 = vld [vmem:[%s890 + $0x88] sm:$0xff]
        %v909 = vld [vmem:[%s890 + $0x90] sm:$0xff]
        %v910 = vld [vmem:[%s890 + $0x98] sm:$0xff]
        %v911 = vld [vmem:[%s890 + $0xa0] sm:$0xff]
        %v912 = vld [vmem:[%s890 + $0xa8] sm:$0xff]
        %v913 = vld [vmem:[%s890 + $0xb0] sm:$0xff]
        %v914 = vld [vmem:[%s890 + $0xb8] sm:$0xff]
        %vm915 = vcmask 1044480
        %v916 = vrot.slane %v492, 3
        %v917 = vrot.slane %v493, 3
        %v918 = vsel %vm915, %v916, %v917
        %v919 = vrot.slane %v494, 3
        %v920 = vsel %vm915, %v917, %v919
        %v921 = vrot.slane %v495, 3
        %v922 = vsel %vm915, %v919, %v921
        %v923 = vsel %vm557, %v918, 0
        %v925 = vsel %vm557, %v920, 0
        %v927 = vsel %vm557, %v922, 0
        %v929 = vsel %vm557, %v921, 0
        %931 = vmatprep.subr.mxu0 0.0
        %932 = vmatpush1.msra.mxu0 0.0
        %933 = vmatprep.subr.mxu0 0.0
        %934 = vmatpush1.msra.mxu0 0.0
        %935 = vmatprep.subr.mxu0 0.0
        %936 = vmatpush1.msra.mxu0 0.0
        %937 = vmatprep.subr.mxu0 0.0
        %938 = vmatpush1.msra.mxu0 0.0
        %939 = vmatprep.subr.mxu0 %v914
        %940 = vmatpush1.msra.mxu0 %v913
        %941 = vmatprep.subr.mxu0 %v912
        %942 = vmatpush1.msra.mxu0 %v911
        %943 = vmatprep.subr.mxu0 %v910
        %944 = vmatpush1.msra.mxu0 %v909
        %945 = vmatprep.subr.mxu0 %v908
        %946 = vmatpush1.msra.mxu0 %v907
        %947 = vmatprep.subr.mxu0 %v906
        %948 = vmatpush1.msra.mxu0 %v905
        %949 = vmatprep.subr.mxu0 %v904
        %950 = vmatpush1.msra.mxu0 %v903
        %951 = vmatprep.subr.mxu0 %v902
        %952 = vmatpush1.msra.mxu0 %v901
        %953 = vmatprep.subr.mxu0 %v900
        %954 = vmatpush1.msra.mxu0 %v899
        %955 = vmatprep.subr.mxu0 %v898
        %956 = vmatpush1.msra.mxu0 %v897
        %957 = vmatprep.subr.mxu0 %v896
        %958 = vmatpush1.msra.mxu0 %v895
        %959 = vmatprep.subr.mxu0 %v894
        %960 = vmatpush1.msra.mxu0 %v893
        %961 = vmatprep.subr.mxu0 %v892
        %962 = vmatpush1.msra.mxu0 %v891
        %963 = vmatprep.subr.mxu0 0.0
        %964 = vmatpush2.msra.mxu0 0.0
        %965 = vmatprep.subr.mxu0 0.0
        %966 = vmatpush2.msra.mxu0 0.0
        %967 = vmatprep.subr.mxu0 0.0
        %968 = vmatpush2.msra.mxu0 0.0
        %969 = vmatprep.subr.mxu0 0.0
        %970 = vmatpush2.msra.mxu0 0.0
        %971 = vmatprep.subr.mxu0 0.0
        %972 = vmatpush2.msra.mxu0 0.0
        %973 = vmatprep.subr.mxu0 0.0
        %974 = vmatpush2.msra.mxu0 0.0
        %975 = vmatprep.subr.mxu0 0.0
        %976 = vmatpush2.msra.mxu0 0.0
        %977 = vmatprep.subr.mxu0 0.0
        %978 = vmatpush2.msra.mxu0 0.0
        %979 = vmatprep.subr.mxu0 0.0
        %980 = vmatpush2.msra.mxu0 0.0
        %981 = vmatprep.subr.mxu0 0.0
        %982 = vmatpush2.msra.mxu0 0.0
        %983 = vmatprep.subr.mxu0 0.0
        %984 = vmatpush2.msra.mxu0 0.0
        %985 = vmatprep.subr.mxu0 0.0
        %986 = vmatpush2.msra.mxu0 0.0
        %987 = vmatprep.subr.mxu0 0.0
        %988 = vmatpush2.msra.mxu0 0.0
        %989 = vmatprep.subr.mxu0 0.0
        %990 = vmatpush2.msra.mxu0 0.0
        %991 = vmatprep.subr.mxu0 0.0
        %992 = vmatpush2.msra.mxu0 0.0
        %993 = vmatprep.subr.mxu0 0.0
        %994 = vmatpush2.msra.mxu0 0.0
        %995 = vmatprep.mubr.f32.mxu0 0.0
        %996 = vmatmul.mubr.f32.gmra.mxu0 %v923
        %v997 = vpop.f32.mrf.mxu0
        %v998 = vadd.f32 0.0, %v997
        %v999 = vpop.f32.mrf.mxu0
        %v1000 = vadd.f32 0.0, %v999
        %1001 = vmatprep.mubr.f32.mxu0 0.0
        %1002 = vmatmul.mubr.f32.gmra.mxu0 %v925
        %v1003 = vpop.f32.mrf.mxu0
        %v1004 = vadd.f32 0.0, %v1003
        %v1005 = vpop.f32.mrf.mxu0
        %v1006 = vadd.f32 0.0, %v1005
        %1007 = vmatprep.mubr.f32.mxu0 0.0
        %1008 = vmatmul.mubr.f32.gmra.mxu0 %v927
        %v1009 = vpop.f32.mrf.mxu0
        %v1010 = vadd.f32 0.0, %v1009
        %v1011 = vpop.f32.mrf.mxu0
        %v1012 = vadd.f32 0.0, %v1011
        %1013 = vmatprep.mubr.f32.mxu0 0.0
        %1014 = vmatmul.mubr.f32.gmra.mxu0 %v929
        %v1015 = vpop.f32.mrf.mxu0
        %v1016 = vadd.f32 0.0, %v1015
        %v1017 = vpop.f32.mrf.mxu0
        %v1018 = vadd.f32 0.0, %v1017
        %1019 = vdwg.mxu0
        %v1020 = vadd.f32 %v882, %v998
        %v1021 = vadd.f32 %v883, %v1000
        %v1022 = vadd.f32 %v884, %v1004
        %v1023 = vadd.f32 %v885, %v1006
        %v1024 = vadd.f32 %v886, %v1010
        %v1025 = vadd.f32 %v887, %v1012
        %v1026 = vadd.f32 %v888, %v1016
        %v1027 = vadd.f32 %v889, %v1018
        %s1028 = scalar_lea.vmem %s1, 768
        %v1029 = vld [vmem:[%s1028] sm:$0xff]
        %v1030 = vld [vmem:[%s1028 + $0x8] sm:$0xff]
        %v1031 = vld [vmem:[%s1028 + $0x10] sm:$0xff]
        %v1032 = vld [vmem:[%s1028 + $0x18] sm:$0xff]
        %v1033 = vld [vmem:[%s1028 + $0x20] sm:$0xff]
        %v1034 = vld [vmem:[%s1028 + $0x28] sm:$0xff]
        %v1035 = vld [vmem:[%s1028 + $0x30] sm:$0xff]
        %v1036 = vld [vmem:[%s1028 + $0x38] sm:$0xff]
        %v1037 = vld [vmem:[%s1028 + $0x40] sm:$0xff]
        %v1038 = vld [vmem:[%s1028 + $0x48] sm:$0xff]
        %v1039 = vld [vmem:[%s1028 + $0x50] sm:$0xff]
        %v1040 = vld [vmem:[%s1028 + $0x58] sm:$0xff]
        %v1041 = vld [vmem:[%s1028 + $0x60] sm:$0xff]
        %v1042 = vld [vmem:[%s1028 + $0x68] sm:$0xff]
        %v1043 = vld [vmem:[%s1028 + $0x70] sm:$0xff]
        %v1044 = vld [vmem:[%s1028 + $0x78] sm:$0xff]
        %v1045 = vld [vmem:[%s1028 + $0x80] sm:$0xff]
        %v1046 = vld [vmem:[%s1028 + $0x88] sm:$0xff]
        %v1047 = vld [vmem:[%s1028 + $0x90] sm:$0xff]
        %v1048 = vld [vmem:[%s1028 + $0x98] sm:$0xff]
        %v1049 = vld [vmem:[%s1028 + $0xa0] sm:$0xff]
        %v1050 = vld [vmem:[%s1028 + $0xa8] sm:$0xff]
        %v1051 = vld [vmem:[%s1028 + $0xb0] sm:$0xff]
        %v1052 = vld [vmem:[%s1028 + $0xb8] sm:$0xff]
        %vm1053 = vcmask 1043456
        %v1054 = vrot.slane %v492, 4
        %v1055 = vrot.slane %v493, 4
        %v1056 = vsel %vm1053, %v1054, %v1055
        %v1057 = vrot.slane %v494, 4
        %v1058 = vsel %vm1053, %v1055, %v1057
        %v1059 = vrot.slane %v495, 4
        %v1060 = vsel %vm1053, %v1057, %v1059
        %v1061 = vsel %vm557, %v1056, 0
        %v1063 = vsel %vm557, %v1058, 0
        %v1065 = vsel %vm557, %v1060, 0
        %v1067 = vsel %vm557, %v1059, 0
        %1069 = vmatprep.subr.mxu0 0.0
        %1070 = vmatpush1.msra.mxu0 0.0
        %1071 = vmatprep.subr.mxu0 0.0
        %1072 = vmatpush1.msra.mxu0 0.0
        %1073 = vmatprep.subr.mxu0 0.0
        %1074 = vmatpush1.msra.mxu0 0.0
        %1075 = vmatprep.subr.mxu0 0.0
        %1076 = vmatpush1.msra.mxu0 0.0
        %1077 = vmatprep.subr.mxu0 %v1052
        %1078 = vmatpush1.msra.mxu0 %v1051
        %1079 = vmatprep.subr.mxu0 %v1050
        %1080 = vmatpush1.msra.mxu0 %v1049
        %1081 = vmatprep.subr.mxu0 %v1048
        %1082 = vmatpush1.msra.mxu0 %v1047
        %1083 = vmatprep.subr.mxu0 %v1046
        %1084 = vmatpush1.msra.mxu0 %v1045
        %1085 = vmatprep.subr.mxu0 %v1044
        %1086 = vmatpush1.msra.mxu0 %v1043
        %1087 = vmatprep.subr.mxu0 %v1042
        %1088 = vmatpush1.msra.mxu0 %v1041
        %1089 = vmatprep.subr.mxu0 %v1040
        %1090 = vmatpush1.msra.mxu0 %v1039
        %1091 = vmatprep.subr.mxu0 %v1038
        %1092 = vmatpush1.msra.mxu0 %v1037
        %1093 = vmatprep.subr.mxu0 %v1036
        %1094 = vmatpush1.msra.mxu0 %v1035
        %1095 = vmatprep.subr.mxu0 %v1034
        %1096 = vmatpush1.msra.mxu0 %v1033
        %1097 = vmatprep.subr.mxu0 %v1032
        %1098 = vmatpush1.msra.mxu0 %v1031
        %1099 = vmatprep.subr.mxu0 %v1030
        %1100 = vmatpush1.msra.mxu0 %v1029
        %1101 = vmatprep.subr.mxu0 0.0
        %1102 = vmatpush2.msra.mxu0 0.0
        %1103 = vmatprep.subr.mxu0 0.0
        %1104 = vmatpush2.msra.mxu0 0.0
        %1105 = vmatprep.subr.mxu0 0.0
        %1106 = vmatpush2.msra.mxu0 0.0
        %1107 = vmatprep.subr.mxu0 0.0
        %1108 = vmatpush2.msra.mxu0 0.0
        %1109 = vmatprep.subr.mxu0 0.0
        %1110 = vmatpush2.msra.mxu0 0.0
        %1111 = vmatprep.subr.mxu0 0.0
        %1112 = vmatpush2.msra.mxu0 0.0
        %1113 = vmatprep.subr.mxu0 0.0
        %1114 = vmatpush2.msra.mxu0 0.0
        %1115 = vmatprep.subr.mxu0 0.0
        %1116 = vmatpush2.msra.mxu0 0.0
        %1117 = vmatprep.subr.mxu0 0.0
        %1118 = vmatpush2.msra.mxu0 0.0
        %1119 = vmatprep.subr.mxu0 0.0
        %1120 = vmatpush2.msra.mxu0 0.0
        %1121 = vmatprep.subr.mxu0 0.0
        %1122 = vmatpush2.msra.mxu0 0.0
        %1123 = vmatprep.subr.mxu0 0.0
        %1124 = vmatpush2.msra.mxu0 0.0
        %1125 = vmatprep.subr.mxu0 0.0
        %1126 = vmatpush2.msra.mxu0 0.0
        %1127 = vmatprep.subr.mxu0 0.0
        %1128 = vmatpush2.msra.mxu0 0.0
        %1129 = vmatprep.subr.mxu0 0.0
        %1130 = vmatpush2.msra.mxu0 0.0
        %1131 = vmatprep.subr.mxu0 0.0
        %1132 = vmatpush2.msra.mxu0 0.0
        %1133 = vmatprep.mubr.f32.mxu0 0.0
        %1134 = vmatmul.mubr.f32.gmra.mxu0 %v1061
        %v1135 = vpop.f32.mrf.mxu0
        %v1136 = vadd.f32 0.0, %v1135
        %v1137 = vpop.f32.mrf.mxu0
        %v1138 = vadd.f32 0.0, %v1137
        %1139 = vmatprep.mubr.f32.mxu0 0.0
        %1140 = vmatmul.mubr.f32.gmra.mxu0 %v1063
        %v1141 = vpop.f32.mrf.mxu0
        %v1142 = vadd.f32 0.0, %v1141
        %v1143 = vpop.f32.mrf.mxu0
        %v1144 = vadd.f32 0.0, %v1143
        %1145 = vmatprep.mubr.f32.mxu0 0.0
        %1146 = vmatmul.mubr.f32.gmra.mxu0 %v1065
        %v1147 = vpop.f32.mrf.mxu0
        %v1148 = vadd.f32 0.0, %v1147
        %v1149 = vpop.f32.mrf.mxu0
        %v1150 = vadd.f32 0.0, %v1149
        %1151 = vmatprep.mubr.f32.mxu0 0.0
        %1152 = vmatmul.mubr.f32.gmra.mxu0 %v1067
        %v1153 = vpop.f32.mrf.mxu0
        %v1154 = vadd.f32 0.0, %v1153
        %v1155 = vpop.f32.mrf.mxu0
        %v1156 = vadd.f32 0.0, %v1155
        %1157 = vdwg.mxu0
        %v1158 = vadd.f32 %v1020, %v1136
        %v1159 = vadd.f32 %v1021, %v1138
        %v1160 = vadd.f32 %v1022, %v1142
        %v1161 = vadd.f32 %v1023, %v1144
        %v1162 = vadd.f32 %v1024, %v1148
        %v1163 = vadd.f32 %v1025, %v1150
        %v1164 = vadd.f32 %v1026, %v1154
        %v1165 = vadd.f32 %v1027, %v1156
        %v1166 = vld [vmem:[%s2] sm:$0x3]
        %v1168 = vlaneseq
        %v1169 = vshrl.u32 %v1168, 7
        %v1170 = vsub.s32 0, %v1169
        %v1171 = vrot.slane %v1166, %v1170
        %v1172 = vlaneseq
        %v1173 = vshrl.u32 %v1172, 7
        %v1174 = vsub.s32 1, %v1173
        %v1175 = vrot.slane %v1166, %v1174
        %v1178 = vadd.f32 %v1158, %v1171
        %v1179 = vadd.f32 %v1159, %v1175
        %v1180 = vadd.f32 %v1160, %v1171
        %v1181 = vadd.f32 %v1161, %v1175
        %v1182 = vadd.f32 %v1162, %v1171
        %v1183 = vadd.f32 %v1163, %v1175
        %v1184 = vadd.f32 %v1164, %v1171
        %v1185 = vadd.f32 %v1165, %v1175
        %v1186 = vmax.f32 %v1178, 0.0
        %v1187 = vmax.f32 %v1179, 0.0
        %v1188 = vmax.f32 %v1180, 0.0
        %v1189 = vmax.f32 %v1181, 0.0
        %v1190 = vmax.f32 %v1182, 0.0
        %v1191 = vmax.f32 %v1183, 0.0
        %v1192 = vmax.f32 %v1184, 0.0
        %v1193 = vmax.f32 %v1185, 0.0
        %v1194 = vld [vmem:[%s3] sm:$0xff]
        %v1195 = vld [vmem:[%s3 + $0x8] sm:$0xff]
        %v1196 = vld [vmem:[%s3 + $0x10] sm:$0xff]
        %v1197 = vld [vmem:[%s3 + $0x18] sm:$0xff]
        %v1198 = vld [vmem:[%s3 + $0x20] sm:$0xff]
        %v1199 = vld [vmem:[%s3 + $0x28] sm:$0xff]
        %v1200 = vld [vmem:[%s3 + $0x30] sm:$0xff]
        %v1201 = vld [vmem:[%s3 + $0x38] sm:$0xff]
        %v1202 = vld [vmem:[%s3 + $0x40] sm:$0xff]
        %v1203 = vld [vmem:[%s3 + $0x48] sm:$0xff]
        %v1204 = vld [vmem:[%s3 + $0x50] sm:$0xff]
        %v1205 = vld [vmem:[%s3 + $0x58] sm:$0xff]
        %v1206 = vld [vmem:[%s3 + $0x60] sm:$0xff]
        %v1207 = vld [vmem:[%s3 + $0x68] sm:$0xff]
        %v1208 = vld [vmem:[%s3 + $0x70] sm:$0xff]
        %v1209 = vld [vmem:[%s3 + $0x78] sm:$0xff]
        %v1210 = vld [vmem:[%s3 + $0x80] sm:$0xff]
        %v1211 = vld [vmem:[%s3 + $0x88] sm:$0xff]
        %v1212 = vld [vmem:[%s3 + $0x90] sm:$0xff]
        %v1213 = vld [vmem:[%s3 + $0x98] sm:$0xff]
        %v1214 = vld [vmem:[%s3 + $0xa0] sm:$0xff]
        %vm1215 = vcmask 326656
        %v1217 = vsel %vm1215, %v1187, 0
        %v1220 = vsel %vm1215, %v1189, 0
        %v1223 = vsel %vm1215, %v1191, 0
        %v1226 = vsel %vm1215, %v1193, 0
        %1228 = vmatprep.subr.mxu0 0.0
        %1229 = vmatpush1.msra.mxu0 %v1209
        %1230 = vmatprep.subr.mxu0 0.0
        %1231 = vmatpush1.msra.mxu0 %v1208
        %1232 = vmatprep.subr.mxu0 0.0
        %1233 = vmatpush1.msra.mxu0 %v1207
        %1234 = vmatprep.subr.mxu0 0.0
        %1235 = vmatpush1.msra.mxu0 %v1206
        %1236 = vmatprep.subr.mxu0 0.0
        %1237 = vmatpush1.msra.mxu0 %v1205
        %1238 = vmatprep.subr.mxu0 0.0
        %1239 = vmatpush1.msra.mxu0 %v1204
        %1240 = vmatprep.subr.mxu0 0.0
        %1241 = vmatpush1.msra.mxu0 %v1203
        %1242 = vmatprep.subr.mxu0 0.0
        %1243 = vmatpush1.msra.mxu0 %v1202
        %1244 = vmatprep.subr.mxu0 0.0
        %1245 = vmatpush1.msra.mxu0 %v1201
        %1246 = vmatprep.subr.mxu0 0.0
        %1247 = vmatpush1.msra.mxu0 %v1200
        %1248 = vmatprep.subr.mxu0 0.0
        %1249 = vmatpush1.msra.mxu0 %v1199
        %1250 = vmatprep.subr.mxu0 0.0
        %1251 = vmatpush1.msra.mxu0 %v1198
        %1252 = vmatprep.subr.mxu0 0.0
        %1253 = vmatpush1.msra.mxu0 %v1197
        %1254 = vmatprep.subr.mxu0 0.0
        %1255 = vmatpush1.msra.mxu0 %v1196
        %1256 = vmatprep.subr.mxu0 0.0
        %1257 = vmatpush1.msra.mxu0 %v1195
        %1258 = vmatprep.subr.mxu0 0.0
        %1259 = vmatpush1.msra.mxu0 %v1194
        %1260 = vmatprep.subr.mxu0 0.0
        %1261 = vmatpush2.msra.mxu0 0.0
        %1262 = vmatprep.subr.mxu0 0.0
        %1263 = vmatpush2.msra.mxu0 0.0
        %1264 = vmatprep.subr.mxu0 0.0
        %1265 = vmatpush2.msra.mxu0 0.0
        %1266 = vmatprep.subr.mxu0 0.0
        %1267 = vmatpush2.msra.mxu0 0.0
        %1268 = vmatprep.subr.mxu0 0.0
        %1269 = vmatpush2.msra.mxu0 0.0
        %1270 = vmatprep.subr.mxu0 0.0
        %1271 = vmatpush2.msra.mxu0 0.0
        %1272 = vmatprep.subr.mxu0 0.0
        %1273 = vmatpush2.msra.mxu0 0.0
        %1274 = vmatprep.subr.mxu0 0.0
        %1275 = vmatpush2.msra.mxu0 0.0
        %1276 = vmatprep.subr.mxu0 0.0
        %1277 = vmatpush2.msra.mxu0 0.0
        %1278 = vmatprep.subr.mxu0 0.0
        %1279 = vmatpush2.msra.mxu0 0.0
        %1280 = vmatprep.subr.mxu0 0.0
        %1281 = vmatpush2.msra.mxu0 0.0
        %1282 = vmatprep.subr.mxu0 0.0
        %1283 = vmatpush2.msra.mxu0 %v1214
        %1284 = vmatprep.subr.mxu0 0.0
        %1285 = vmatpush2.msra.mxu0 %v1213
        %1286 = vmatprep.subr.mxu0 0.0
        %1287 = vmatpush2.msra.mxu0 %v1212
        %1288 = vmatprep.subr.mxu0 0.0
        %1289 = vmatpush2.msra.mxu0 %v1211
        %1290 = vmatprep.subr.mxu0 0.0
        %1291 = vmatpush2.msra.mxu0 %v1210
        %1292 = vmatprep.mubr.f32.mxu0 %v1217
        %1293 = vmatmul.mubr.f32.gmra.mxu0 %v1186
        %v1294 = vpop.f32.mrf.mxu0
        %v1295 = vadd.f32 0.0, %v1294
        %v1296 = vpop.f32.mrf.mxu0
        %1297 = vmatprep.mubr.f32.mxu0 %v1220
        %1298 = vmatmul.mubr.f32.gmra.mxu0 %v1188
        %v1299 = vpop.f32.mrf.mxu0
        %v1300 = vadd.f32 0.0, %v1299
        %v1301 = vpop.f32.mrf.mxu0
        %1302 = vmatprep.mubr.f32.mxu0 %v1223
        %1303 = vmatmul.mubr.f32.gmra.mxu0 %v1190
        %v1304 = vpop.f32.mrf.mxu0
        %v1305 = vadd.f32 0.0, %v1304
        %v1306 = vpop.f32.mrf.mxu0
        %1307 = vmatprep.mubr.f32.mxu0 %v1226
        %1308 = vmatmul.mubr.f32.gmra.mxu0 %v1192
        %v1309 = vpop.f32.mrf.mxu0
        %v1310 = vadd.f32 0.0, %v1309
        %v1311 = vpop.f32.mrf.mxu0
        %1312 = vdwg.mxu0
        %s1313 = scalar_lea.vmem %s3, 168
        %v1314 = vld [vmem:[%s1313] sm:$0xff]
        %v1315 = vld [vmem:[%s1313 + $0x8] sm:$0xff]
        %v1316 = vld [vmem:[%s1313 + $0x10] sm:$0xff]
        %v1317 = vld [vmem:[%s1313 + $0x18] sm:$0xff]
        %v1318 = vld [vmem:[%s1313 + $0x20] sm:$0xff]
        %v1319 = vld [vmem:[%s1313 + $0x28] sm:$0xff]
        %v1320 = vld [vmem:[%s1313 + $0x30] sm:$0xff]
        %v1321 = vld [vmem:[%s1313 + $0x38] sm:$0xff]
        %v1322 = vld [vmem:[%s1313 + $0x40] sm:$0xff]
        %v1323 = vld [vmem:[%s1313 + $0x48] sm:$0xff]
        %v1324 = vld [vmem:[%s1313 + $0x50] sm:$0xff]
        %v1325 = vld [vmem:[%s1313 + $0x58] sm:$0xff]
        %v1326 = vld [vmem:[%s1313 + $0x60] sm:$0xff]
        %v1327 = vld [vmem:[%s1313 + $0x68] sm:$0xff]
        %v1328 = vld [vmem:[%s1313 + $0x70] sm:$0xff]
        %v1329 = vld [vmem:[%s1313 + $0x78] sm:$0xff]
        %v1330 = vld [vmem:[%s1313 + $0x80] sm:$0xff]
        %v1331 = vld [vmem:[%s1313 + $0x88] sm:$0xff]
        %v1332 = vld [vmem:[%s1313 + $0x90] sm:$0xff]
        %v1333 = vld [vmem:[%s1313 + $0x98] sm:$0xff]
        %v1334 = vld [vmem:[%s1313 + $0xa0] sm:$0xff]
        %1335 = vmatprep.subr.mxu0 0.0
        %1336 = vmatpush1.msra.mxu0 %v1329
        %1337 = vmatprep.subr.mxu0 0.0
        %1338 = vmatpush1.msra.mxu0 %v1328
        %1339 = vmatprep.subr.mxu0 0.0
        %1340 = vmatpush1.msra.mxu0 %v1327
        %1341 = vmatprep.subr.mxu0 0.0
        %1342 = vmatpush1.msra.mxu0 %v1326
        %1343 = vmatprep.subr.mxu0 0.0
        %1344 = vmatpush1.msra.mxu0 %v1325
        %1345 = vmatprep.subr.mxu0 0.0
        %1346 = vmatpush1.msra.mxu0 %v1324
        %1347 = vmatprep.subr.mxu0 0.0
        %1348 = vmatpush1.msra.mxu0 %v1323
        %1349 = vmatprep.subr.mxu0 0.0
        %1350 = vmatpush1.msra.mxu0 %v1322
        %1351 = vmatprep.subr.mxu0 0.0
        %1352 = vmatpush1.msra.mxu0 %v1321
        %1353 = vmatprep.subr.mxu0 0.0
        %1354 = vmatpush1.msra.mxu0 %v1320
        %1355 = vmatprep.subr.mxu0 0.0
        %1356 = vmatpush1.msra.mxu0 %v1319
        %1357 = vmatprep.subr.mxu0 0.0
        %1358 = vmatpush1.msra.mxu0 %v1318
        %1359 = vmatprep.subr.mxu0 0.0
        %1360 = vmatpush1.msra.mxu0 %v1317
        %1361 = vmatprep.subr.mxu0 0.0
        %1362 = vmatpush1.msra.mxu0 %v1316
        %1363 = vmatprep.subr.mxu0 0.0
        %1364 = vmatpush1.msra.mxu0 %v1315
        %1365 = vmatprep.subr.mxu0 0.0
        %1366 = vmatpush1.msra.mxu0 %v1314
        %1367 = vmatprep.subr.mxu0 0.0
        %1368 = vmatpush2.msra.mxu0 0.0
        %1369 = vmatprep.subr.mxu0 0.0
        %1370 = vmatpush2.msra.mxu0 0.0
        %1371 = vmatprep.subr.mxu0 0.0
        %1372 = vmatpush2.msra.mxu0 0.0
        %1373 = vmatprep.subr.mxu0 0.0
        %1374 = vmatpush2.msra.mxu0 0.0
        %1375 = vmatprep.subr.mxu0 0.0
        %1376 = vmatpush2.msra.mxu0 0.0
        %1377 = vmatprep.subr.mxu0 0.0
        %1378 = vmatpush2.msra.mxu0 0.0
        %1379 = vmatprep.subr.mxu0 0.0
        %1380 = vmatpush2.msra.mxu0 0.0
        %1381 = vmatprep.subr.mxu0 0.0
        %1382 = vmatpush2.msra.mxu0 0.0
        %1383 = vmatprep.subr.mxu0 0.0
        %1384 = vmatpush2.msra.mxu0 0.0
        %1385 = vmatprep.subr.mxu0 0.0
        %1386 = vmatpush2.msra.mxu0 0.0
        %1387 = vmatprep.subr.mxu0 0.0
        %1388 = vmatpush2.msra.mxu0 0.0
        %1389 = vmatprep.subr.mxu0 0.0
        %1390 = vmatpush2.msra.mxu0 %v1334
        %1391 = vmatprep.subr.mxu0 0.0
        %1392 = vmatpush2.msra.mxu0 %v1333
        %1393 = vmatprep.subr.mxu0 0.0
        %1394 = vmatpush2.msra.mxu0 %v1332
        %1395 = vmatprep.subr.mxu0 0.0
        %1396 = vmatpush2.msra.mxu0 %v1331
        %1397 = vmatprep.subr.mxu0 0.0
        %1398 = vmatpush2.msra.mxu0 %v1330
        %1399 = vmatprep.mubr.f32.mxu0 %v1217
        %1400 = vmatmul.mubr.f32.gmra.mxu0 %v1186
        %v1401 = vpop.f32.mrf.mxu0
        %v1402 = vadd.f32 0.0, %v1401
        %v1403 = vpop.f32.mrf.mxu0
        %1404 = vmatprep.mubr.f32.mxu0 %v1220
        %1405 = vmatmul.mubr.f32.gmra.mxu0 %v1188
        %v1406 = vpop.f32.mrf.mxu0
        %v1407 = vadd.f32 0.0, %v1406
        %v1408 = vpop.f32.mrf.mxu0
        %1409 = vmatprep.mubr.f32.mxu0 %v1223
        %1410 = vmatmul.mubr.f32.gmra.mxu0 %v1190
        %v1411 = vpop.f32.mrf.mxu0
        %v1412 = vadd.f32 0.0, %v1411
        %v1413 = vpop.f32.mrf.mxu0
        %1414 = vmatprep.mubr.f32.mxu0 %v1226
        %1415 = vmatmul.mubr.f32.gmra.mxu0 %v1192
        %v1416 = vpop.f32.mrf.mxu0
        %v1417 = vadd.f32 0.0, %v1416
        %v1418 = vpop.f32.mrf.mxu0
        %1419 = vdwg.mxu0
        %v1420 = vmax.f32 %v1295, %v1402
        %v1421 = vmax.f32 %v1300, %v1407
        %v1422 = vmax.f32 %v1305, %v1412
        %v1423 = vmax.f32 %v1310, %v1417
        %v1424 = vld [vmem:[%s4] sm:$0xff]
        %v1425 = vld [vmem:[%s4 + $0x8] sm:$0x3f]
        %vm1426 = vcmask 228352
        %v1428 = vsel %vm1426, %v1424, 0
        %v1431 = vsel %vm1426, %v1425, 0
        %v1434 = vsel %vm1053, %v1423, 0
        %1436 = vmatprep.subr.mxu0 0.0
        %1437 = vmatpush1.msra.mxu0 0.0
        %1438 = vmatprep.subr.mxu0 0.0
        %1439 = vmatpush1.msra.mxu0 0.0
        %1440 = vmatprep.subr.mxu0 0.0
        %1441 = vmatpush1.msra.mxu0 0.0
        %1442 = vmatprep.subr.mxu0 0.0
        %1443 = vmatpush1.msra.mxu0 0.0
        %1444 = vmatprep.subr.mxu0 0.0
        %1445 = vmatpush1.msra.mxu0 0.0
        %1446 = vmatprep.subr.mxu0 0.0
        %1447 = vmatpush1.msra.mxu0 0.0
        %1448 = vmatprep.subr.mxu0 0.0
        %1449 = vmatpush1.msra.mxu0 0.0
        %1450 = vmatprep.subr.mxu0 0.0
        %1451 = vmatpush1.msra.mxu0 0.0
        %1452 = vmatprep.subr.mxu0 0.0
        %1453 = vmatpush1.msra.mxu0 0.0
        %1454 = vmatprep.subr.mxu0 0.0
        %1455 = vmatpush1.msra.mxu0 0.0
        %1456 = vmatprep.subr.mxu0 0.0
        %1457 = vmatpush1.msra.mxu0 0.0
        %1458 = vmatprep.subr.mxu0 0.0
        %1459 = vmatpush1.msra.mxu0 0.0
        %1460 = vmatprep.subr.mxu0 0.0
        %1461 = vmatpush1.msra.mxu0 %v1434
        %1462 = vmatprep.subr.mxu0 0.0
        %1463 = vmatpush1.msra.mxu0 %v1422
        %1464 = vmatprep.subr.mxu0 0.0
        %1465 = vmatpush1.msra.mxu0 %v1421
        %1466 = vmatprep.subr.mxu0 0.0
        %1467 = vmatpush1.msra.mxu0 %v1420
        %1468 = vmatprep.subr.mxu0 0.0
        %1469 = vmatpush2.msra.mxu0 0.0
        %1470 = vmatprep.subr.mxu0 0.0
        %1471 = vmatpush2.msra.mxu0 0.0
        %1472 = vmatprep.subr.mxu0 0.0
        %1473 = vmatpush2.msra.mxu0 0.0
        %1474 = vmatprep.subr.mxu0 0.0
        %1475 = vmatpush2.msra.mxu0 0.0
        %1476 = vmatprep.subr.mxu0 0.0
        %1477 = vmatpush2.msra.mxu0 0.0
        %1478 = vmatprep.subr.mxu0 0.0
        %1479 = vmatpush2.msra.mxu0 0.0
        %1480 = vmatprep.subr.mxu0 0.0
        %1481 = vmatpush2.msra.mxu0 0.0
        %1482 = vmatprep.subr.mxu0 0.0
        %1483 = vmatpush2.msra.mxu0 0.0
        %1484 = vmatprep.subr.mxu0 0.0
        %1485 = vmatpush2.msra.mxu0 0.0
        %1486 = vmatprep.subr.mxu0 0.0
        %1487 = vmatpush2.msra.mxu0 0.0
        %1488 = vmatprep.subr.mxu0 0.0
        %1489 = vmatpush2.msra.mxu0 0.0
        %1490 = vmatprep.subr.mxu0 0.0
        %1491 = vmatpush2.msra.mxu0 0.0
        %1492 = vmatprep.subr.mxu0 0.0
        %1493 = vmatpush2.msra.mxu0 0.0
        %1494 = vmatprep.subr.mxu0 0.0
        %1495 = vmatpush2.msra.mxu0 0.0
        %1496 = vmatprep.subr.mxu0 0.0
        %1497 = vmatpush2.msra.mxu0 0.0
        %1498 = vmatprep.subr.mxu0 0.0
        %1499 = vmatpush2.msra.mxu0 0.0
        %1500 = vmatprep.mubr.f32.mxu0 0.0
        %1501 = vmatmul.mubr.f32.gmra.mxu0 %v1428
        %v1502 = vpop.f32.mrf.mxu0
        %v1503 = vadd.f32 0.0, %v1502
        %v1504 = vpop.f32.mrf.mxu0
        %1505 = vmatprep.mubr.f32.mxu0 0.0
        %1506 = vmatmul.mubr.f32.gmra.mxu0 %v1431
        %v1507 = vpop.f32.mrf.mxu0
        %v1508 = vadd.f32 0.0, %v1507
        %v1509 = vpop.f32.mrf.mxu0
        %1510 = vdwg.mxu0
        %s1511 = scalar_lea.vmem %s4, 16
        %v1512 = vld [vmem:[%s1511] sm:$0xff]
        %v1513 = vld [vmem:[%s1511 + $0x8] sm:$0x3f]
        %v1515 = vsel %vm1426, %v1512, 0
        %v1518 = vsel %vm1426, %v1513, 0
        %1520 = vmatprep.subr.mxu0 0.0
        %1521 = vmatpush1.msra.mxu0 0.0
        %1522 = vmatprep.subr.mxu0 0.0
        %1523 = vmatpush1.msra.mxu0 0.0
        %1524 = vmatprep.subr.mxu0 0.0
        %1525 = vmatpush1.msra.mxu0 0.0
        %1526 = vmatprep.subr.mxu0 0.0
        %1527 = vmatpush1.msra.mxu0 0.0
        %1528 = vmatprep.subr.mxu0 0.0
        %1529 = vmatpush1.msra.mxu0 0.0
        %1530 = vmatprep.subr.mxu0 0.0
        %1531 = vmatpush1.msra.mxu0 0.0
        %1532 = vmatprep.subr.mxu0 0.0
        %1533 = vmatpush1.msra.mxu0 0.0
        %1534 = vmatprep.subr.mxu0 0.0
        %1535 = vmatpush1.msra.mxu0 0.0
        %1536 = vmatprep.subr.mxu0 0.0
        %1537 = vmatpush1.msra.mxu0 0.0
        %1538 = vmatprep.subr.mxu0 0.0
        %1539 = vmatpush1.msra.mxu0 0.0
        %1540 = vmatprep.subr.mxu0 0.0
        %1541 = vmatpush1.msra.mxu0 0.0
        %1542 = vmatprep.subr.mxu0 0.0
        %1543 = vmatpush1.msra.mxu0 0.0
        %1544 = vmatprep.subr.mxu0 0.0
        %1545 = vmatpush1.msra.mxu0 %v1434
        %1546 = vmatprep.subr.mxu0 0.0
        %1547 = vmatpush1.msra.mxu0 %v1422
        %1548 = vmatprep.subr.mxu0 0.0
        %1549 = vmatpush1.msra.mxu0 %v1421
        %1550 = vmatprep.subr.mxu0 0.0
        %1551 = vmatpush1.msra.mxu0 %v1420
        %1552 = vmatprep.subr.mxu0 0.0
        %1553 = vmatpush2.msra.mxu0 0.0
        %1554 = vmatprep.subr.mxu0 0.0
        %1555 = vmatpush2.msra.mxu0 0.0
        %1556 = vmatprep.subr.mxu0 0.0
        %1557 = vmatpush2.msra.mxu0 0.0
        %1558 = vmatprep.subr.mxu0 0.0
        %1559 = vmatpush2.msra.mxu0 0.0
        %1560 = vmatprep.subr.mxu0 0.0
        %1561 = vmatpush2.msra.mxu0 0.0
        %1562 = vmatprep.subr.mxu0 0.0
        %1563 = vmatpush2.msra.mxu0 0.0
        %1564 = vmatprep.subr.mxu0 0.0
        %1565 = vmatpush2.msra.mxu0 0.0
        %1566 = vmatprep.subr.mxu0 0.0
        %1567 = vmatpush2.msra.mxu0 0.0
        %1568 = vmatprep.subr.mxu0 0.0
        %1569 = vmatpush2.msra.mxu0 0.0
        %1570 = vmatprep.subr.mxu0 0.0
        %1571 = vmatpush2.msra.mxu0 0.0
        %1572 = vmatprep.subr.mxu0 0.0
        %1573 = vmatpush2.msra.mxu0 0.0
        %1574 = vmatprep.subr.mxu0 0.0
        %1575 = vmatpush2.msra.mxu0 0.0
        %1576 = vmatprep.subr.mxu0 0.0
        %1577 = vmatpush2.msra.mxu0 0.0
        %1578 = vmatprep.subr.mxu0 0.0
        %1579 = vmatpush2.msra.mxu0 0.0
        %1580 = vmatprep.subr.mxu0 0.0
        %1581 = vmatpush2.msra.mxu0 0.0
        %1582 = vmatprep.subr.mxu0 0.0
        %1583 = vmatpush2.msra.mxu0 0.0
        %1584 = vmatprep.mubr.f32.mxu0 0.0
        %1585 = vmatmul.mubr.f32.gmra.mxu0 %v1515
        %v1586 = vpop.f32.mrf.mxu0
        %v1587 = vadd.f32 0.0, %v1586
        %v1588 = vpop.f32.mrf.mxu0
        %1589 = vmatprep.mubr.f32.mxu0 0.0
        %1590 = vmatmul.mubr.f32.gmra.mxu0 %v1518
        %v1591 = vpop.f32.mrf.mxu0
        %v1592 = vadd.f32 0.0, %v1591
        %v1593 = vpop.f32.mrf.mxu0
        %1594 = vdwg.mxu0
        %v1595 = vmax.f32 %v1503, %v1587
        %v1596 = vmax.f32 %v1508, %v1592
        %v1597 = vld [vmem:[%s5] sm:$0xff]
        %v1598 = vld [vmem:[%s5 + $0x8] sm:$0xff]
        %v1599 = vld [vmem:[%s5 + $0x10] sm:$0xff]
        %v1600 = vld [vmem:[%s5 + $0x18] sm:$0xff]
        %v1601 = vld [vmem:[%s5 + $0x20] sm:$0xff]
        %v1602 = vld [vmem:[%s5 + $0x28] sm:$0xff]
        %v1603 = vld [vmem:[%s5 + $0x30] sm:$0xff]
        %v1604 = vld [vmem:[%s5 + $0x38] sm:$0xff]
        %v1605 = vld [vmem:[%s5 + $0x40] sm:$0xff]
        %v1606 = vld [vmem:[%s5 + $0x48] sm:$0xff]
        %v1607 = vld [vmem:[%s5 + $0x50] sm:$0xff]
        %v1608 = vld [vmem:[%s5 + $0x58] sm:$0xff]
        %v1609 = vld [vmem:[%s5 + $0x60] sm:$0xff]
        %v1610 = vld [vmem:[%s5 + $0x68] sm:$0xff]
        %v1611 = vld [vmem:[%s5 + $0x70] sm:$0xff]
        %v1612 = vld [vmem:[%s5 + $0x78] sm:$0xff]
        %v1613 = vld [vmem:[%s5 + $0x80] sm:$0xff]
        %v1614 = vld [vmem:[%s5 + $0x88] sm:$0xff]
        %v1615 = vld [vmem:[%s5 + $0x90] sm:$0xff]
        %v1616 = vld [vmem:[%s5 + $0x98] sm:$0xff]
        %v1617 = vld [vmem:[%s5 + $0xa0] sm:$0xf]
        %v1618 = vld [vmem:[%s5 + $0xa8] sm:$0xf]
        %s1619 = scalar_lea.vmem %s5, 176
        %v1620 = vld [vmem:[%s1619] sm:$0xff]
        %v1621 = vld [vmem:[%s1619 + $0x8] sm:$0xff]
        %v1622 = vld [vmem:[%s1619 + $0x10] sm:$0xff]
        %v1623 = vld [vmem:[%s1619 + $0x18] sm:$0xff]
        %v1624 = vld [vmem:[%s1619 + $0x20] sm:$0xff]
        %v1625 = vld [vmem:[%s1619 + $0x28] sm:$0xff]
        %v1626 = vld [vmem:[%s1619 + $0x30] sm:$0xff]
        %v1627 = vld [vmem:[%s1619 + $0x38] sm:$0xff]
        %v1628 = vld [vmem:[%s1619 + $0x40] sm:$0xff]
        %v1629 = vld [vmem:[%s1619 + $0x48] sm:$0xff]
        %v1630 = vld [vmem:[%s1619 + $0x50] sm:$0xff]
        %v1631 = vld [vmem:[%s1619 + $0x58] sm:$0xff]
        %v1632 = vld [vmem:[%s1619 + $0x60] sm:$0xff]
        %v1633 = vld [vmem:[%s1619 + $0x68] sm:$0xff]
        %v1634 = vld [vmem:[%s1619 + $0x70] sm:$0xff]
        %v1635 = vld [vmem:[%s1619 + $0x78] sm:$0xff]
        %v1636 = vld [vmem:[%s1619 + $0x80] sm:$0xff]
        %v1637 = vld [vmem:[%s1619 + $0x88] sm:$0xff]
        %v1638 = vld [vmem:[%s1619 + $0x90] sm:$0xff]
        %v1639 = vld [vmem:[%s1619 + $0x98] sm:$0xff]
        %v1640 = vld [vmem:[%s1619 + $0xa0] sm:$0xf]
        %v1641 = vld [vmem:[%s1619 + $0xa8] sm:$0xf]
        %v1644 = vrot.slane %v1595, 1
        %v1645 = vrot.slane %v1596, 1
        %v1646 = vsel %vm549, %v1644, %v1645
        %vm1647 = vcmask 687104
        %v1648 = vsel %vm1647, %v1646, 0
        %v1650 = vsel %vm1647, %v1645, 0
        %v1653 = vsel %vm1053, %v1640, 0
        %v1656 = vsel %vm1053, %v1641, 0
        %1658 = vmatprep.subr.mxu0 0.0
        %1659 = vmatpush1.msra.mxu0 0.0
        %1660 = vmatprep.subr.mxu0 0.0
        %1661 = vmatpush1.msra.mxu0 0.0
        %1662 = vmatprep.subr.mxu0 0.0
        %1663 = vmatpush1.msra.mxu0 0.0
        %1664 = vmatprep.subr.mxu0 0.0
        %1665 = vmatpush1.msra.mxu0 0.0
        %1666 = vmatprep.subr.mxu0 0.0
        %1667 = vmatpush1.msra.mxu0 0.0
        %1668 = vmatprep.subr.mxu0 %v1656
        %1669 = vmatpush1.msra.mxu0 %v1653
        %1670 = vmatprep.subr.mxu0 %v1639
        %1671 = vmatpush1.msra.mxu0 %v1638
        %1672 = vmatprep.subr.mxu0 %v1637
        %1673 = vmatpush1.msra.mxu0 %v1636
        %1674 = vmatprep.subr.mxu0 %v1635
        %1675 = vmatpush1.msra.mxu0 %v1634
        %1676 = vmatprep.subr.mxu0 %v1633
        %1677 = vmatpush1.msra.mxu0 %v1632
        %1678 = vmatprep.subr.mxu0 %v1631
        %1679 = vmatpush1.msra.mxu0 %v1630
        %1680 = vmatprep.subr.mxu0 %v1629
        %1681 = vmatpush1.msra.mxu0 %v1628
        %1682 = vmatprep.subr.mxu0 %v1627
        %1683 = vmatpush1.msra.mxu0 %v1626
        %1684 = vmatprep.subr.mxu0 %v1625
        %1685 = vmatpush1.msra.mxu0 %v1624
        %1686 = vmatprep.subr.mxu0 %v1623
        %1687 = vmatpush1.msra.mxu0 %v1622
        %1688 = vmatprep.subr.mxu0 %v1621
        %1689 = vmatpush1.msra.mxu0 %v1620
        %1690 = vmatprep.subr.mxu0 0.0
        %1691 = vmatpush2.msra.mxu0 0.0
        %1692 = vmatprep.subr.mxu0 0.0
        %1693 = vmatpush2.msra.mxu0 0.0
        %1694 = vmatprep.subr.mxu0 0.0
        %1695 = vmatpush2.msra.mxu0 0.0
        %1696 = vmatprep.subr.mxu0 0.0
        %1697 = vmatpush2.msra.mxu0 0.0
        %1698 = vmatprep.subr.mxu0 0.0
        %1699 = vmatpush2.msra.mxu0 0.0
        %1700 = vmatprep.subr.mxu0 0.0
        %1701 = vmatpush2.msra.mxu0 0.0
        %1702 = vmatprep.subr.mxu0 0.0
        %1703 = vmatpush2.msra.mxu0 0.0
        %1704 = vmatprep.subr.mxu0 0.0
        %1705 = vmatpush2.msra.mxu0 0.0
        %1706 = vmatprep.subr.mxu0 0.0
        %1707 = vmatpush2.msra.mxu0 0.0
        %1708 = vmatprep.subr.mxu0 0.0
        %1709 = vmatpush2.msra.mxu0 0.0
        %1710 = vmatprep.subr.mxu0 0.0
        %1711 = vmatpush2.msra.mxu0 0.0
        %1712 = vmatprep.subr.mxu0 0.0
        %1713 = vmatpush2.msra.mxu0 0.0
        %1714 = vmatprep.subr.mxu0 0.0
        %1715 = vmatpush2.msra.mxu0 0.0
        %1716 = vmatprep.subr.mxu0 0.0
        %1717 = vmatpush2.msra.mxu0 0.0
        %1718 = vmatprep.subr.mxu0 0.0
        %1719 = vmatpush2.msra.mxu0 0.0
        %1720 = vmatprep.subr.mxu0 0.0
        %1721 = vmatpush2.msra.mxu0 0.0
        %1722 = vmatprep.mubr.f32.mxu0 0.0
        %1723 = vmatmul.mubr.f32.gmra.mxu0 %v1648
        %v1724 = vpop.f32.mrf.mxu0
        %v1725 = vadd.f32 0.0, %v1724
        %v1726 = vpop.f32.mrf.mxu0
        %v1727 = vadd.f32 0.0, %v1726
        %1728 = vmatprep.mubr.f32.mxu0 0.0
        %1729 = vmatmul.mubr.f32.gmra.mxu0 %v1650
        %v1730 = vpop.f32.mrf.mxu0
        %v1731 = vadd.f32 0.0, %v1730
        %v1732 = vpop.f32.mrf.mxu0
        %v1733 = vadd.f32 0.0, %v1732
        %1734 = vdwg.mxu0
        %v1735 = vsel %vm1647, %v1595, 0
        %v1737 = vsel %vm1647, %v1596, 0
        %v1740 = vsel %vm1053, %v1617, 0
        %v1743 = vsel %vm1053, %v1618, 0
        %1745 = vmatprep.subr.mxu0 0.0
        %1746 = vmatpush1.msra.mxu0 0.0
        %1747 = vmatprep.subr.mxu0 0.0
        %1748 = vmatpush1.msra.mxu0 0.0
        %1749 = vmatprep.subr.mxu0 0.0
        %1750 = vmatpush1.msra.mxu0 0.0
        %1751 = vmatprep.subr.mxu0 0.0
        %1752 = vmatpush1.msra.mxu0 0.0
        %1753 = vmatprep.subr.mxu0 0.0
        %1754 = vmatpush1.msra.mxu0 0.0
        %1755 = vmatprep.subr.mxu0 %v1743
        %1756 = vmatpush1.msra.mxu0 %v1740
        %1757 = vmatprep.subr.mxu0 %v1616
        %1758 = vmatpush1.msra.mxu0 %v1615
        %1759 = vmatprep.subr.mxu0 %v1614
        %1760 = vmatpush1.msra.mxu0 %v1613
        %1761 = vmatprep.subr.mxu0 %v1612
        %1762 = vmatpush1.msra.mxu0 %v1611
        %1763 = vmatprep.subr.mxu0 %v1610
        %1764 = vmatpush1.msra.mxu0 %v1609
        %1765 = vmatprep.subr.mxu0 %v1608
        %1766 = vmatpush1.msra.mxu0 %v1607
        %1767 = vmatprep.subr.mxu0 %v1606
        %1768 = vmatpush1.msra.mxu0 %v1605
        %1769 = vmatprep.subr.mxu0 %v1604
        %1770 = vmatpush1.msra.mxu0 %v1603
        %1771 = vmatprep.subr.mxu0 %v1602
        %1772 = vmatpush1.msra.mxu0 %v1601
        %1773 = vmatprep.subr.mxu0 %v1600
        %1774 = vmatpush1.msra.mxu0 %v1599
        %1775 = vmatprep.subr.mxu0 %v1598
        %1776 = vmatpush1.msra.mxu0 %v1597
        %1777 = vmatprep.subr.mxu0 0.0
        %1778 = vmatpush2.msra.mxu0 0.0
        %1779 = vmatprep.subr.mxu0 0.0
        %1780 = vmatpush2.msra.mxu0 0.0
        %1781 = vmatprep.subr.mxu0 0.0
        %1782 = vmatpush2.msra.mxu0 0.0
        %1783 = vmatprep.subr.mxu0 0.0
        %1784 = vmatpush2.msra.mxu0 0.0
        %1785 = vmatprep.subr.mxu0 0.0
        %1786 = vmatpush2.msra.mxu0 0.0
        %1787 = vmatprep.subr.mxu0 0.0
        %1788 = vmatpush2.msra.mxu0 0.0
        %1789 = vmatprep.subr.mxu0 0.0
        %1790 = vmatpush2.msra.mxu0 0.0
        %1791 = vmatprep.subr.mxu0 0.0
        %1792 = vmatpush2.msra.mxu0 0.0
        %1793 = vmatprep.subr.mxu0 0.0
        %1794 = vmatpush2.msra.mxu0 0.0
        %1795 = vmatprep.subr.mxu0 0.0
        %1796 = vmatpush2.msra.mxu0 0.0
        %1797 = vmatprep.subr.mxu0 0.0
        %1798 = vmatpush2.msra.mxu0 0.0
        %1799 = vmatprep.subr.mxu0 0.0
        %1800 = vmatpush2.msra.mxu0 0.0
        %1801 = vmatprep.subr.mxu0 0.0
        %1802 = vmatpush2.msra.mxu0 0.0
        %1803 = vmatprep.subr.mxu0 0.0
        %1804 = vmatpush2.msra.mxu0 0.0
        %1805 = vmatprep.subr.mxu0 0.0
        %1806 = vmatpush2.msra.mxu0 0.0
        %1807 = vmatprep.subr.mxu0 0.0
        %1808 = vmatpush2.msra.mxu0 0.0
        %1809 = vmatprep.mubr.f32.mxu0 0.0
        %1810 = vmatmul.mubr.f32.gmra.mxu0 %v1735
        %v1811 = vpop.f32.mrf.mxu0
        %v1812 = vadd.f32 %v1725, %v1811
        %v1813 = vpop.f32.mrf.mxu0
        %v1814 = vadd.f32 %v1727, %v1813
        %1815 = vmatprep.mubr.f32.mxu0 0.0
        %1816 = vmatmul.mubr.f32.gmra.mxu0 %v1737
        %v1817 = vpop.f32.mrf.mxu0
        %v1818 = vadd.f32 %v1731, %v1817
        %v1819 = vpop.f32.mrf.mxu0
        %v1820 = vadd.f32 %v1733, %v1819
        %1821 = vdwg.mxu0
        %s1822 = scalar_lea.vmem %s5, 352
        %v1823 = vld [vmem:[%s1822] sm:$0xff]
        %v1824 = vld [vmem:[%s1822 + $0x8] sm:$0xff]
        %v1825 = vld [vmem:[%s1822 + $0x10] sm:$0xff]
        %v1826 = vld [vmem:[%s1822 + $0x18] sm:$0xff]
        %v1827 = vld [vmem:[%s1822 + $0x20] sm:$0xff]
        %v1828 = vld [vmem:[%s1822 + $0x28] sm:$0xff]
        %v1829 = vld [vmem:[%s1822 + $0x30] sm:$0xff]
        %v1830 = vld [vmem:[%s1822 + $0x38] sm:$0xff]
        %v1831 = vld [vmem:[%s1822 + $0x40] sm:$0xff]
        %v1832 = vld [vmem:[%s1822 + $0x48] sm:$0xff]
        %v1833 = vld [vmem:[%s1822 + $0x50] sm:$0xff]
        %v1834 = vld [vmem:[%s1822 + $0x58] sm:$0xff]
        %v1835 = vld [vmem:[%s1822 + $0x60] sm:$0xff]
        %v1836 = vld [vmem:[%s1822 + $0x68] sm:$0xff]
        %v1837 = vld [vmem:[%s1822 + $0x70] sm:$0xff]
        %v1838 = vld [vmem:[%s1822 + $0x78] sm:$0xff]
        %v1839 = vld [vmem:[%s1822 + $0x80] sm:$0xff]
        %v1840 = vld [vmem:[%s1822 + $0x88] sm:$0xff]
        %v1841 = vld [vmem:[%s1822 + $0x90] sm:$0xff]
        %v1842 = vld [vmem:[%s1822 + $0x98] sm:$0xff]
        %v1843 = vld [vmem:[%s1822 + $0xa0] sm:$0xf]
        %v1844 = vld [vmem:[%s1822 + $0xa8] sm:$0xf]
        %v1845 = vrot.slane %v1595, 2
        %v1846 = vrot.slane %v1596, 2
        %v1847 = vsel %vm777, %v1845, %v1846
        %v1848 = vsel %vm1647, %v1847, 0
        %v1850 = vsel %vm1647, %v1846, 0
        %v1853 = vsel %vm1053, %v1843, 0
        %v1856 = vsel %vm1053, %v1844, 0
        %1858 = vmatprep.subr.mxu0 0.0
        %1859 = vmatpush1.msra.mxu0 0.0
        %1860 = vmatprep.subr.mxu0 0.0
        %1861 = vmatpush1.msra.mxu0 0.0
        %1862 = vmatprep.subr.mxu0 0.0
        %1863 = vmatpush1.msra.mxu0 0.0
        %1864 = vmatprep.subr.mxu0 0.0
        %1865 = vmatpush1.msra.mxu0 0.0
        %1866 = vmatprep.subr.mxu0 0.0
        %1867 = vmatpush1.msra.mxu0 0.0
        %1868 = vmatprep.subr.mxu0 %v1856
        %1869 = vmatpush1.msra.mxu0 %v1853
        %1870 = vmatprep.subr.mxu0 %v1842
        %1871 = vmatpush1.msra.mxu0 %v1841
        %1872 = vmatprep.subr.mxu0 %v1840
        %1873 = vmatpush1.msra.mxu0 %v1839
        %1874 = vmatprep.subr.mxu0 %v1838
        %1875 = vmatpush1.msra.mxu0 %v1837
        %1876 = vmatprep.subr.mxu0 %v1836
        %1877 = vmatpush1.msra.mxu0 %v1835
        %1878 = vmatprep.subr.mxu0 %v1834
        %1879 = vmatpush1.msra.mxu0 %v1833
        %1880 = vmatprep.subr.mxu0 %v1832
        %1881 = vmatpush1.msra.mxu0 %v1831
        %1882 = vmatprep.subr.mxu0 %v1830
        %1883 = vmatpush1.msra.mxu0 %v1829
        %1884 = vmatprep.subr.mxu0 %v1828
        %1885 = vmatpush1.msra.mxu0 %v1827
        %1886 = vmatprep.subr.mxu0 %v1826
        %1887 = vmatpush1.msra.mxu0 %v1825
        %1888 = vmatprep.subr.mxu0 %v1824
        %1889 = vmatpush1.msra.mxu0 %v1823
        %1890 = vmatprep.subr.mxu0 0.0
        %1891 = vmatpush2.msra.mxu0 0.0
        %1892 = vmatprep.subr.mxu0 0.0
        %1893 = vmatpush2.msra.mxu0 0.0
        %1894 = vmatprep.subr.mxu0 0.0
        %1895 = vmatpush2.msra.mxu0 0.0
        %1896 = vmatprep.subr.mxu0 0.0
        %1897 = vmatpush2.msra.mxu0 0.0
        %1898 = vmatprep.subr.mxu0 0.0
        %1899 = vmatpush2.msra.mxu0 0.0
        %1900 = vmatprep.subr.mxu0 0.0
        %1901 = vmatpush2.msra.mxu0 0.0
        %1902 = vmatprep.subr.mxu0 0.0
        %1903 = vmatpush2.msra.mxu0 0.0
        %1904 = vmatprep.subr.mxu0 0.0
        %1905 = vmatpush2.msra.mxu0 0.0
        %1906 = vmatprep.subr.mxu0 0.0
        %1907 = vmatpush2.msra.mxu0 0.0
        %1908 = vmatprep.subr.mxu0 0.0
        %1909 = vmatpush2.msra.mxu0 0.0
        %1910 = vmatprep.subr.mxu0 0.0
        %1911 = vmatpush2.msra.mxu0 0.0
        %1912 = vmatprep.subr.mxu0 0.0
        %1913 = vmatpush2.msra.mxu0 0.0
        %1914 = vmatprep.subr.mxu0 0.0
        %1915 = vmatpush2.msra.mxu0 0.0
        %1916 = vmatprep.subr.mxu0 0.0
        %1917 = vmatpush2.msra.mxu0 0.0
        %1918 = vmatprep.subr.mxu0 0.0
        %1919 = vmatpush2.msra.mxu0 0.0
        %1920 = vmatprep.subr.mxu0 0.0
        %1921 = vmatpush2.msra.mxu0 0.0
        %1922 = vmatprep.mubr.f32.mxu0 0.0
        %1923 = vmatmul.mubr.f32.gmra.mxu0 %v1848
        %v1924 = vpop.f32.mrf.mxu0
        %v1925 = vadd.f32 0.0, %v1924
        %v1926 = vpop.f32.mrf.mxu0
        %v1927 = vadd.f32 0.0, %v1926
        %1928 = vmatprep.mubr.f32.mxu0 0.0
        %1929 = vmatmul.mubr.f32.gmra.mxu0 %v1850
        %v1930 = vpop.f32.mrf.mxu0
        %v1931 = vadd.f32 0.0, %v1930
        %v1932 = vpop.f32.mrf.mxu0
        %v1933 = vadd.f32 0.0, %v1932
        %1934 = vdwg.mxu0
        %v1935 = vadd.f32 %v1812, %v1925
        %v1936 = vadd.f32 %v1814, %v1927
        %v1937 = vadd.f32 %v1818, %v1931
        %v1938 = vadd.f32 %v1820, %v1933
        %s1939 = scalar_lea.vmem %s5, 528
        %v1940 = vld [vmem:[%s1939] sm:$0xff]
        %v1941 = vld [vmem:[%s1939 + $0x8] sm:$0xff]
        %v1942 = vld [vmem:[%s1939 + $0x10] sm:$0xff]
        %v1943 = vld [vmem:[%s1939 + $0x18] sm:$0xff]
        %v1944 = vld [vmem:[%s1939 + $0x20] sm:$0xff]
        %v1945 = vld [vmem:[%s1939 + $0x28] sm:$0xff]
        %v1946 = vld [vmem:[%s1939 + $0x30] sm:$0xff]
        %v1947 = vld [vmem:[%s1939 + $0x38] sm:$0xff]
        %v1948 = vld [vmem:[%s1939 + $0x40] sm:$0xff]
        %v1949 = vld [vmem:[%s1939 + $0x48] sm:$0xff]
        %v1950 = vld [vmem:[%s1939 + $0x50] sm:$0xff]
        %v1951 = vld [vmem:[%s1939 + $0x58] sm:$0xff]
        %v1952 = vld [vmem:[%s1939 + $0x60] sm:$0xff]
        %v1953 = vld [vmem:[%s1939 + $0x68] sm:$0xff]
        %v1954 = vld [vmem:[%s1939 + $0x70] sm:$0xff]
        %v1955 = vld [vmem:[%s1939 + $0x78] sm:$0xff]
        %v1956 = vld [vmem:[%s1939 + $0x80] sm:$0xff]
        %v1957 = vld [vmem:[%s1939 + $0x88] sm:$0xff]
        %v1958 = vld [vmem:[%s1939 + $0x90] sm:$0xff]
        %v1959 = vld [vmem:[%s1939 + $0x98] sm:$0xff]
        %v1960 = vld [vmem:[%s1939 + $0xa0] sm:$0xf]
        %v1961 = vld [vmem:[%s1939 + $0xa8] sm:$0xf]
        %v1962 = vrot.slane %v1595, 3
        %v1963 = vrot.slane %v1596, 3
        %v1964 = vsel %vm915, %v1962, %v1963
        %v1965 = vsel %vm1647, %v1964, 0
        %v1967 = vsel %vm1647, %v1963, 0
        %v1970 = vsel %vm1053, %v1960, 0
        %v1973 = vsel %vm1053, %v1961, 0
        %1975 = vmatprep.subr.mxu0 0.0
        %1976 = vmatpush1.msra.mxu0 0.0
        %1977 = vmatprep.subr.mxu0 0.0
        %1978 = vmatpush1.msra.mxu0 0.0
        %1979 = vmatprep.subr.mxu0 0.0
        %1980 = vmatpush1.msra.mxu0 0.0
        %1981 = vmatprep.subr.mxu0 0.0
        %1982 = vmatpush1.msra.mxu0 0.0
        %1983 = vmatprep.subr.mxu0 0.0
        %1984 = vmatpush1.msra.mxu0 0.0
        %1985 = vmatprep.subr.mxu0 %v1973
        %1986 = vmatpush1.msra.mxu0 %v1970
        %1987 = vmatprep.subr.mxu0 %v1959
        %1988 = vmatpush1.msra.mxu0 %v1958
        %1989 = vmatprep.subr.mxu0 %v1957
        %1990 = vmatpush1.msra.mxu0 %v1956
        %1991 = vmatprep.subr.mxu0 %v1955
        %1992 = vmatpush1.msra.mxu0 %v1954
        %1993 = vmatprep.subr.mxu0 %v1953
        %1994 = vmatpush1.msra.mxu0 %v1952
        %1995 = vmatprep.subr.mxu0 %v1951
        %1996 = vmatpush1.msra.mxu0 %v1950
        %1997 = vmatprep.subr.mxu0 %v1949
        %1998 = vmatpush1.msra.mxu0 %v1948
        %1999 = vmatprep.subr.mxu0 %v1947
        %2000 = vmatpush1.msra.mxu0 %v1946
        %2001 = vmatprep.subr.mxu0 %v1945
        %2002 = vmatpush1.msra.mxu0 %v1944
        %2003 = vmatprep.subr.mxu0 %v1943
        %2004 = vmatpush1.msra.mxu0 %v1942
        %2005 = vmatprep.subr.mxu0 %v1941
        %2006 = vmatpush1.msra.mxu0 %v1940
        %2007 = vmatprep.subr.mxu0 0.0
        %2008 = vmatpush2.msra.mxu0 0.0
        %2009 = vmatprep.subr.mxu0 0.0
        %2010 = vmatpush2.msra.mxu0 0.0
        %2011 = vmatprep.subr.mxu0 0.0
        %2012 = vmatpush2.msra.mxu0 0.0
        %2013 = vmatprep.subr.mxu0 0.0
        %2014 = vmatpush2.msra.mxu0 0.0
        %2015 = vmatprep.subr.mxu0 0.0
        %2016 = vmatpush2.msra.mxu0 0.0
        %2017 = vmatprep.subr.mxu0 0.0
        %2018 = vmatpush2.msra.mxu0 0.0
        %2019 = vmatprep.subr.mxu0 0.0
        %2020 = vmatpush2.msra.mxu0 0.0
        %2021 = vmatprep.subr.mxu0 0.0
        %2022 = vmatpush2.msra.mxu0 0.0
        %2023 = vmatprep.subr.mxu0 0.0
        %2024 = vmatpush2.msra.mxu0 0.0
        %2025 = vmatprep.subr.mxu0 0.0
        %2026 = vmatpush2.msra.mxu0 0.0
        %2027 = vmatprep.subr.mxu0 0.0
        %2028 = vmatpush2.msra.mxu0 0.0
        %2029 = vmatprep.subr.mxu0 0.0
        %2030 = vmatpush2.msra.mxu0 0.0
        %2031 = vmatprep.subr.mxu0 0.0
        %2032 = vmatpush2.msra.mxu0 0.0
        %2033 = vmatprep.subr.mxu0 0.0
        %2034 = vmatpush2.msra.mxu0 0.0
        %2035 = vmatprep.subr.mxu0 0.0
        %2036 = vmatpush2.msra.mxu0 0.0
        %2037 = vmatprep.subr.mxu0 0.0
        %2038 = vmatpush2.msra.mxu0 0.0
        %2039 = vmatprep.mubr.f32.mxu0 0.0
        %2040 = vmatmul.mubr.f32.gmra.mxu0 %v1965
        %v2041 = vpop.f32.mrf.mxu0
        %v2042 = vadd.f32 0.0, %v2041
        %v2043 = vpop.f32.mrf.mxu0
        %v2044 = vadd.f32 0.0, %v2043
        %2045 = vmatprep.mubr.f32.mxu0 0.0
        %2046 = vmatmul.mubr.f32.gmra.mxu0 %v1967
        %v2047 = vpop.f32.mrf.mxu0
        %v2048 = vadd.f32 0.0, %v2047
        %v2049 = vpop.f32.mrf.mxu0
        %v2050 = vadd.f32 0.0, %v2049
        %2051 = vdwg.mxu0
        %v2052 = vadd.f32 %v1935, %v2042
        %v2053 = vadd.f32 %v1936, %v2044
        %v2054 = vadd.f32 %v1937, %v2048
        %v2055 = vadd.f32 %v1938, %v2050
        %s2056 = scalar_lea.vmem %s5, 704
        %v2057 = vld [vmem:[%s2056] sm:$0xff]
        %v2058 = vld [vmem:[%s2056 + $0x8] sm:$0xff]
        %v2059 = vld [vmem:[%s2056 + $0x10] sm:$0xff]
        %v2060 = vld [vmem:[%s2056 + $0x18] sm:$0xff]
        %v2061 = vld [vmem:[%s2056 + $0x20] sm:$0xff]
        %v2062 = vld [vmem:[%s2056 + $0x28] sm:$0xff]
        %v2063 = vld [vmem:[%s2056 + $0x30] sm:$0xff]
        %v2064 = vld [vmem:[%s2056 + $0x38] sm:$0xff]
        %v2065 = vld [vmem:[%s2056 + $0x40] sm:$0xff]
        %v2066 = vld [vmem:[%s2056 + $0x48] sm:$0xff]
        %v2067 = vld [vmem:[%s2056 + $0x50] sm:$0xff]
        %v2068 = vld [vmem:[%s2056 + $0x58] sm:$0xff]
        %v2069 = vld [vmem:[%s2056 + $0x60] sm:$0xff]
        %v2070 = vld [vmem:[%s2056 + $0x68] sm:$0xff]
        %v2071 = vld [vmem:[%s2056 + $0x70] sm:$0xff]
        %v2072 = vld [vmem:[%s2056 + $0x78] sm:$0xff]
        %v2073 = vld [vmem:[%s2056 + $0x80] sm:$0xff]
        %v2074 = vld [vmem:[%s2056 + $0x88] sm:$0xff]
        %v2075 = vld [vmem:[%s2056 + $0x90] sm:$0xff]
        %v2076 = vld [vmem:[%s2056 + $0x98] sm:$0xff]
        %v2077 = vld [vmem:[%s2056 + $0xa0] sm:$0xf]
        %v2078 = vld [vmem:[%s2056 + $0xa8] sm:$0xf]
        %v2079 = vrot.slane %v1595, 4
        %v2080 = vrot.slane %v1596, 4
        %v2081 = vsel %vm1053, %v2079, %v2080
        %v2082 = vsel %vm1647, %v2081, 0
        %v2084 = vsel %vm1647, %v2080, 0
        %v2087 = vsel %vm1053, %v2077, 0
        %v2090 = vsel %vm1053, %v2078, 0
        %2092 = vmatprep.subr.mxu0 0.0
        %2093 = vmatpush1.msra.mxu0 0.0
        %2094 = vmatprep.subr.mxu0 0.0
        %2095 = vmatpush1.msra.mxu0 0.0
        %2096 = vmatprep.subr.mxu0 0.0
        %2097 = vmatpush1.msra.mxu0 0.0
        %2098 = vmatprep.subr.mxu0 0.0
        %2099 = vmatpush1.msra.mxu0 0.0
        %2100 = vmatprep.subr.mxu0 0.0
        %2101 = vmatpush1.msra.mxu0 0.0
        %2102 = vmatprep.subr.mxu0 %v2090
        %2103 = vmatpush1.msra.mxu0 %v2087
        %2104 = vmatprep.subr.mxu0 %v2076
        %2105 = vmatpush1.msra.mxu0 %v2075
        %2106 = vmatprep.subr.mxu0 %v2074
        %2107 = vmatpush1.msra.mxu0 %v2073
        %2108 = vmatprep.subr.mxu0 %v2072
        %2109 = vmatpush1.msra.mxu0 %v2071
        %2110 = vmatprep.subr.mxu0 %v2070
        %2111 = vmatpush1.msra.mxu0 %v2069
        %2112 = vmatprep.subr.mxu0 %v2068
        %2113 = vmatpush1.msra.mxu0 %v2067
        %2114 = vmatprep.subr.mxu0 %v2066
        %2115 = vmatpush1.msra.mxu0 %v2065
        %2116 = vmatprep.subr.mxu0 %v2064
        %2117 = vmatpush1.msra.mxu0 %v2063
        %2118 = vmatprep.subr.mxu0 %v2062
        %2119 = vmatpush1.msra.mxu0 %v2061
        %2120 = vmatprep.subr.mxu0 %v2060
        %2121 = vmatpush1.msra.mxu0 %v2059
        %2122 = vmatprep.subr.mxu0 %v2058
        %2123 = vmatpush1.msra.mxu0 %v2057
        %2124 = vmatprep.subr.mxu0 0.0
        %2125 = vmatpush2.msra.mxu0 0.0
        %2126 = vmatprep.subr.mxu0 0.0
        %2127 = vmatpush2.msra.mxu0 0.0
        %2128 = vmatprep.subr.mxu0 0.0
        %2129 = vmatpush2.msra.mxu0 0.0
        %2130 = vmatprep.subr.mxu0 0.0
        %2131 = vmatpush2.msra.mxu0 0.0
        %2132 = vmatprep.subr.mxu0 0.0
        %2133 = vmatpush2.msra.mxu0 0.0
        %2134 = vmatprep.subr.mxu0 0.0
        %2135 = vmatpush2.msra.mxu0 0.0
        %2136 = vmatprep.subr.mxu0 0.0
        %2137 = vmatpush2.msra.mxu0 0.0
        %2138 = vmatprep.subr.mxu0 0.0
        %2139 = vmatpush2.msra.mxu0 0.0
        %2140 = vmatprep.subr.mxu0 0.0
        %2141 = vmatpush2.msra.mxu0 0.0
        %2142 = vmatprep.subr.mxu0 0.0
        %2143 = vmatpush2.msra.mxu0 0.0
        %2144 = vmatprep.subr.mxu0 0.0
        %2145 = vmatpush2.msra.mxu0 0.0
        %2146 = vmatprep.subr.mxu0 0.0
        %2147 = vmatpush2.msra.mxu0 0.0
        %2148 = vmatprep.subr.mxu0 0.0
        %2149 = vmatpush2.msra.mxu0 0.0
        %2150 = vmatprep.subr.mxu0 0.0
        %2151 = vmatpush2.msra.mxu0 0.0
        %2152 = vmatprep.subr.mxu0 0.0
        %2153 = vmatpush2.msra.mxu0 0.0
        %2154 = vmatprep.subr.mxu0 0.0
        %2155 = vmatpush2.msra.mxu0 0.0
        %2156 = vmatprep.mubr.f32.mxu0 0.0
        %2157 = vmatmul.mubr.f32.gmra.mxu0 %v2082
        %v2158 = vpop.f32.mrf.mxu0
        %v2159 = vadd.f32 0.0, %v2158
        %v2160 = vpop.f32.mrf.mxu0
        %v2161 = vadd.f32 0.0, %v2160
        %2162 = vmatprep.mubr.f32.mxu0 0.0
        %2163 = vmatmul.mubr.f32.gmra.mxu0 %v2084
        %v2164 = vpop.f32.mrf.mxu0
        %v2165 = vadd.f32 0.0, %v2164
        %v2166 = vpop.f32.mrf.mxu0
        %v2167 = vadd.f32 0.0, %v2166
        %2168 = vdwg.mxu0
        %v2169 = vadd.f32 %v2052, %v2159
        %v2170 = vadd.f32 %v2053, %v2161
        %v2171 = vadd.f32 %v2054, %v2165
        %v2172 = vadd.f32 %v2055, %v2167
        %v2173 = vld [vmem:[%s6] sm:$0x3]
        %v2175 = vlaneseq
        %v2176 = vshrl.u32 %v2175, 7
        %v2177 = vsub.s32 0, %v2176
        %v2178 = vrot.slane %v2173, %v2177
        %v2179 = vlaneseq
        %v2180 = vshrl.u32 %v2179, 7
        %v2181 = vsub.s32 1, %v2180
        %v2182 = vrot.slane %v2173, %v2181
        %v2185 = vadd.f32 %v2169, %v2178
        %v2186 = vadd.f32 %v2170, %v2182
        %v2187 = vadd.f32 %v2171, %v2178
        %v2188 = vadd.f32 %v2172, %v2182
        %v2189 = vmax.f32 %v2185, 0.0
        %v2190 = vmax.f32 %v2186, 0.0
        %v2191 = vmax.f32 %v2187, 0.0
        %v2192 = vmax.f32 %v2188, 0.0
        %v2193 = vld [vmem:[%s7] sm:$0xff]
        %v2194 = vld [vmem:[%s7 + $0x8] sm:$0xff]
        %v2195 = vld [vmem:[%s7 + $0x10] sm:$0xff]
        %v2196 = vld [vmem:[%s7 + $0x18] sm:$0xff]
        %v2197 = vld [vmem:[%s7 + $0x20] sm:$0xff]
        %v2198 = vld [vmem:[%s7 + $0x28] sm:$0xff]
        %v2199 = vld [vmem:[%s7 + $0x30] sm:$0xff]
        %v2200 = vld [vmem:[%s7 + $0x38] sm:$0xff]
        %v2201 = vld [vmem:[%s7 + $0x40] sm:$0xff]
        %v2202 = vld [vmem:[%s7 + $0x48] sm:$0xff]
        %v2203 = vld [vmem:[%s7 + $0x50] sm:$0xff]
        %v2204 = vld [vmem:[%s7 + $0x58] sm:$0xff]
        %v2205 = vld [vmem:[%s7 + $0x60] sm:$0xff]
        %v2206 = vld [vmem:[%s7 + $0x68] sm:$0xff]
        %v2207 = vld [vmem:[%s7 + $0x70] sm:$0xff]
        %v2208 = vld [vmem:[%s7 + $0x78] sm:$0xff]
        %v2209 = vld [vmem:[%s7 + $0x80] sm:$0xff]
        %v2210 = vld [vmem:[%s7 + $0x88] sm:$0xff]
        %v2211 = vld [vmem:[%s7 + $0x90] sm:$0xff]
        %v2212 = vld [vmem:[%s7 + $0x98] sm:$0xff]
        %vm2213 = vcmask 261120
        %v2215 = vsel %vm2213, %v2190, 0
        %v2218 = vsel %vm2213, %v2192, 0
        %2220 = vmatprep.subr.mxu0 0.0
        %2221 = vmatpush1.msra.mxu0 %v2208
        %2222 = vmatprep.subr.mxu0 0.0
        %2223 = vmatpush1.msra.mxu0 %v2207
        %2224 = vmatprep.subr.mxu0 0.0
        %2225 = vmatpush1.msra.mxu0 %v2206
        %2226 = vmatprep.subr.mxu0 0.0
        %2227 = vmatpush1.msra.mxu0 %v2205
        %2228 = vmatprep.subr.mxu0 0.0
        %2229 = vmatpush1.msra.mxu0 %v2204
        %2230 = vmatprep.subr.mxu0 0.0
        %2231 = vmatpush1.msra.mxu0 %v2203
        %2232 = vmatprep.subr.mxu0 0.0
        %2233 = vmatpush1.msra.mxu0 %v2202
        %2234 = vmatprep.subr.mxu0 0.0
        %2235 = vmatpush1.msra.mxu0 %v2201
        %2236 = vmatprep.subr.mxu0 0.0
        %2237 = vmatpush1.msra.mxu0 %v2200
        %2238 = vmatprep.subr.mxu0 0.0
        %2239 = vmatpush1.msra.mxu0 %v2199
        %2240 = vmatprep.subr.mxu0 0.0
        %2241 = vmatpush1.msra.mxu0 %v2198
        %2242 = vmatprep.subr.mxu0 0.0
        %2243 = vmatpush1.msra.mxu0 %v2197
        %2244 = vmatprep.subr.mxu0 0.0
        %2245 = vmatpush1.msra.mxu0 %v2196
        %2246 = vmatprep.subr.mxu0 0.0
        %2247 = vmatpush1.msra.mxu0 %v2195
        %2248 = vmatprep.subr.mxu0 0.0
        %2249 = vmatpush1.msra.mxu0 %v2194
        %2250 = vmatprep.subr.mxu0 0.0
        %2251 = vmatpush1.msra.mxu0 %v2193
        %2252 = vmatprep.subr.mxu0 0.0
        %2253 = vmatpush2.msra.mxu0 0.0
        %2254 = vmatprep.subr.mxu0 0.0
        %2255 = vmatpush2.msra.mxu0 0.0
        %2256 = vmatprep.subr.mxu0 0.0
        %2257 = vmatpush2.msra.mxu0 0.0
        %2258 = vmatprep.subr.mxu0 0.0
        %2259 = vmatpush2.msra.mxu0 0.0
        %2260 = vmatprep.subr.mxu0 0.0
        %2261 = vmatpush2.msra.mxu0 0.0
        %2262 = vmatprep.subr.mxu0 0.0
        %2263 = vmatpush2.msra.mxu0 0.0
        %2264 = vmatprep.subr.mxu0 0.0
        %2265 = vmatpush2.msra.mxu0 0.0
        %2266 = vmatprep.subr.mxu0 0.0
        %2267 = vmatpush2.msra.mxu0 0.0
        %2268 = vmatprep.subr.mxu0 0.0
        %2269 = vmatpush2.msra.mxu0 0.0
        %2270 = vmatprep.subr.mxu0 0.0
        %2271 = vmatpush2.msra.mxu0 0.0
        %2272 = vmatprep.subr.mxu0 0.0
        %2273 = vmatpush2.msra.mxu0 0.0
        %2274 = vmatprep.subr.mxu0 0.0
        %2275 = vmatpush2.msra.mxu0 0.0
        %2276 = vmatprep.subr.mxu0 0.0
        %2277 = vmatpush2.msra.mxu0 %v2212
        %2278 = vmatprep.subr.mxu0 0.0
        %2279 = vmatpush2.msra.mxu0 %v2211
        %2280 = vmatprep.subr.mxu0 0.0
        %2281 = vmatpush2.msra.mxu0 %v2210
        %2282 = vmatprep.subr.mxu0 0.0
        %2283 = vmatpush2.msra.mxu0 %v2209
        %2284 = vmatprep.mubr.f32.mxu0 %v2215
        %2285 = vmatmul.mubr.f32.gmra.mxu0 %v2189
        %v2286 = vpop.f32.mrf.mxu0
        %v2287 = vadd.f32 0.0, %v2286
        %v2288 = vpop.f32.mrf.mxu0
        %2289 = vmatprep.mubr.f32.mxu0 %v2218
        %2290 = vmatmul.mubr.f32.gmra.mxu0 %v2191
        %v2291 = vpop.f32.mrf.mxu0
        %v2292 = vadd.f32 0.0, %v2291
        %v2293 = vpop.f32.mrf.mxu0
        %2294 = vdwg.mxu0
        %s2295 = scalar_lea.vmem %s7, 160
        %v2296 = vld [vmem:[%s2295] sm:$0xff]
        %v2297 = vld [vmem:[%s2295 + $0x8] sm:$0xff]
        %v2298 = vld [vmem:[%s2295 + $0x10] sm:$0xff]
        %v2299 = vld [vmem:[%s2295 + $0x18] sm:$0xff]
        %v2300 = vld [vmem:[%s2295 + $0x20] sm:$0xff]
        %v2301 = vld [vmem:[%s2295 + $0x28] sm:$0xff]
        %v2302 = vld [vmem:[%s2295 + $0x30] sm:$0xff]
        %v2303 = vld [vmem:[%s2295 + $0x38] sm:$0xff]
        %v2304 = vld [vmem:[%s2295 + $0x40] sm:$0xff]
        %v2305 = vld [vmem:[%s2295 + $0x48] sm:$0xff]
        %v2306 = vld [vmem:[%s2295 + $0x50] sm:$0xff]
        %v2307 = vld [vmem:[%s2295 + $0x58] sm:$0xff]
        %v2308 = vld [vmem:[%s2295 + $0x60] sm:$0xff]
        %v2309 = vld [vmem:[%s2295 + $0x68] sm:$0xff]
        %v2310 = vld [vmem:[%s2295 + $0x70] sm:$0xff]
        %v2311 = vld [vmem:[%s2295 + $0x78] sm:$0xff]
        %v2312 = vld [vmem:[%s2295 + $0x80] sm:$0xff]
        %v2313 = vld [vmem:[%s2295 + $0x88] sm:$0xff]
        %v2314 = vld [vmem:[%s2295 + $0x90] sm:$0xff]
        %v2315 = vld [vmem:[%s2295 + $0x98] sm:$0xff]
        %2316 = vmatprep.subr.mxu0 0.0
        %2317 = vmatpush1.msra.mxu0 %v2311
        %2318 = vmatprep.subr.mxu0 0.0
        %2319 = vmatpush1.msra.mxu0 %v2310
        %2320 = vmatprep.subr.mxu0 0.0
        %2321 = vmatpush1.msra.mxu0 %v2309
        %2322 = vmatprep.subr.mxu0 0.0
        %2323 = vmatpush1.msra.mxu0 %v2308
        %2324 = vmatprep.subr.mxu0 0.0
        %2325 = vmatpush1.msra.mxu0 %v2307
        %2326 = vmatprep.subr.mxu0 0.0
        %2327 = vmatpush1.msra.mxu0 %v2306
        %2328 = vmatprep.subr.mxu0 0.0
        %2329 = vmatpush1.msra.mxu0 %v2305
        %2330 = vmatprep.subr.mxu0 0.0
        %2331 = vmatpush1.msra.mxu0 %v2304
        %2332 = vmatprep.subr.mxu0 0.0
        %2333 = vmatpush1.msra.mxu0 %v2303
        %2334 = vmatprep.subr.mxu0 0.0
        %2335 = vmatpush1.msra.mxu0 %v2302
        %2336 = vmatprep.subr.mxu0 0.0
        %2337 = vmatpush1.msra.mxu0 %v2301
        %2338 = vmatprep.subr.mxu0 0.0
        %2339 = vmatpush1.msra.mxu0 %v2300
        %2340 = vmatprep.subr.mxu0 0.0
        %2341 = vmatpush1.msra.mxu0 %v2299
        %2342 = vmatprep.subr.mxu0 0.0
        %2343 = vmatpush1.msra.mxu0 %v2298
        %2344 = vmatprep.subr.mxu0 0.0
        %2345 = vmatpush1.msra.mxu0 %v2297
        %2346 = vmatprep.subr.mxu0 0.0
        %2347 = vmatpush1.msra.mxu0 %v2296
        %2348 = vmatprep.subr.mxu0 0.0
        %2349 = vmatpush2.msra.mxu0 0.0
        %2350 = vmatprep.subr.mxu0 0.0
        %2351 = vmatpush2.msra.mxu0 0.0
        %2352 = vmatprep.subr.mxu0 0.0
        %2353 = vmatpush2.msra.mxu0 0.0
        %2354 = vmatprep.subr.mxu0 0.0
        %2355 = vmatpush2.msra.mxu0 0.0
        %2356 = vmatprep.subr.mxu0 0.0
        %2357 = vmatpush2.msra.mxu0 0.0
        %2358 = vmatprep.subr.mxu0 0.0
        %2359 = vmatpush2.msra.mxu0 0.0
        %2360 = vmatprep.subr.mxu0 0.0
        %2361 = vmatpush2.msra.mxu0 0.0
        %2362 = vmatprep.subr.mxu0 0.0
        %2363 = vmatpush2.msra.mxu0 0.0
        %2364 = vmatprep.subr.mxu0 0.0
        %2365 = vmatpush2.msra.mxu0 0.0
        %2366 = vmatprep.subr.mxu0 0.0
        %2367 = vmatpush2.msra.mxu0 0.0
        %2368 = vmatprep.subr.mxu0 0.0
        %2369 = vmatpush2.msra.mxu0 0.0
        %2370 = vmatprep.subr.mxu0 0.0
        %2371 = vmatpush2.msra.mxu0 0.0
        %2372 = vmatprep.subr.mxu0 0.0
        %2373 = vmatpush2.msra.mxu0 %v2315
        %2374 = vmatprep.subr.mxu0 0.0
        %2375 = vmatpush2.msra.mxu0 %v2314
        %2376 = vmatprep.subr.mxu0 0.0
        %2377 = vmatpush2.msra.mxu0 %v2313
        %2378 = vmatprep.subr.mxu0 0.0
        %2379 = vmatpush2.msra.mxu0 %v2312
        %2380 = vmatprep.mubr.f32.mxu0 %v2215
        %2381 = vmatmul.mubr.f32.gmra.mxu0 %v2189
        %v2382 = vpop.f32.mrf.mxu0
        %v2383 = vadd.f32 0.0, %v2382
        %v2384 = vpop.f32.mrf.mxu0
        %2385 = vmatprep.mubr.f32.mxu0 %v2218
        %2386 = vmatmul.mubr.f32.gmra.mxu0 %v2191
        %v2387 = vpop.f32.mrf.mxu0
        %v2388 = vadd.f32 0.0, %v2387
        %v2389 = vpop.f32.mrf.mxu0
        %2390 = vdwg.mxu0
        %v2391 = vmax.f32 %v2287, %v2383
        %v2392 = vmax.f32 %v2292, %v2388
        %v2393 = vld [vmem:[%s8] sm:$0x1f]
        %vm2394 = vcmask 80896
        %v2396 = vsel %vm2394, %v2393, 0
        %vm2398 = vcmask 1041408
        %v2400 = vsel %vm2398, %v2392, 0
        %2402 = vmatprep.subr.mxu0 0.0
        %2403 = vmatpush1.msra.mxu0 0.0
        %2404 = vmatprep.subr.mxu0 0.0
        %2405 = vmatpush1.msra.mxu0 0.0
        %2406 = vmatprep.subr.mxu0 0.0
        %2407 = vmatpush1.msra.mxu0 0.0
        %2408 = vmatprep.subr.mxu0 0.0
        %2409 = vmatpush1.msra.mxu0 0.0
        %2410 = vmatprep.subr.mxu0 0.0
        %2411 = vmatpush1.msra.mxu0 0.0
        %2412 = vmatprep.subr.mxu0 0.0
        %2413 = vmatpush1.msra.mxu0 0.0
        %2414 = vmatprep.subr.mxu0 0.0
        %2415 = vmatpush1.msra.mxu0 0.0
        %2416 = vmatprep.subr.mxu0 0.0
        %2417 = vmatpush1.msra.mxu0 0.0
        %2418 = vmatprep.subr.mxu0 0.0
        %2419 = vmatpush1.msra.mxu0 0.0
        %2420 = vmatprep.subr.mxu0 0.0
        %2421 = vmatpush1.msra.mxu0 0.0
        %2422 = vmatprep.subr.mxu0 0.0
        %2423 = vmatpush1.msra.mxu0 0.0
        %2424 = vmatprep.subr.mxu0 0.0
        %2425 = vmatpush1.msra.mxu0 0.0
        %2426 = vmatprep.subr.mxu0 0.0
        %2427 = vmatpush1.msra.mxu0 0.0
        %2428 = vmatprep.subr.mxu0 0.0
        %2429 = vmatpush1.msra.mxu0 0.0
        %2430 = vmatprep.subr.mxu0 0.0
        %2431 = vmatpush1.msra.mxu0 %v2400
        %2432 = vmatprep.subr.mxu0 0.0
        %2433 = vmatpush1.msra.mxu0 %v2391
        %2434 = vmatprep.subr.mxu0 0.0
        %2435 = vmatpush2.msra.mxu0 0.0
        %2436 = vmatprep.subr.mxu0 0.0
        %2437 = vmatpush2.msra.mxu0 0.0
        %2438 = vmatprep.subr.mxu0 0.0
        %2439 = vmatpush2.msra.mxu0 0.0
        %2440 = vmatprep.subr.mxu0 0.0
        %2441 = vmatpush2.msra.mxu0 0.0
        %2442 = vmatprep.subr.mxu0 0.0
        %2443 = vmatpush2.msra.mxu0 0.0
        %2444 = vmatprep.subr.mxu0 0.0
        %2445 = vmatpush2.msra.mxu0 0.0
        %2446 = vmatprep.subr.mxu0 0.0
        %2447 = vmatpush2.msra.mxu0 0.0
        %2448 = vmatprep.subr.mxu0 0.0
        %2449 = vmatpush2.msra.mxu0 0.0
        %2450 = vmatprep.subr.mxu0 0.0
        %2451 = vmatpush2.msra.mxu0 0.0
        %2452 = vmatprep.subr.mxu0 0.0
        %2453 = vmatpush2.msra.mxu0 0.0
        %2454 = vmatprep.subr.mxu0 0.0
        %2455 = vmatpush2.msra.mxu0 0.0
        %2456 = vmatprep.subr.mxu0 0.0
        %2457 = vmatpush2.msra.mxu0 0.0
        %2458 = vmatprep.subr.mxu0 0.0
        %2459 = vmatpush2.msra.mxu0 0.0
        %2460 = vmatprep.subr.mxu0 0.0
        %2461 = vmatpush2.msra.mxu0 0.0
        %2462 = vmatprep.subr.mxu0 0.0
        %2463 = vmatpush2.msra.mxu0 0.0
        %2464 = vmatprep.subr.mxu0 0.0
        %2465 = vmatpush2.msra.mxu0 0.0
        %2466 = vmatprep.mubr.f32.mxu0 0.0
        %2467 = vmatmul.mubr.f32.gmra.mxu0 %v2396
        %v2468 = vpop.f32.mrf.mxu0
        %v2469 = vadd.f32 0.0, %v2468
        %v2470 = vpop.f32.mrf.mxu0
        %2471 = vdwg.mxu0
        %s2472 = scalar_lea.vmem %s8, 8
        %v2473 = vld [vmem:[%s2472] sm:$0x1f]
        %v2475 = vsel %vm2394, %v2473, 0
        %2477 = vmatprep.subr.mxu0 0.0
        %2478 = vmatpush1.msra.mxu0 0.0
        %2479 = vmatprep.subr.mxu0 0.0
        %2480 = vmatpush1.msra.mxu0 0.0
        %2481 = vmatprep.subr.mxu0 0.0
        %2482 = vmatpush1.msra.mxu0 0.0
        %2483 = vmatprep.subr.mxu0 0.0
        %2484 = vmatpush1.msra.mxu0 0.0
        %2485 = vmatprep.subr.mxu0 0.0
        %2486 = vmatpush1.msra.mxu0 0.0
        %2487 = vmatprep.subr.mxu0 0.0
        %2488 = vmatpush1.msra.mxu0 0.0
        %2489 = vmatprep.subr.mxu0 0.0
        %2490 = vmatpush1.msra.mxu0 0.0
        %2491 = vmatprep.subr.mxu0 0.0
        %2492 = vmatpush1.msra.mxu0 0.0
        %2493 = vmatprep.subr.mxu0 0.0
        %2494 = vmatpush1.msra.mxu0 0.0
        %2495 = vmatprep.subr.mxu0 0.0
        %2496 = vmatpush1.msra.mxu0 0.0
        %2497 = vmatprep.subr.mxu0 0.0
        %2498 = vmatpush1.msra.mxu0 0.0
        %2499 = vmatprep.subr.mxu0 0.0
        %2500 = vmatpush1.msra.mxu0 0.0
        %2501 = vmatprep.subr.mxu0 0.0
        %2502 = vmatpush1.msra.mxu0 0.0
        %2503 = vmatprep.subr.mxu0 0.0
        %2504 = vmatpush1.msra.mxu0 0.0
        %2505 = vmatprep.subr.mxu0 0.0
        %2506 = vmatpush1.msra.mxu0 %v2400
        %2507 = vmatprep.subr.mxu0 0.0
        %2508 = vmatpush1.msra.mxu0 %v2391
        %2509 = vmatprep.subr.mxu0 0.0
        %2510 = vmatpush2.msra.mxu0 0.0
        %2511 = vmatprep.subr.mxu0 0.0
        %2512 = vmatpush2.msra.mxu0 0.0
        %2513 = vmatprep.subr.mxu0 0.0
        %2514 = vmatpush2.msra.mxu0 0.0
        %2515 = vmatprep.subr.mxu0 0.0
        %2516 = vmatpush2.msra.mxu0 0.0
        %2517 = vmatprep.subr.mxu0 0.0
        %2518 = vmatpush2.msra.mxu0 0.0
        %2519 = vmatprep.subr.mxu0 0.0
        %2520 = vmatpush2.msra.mxu0 0.0
        %2521 = vmatprep.subr.mxu0 0.0
        %2522 = vmatpush2.msra.mxu0 0.0
        %2523 = vmatprep.subr.mxu0 0.0
        %2524 = vmatpush2.msra.mxu0 0.0
        %2525 = vmatprep.subr.mxu0 0.0
        %2526 = vmatpush2.msra.mxu0 0.0
        %2527 = vmatprep.subr.mxu0 0.0
        %2528 = vmatpush2.msra.mxu0 0.0
        %2529 = vmatprep.subr.mxu0 0.0
        %2530 = vmatpush2.msra.mxu0 0.0
        %2531 = vmatprep.subr.mxu0 0.0
        %2532 = vmatpush2.msra.mxu0 0.0
        %2533 = vmatprep.subr.mxu0 0.0
        %2534 = vmatpush2.msra.mxu0 0.0
        %2535 = vmatprep.subr.mxu0 0.0
        %2536 = vmatpush2.msra.mxu0 0.0
        %2537 = vmatprep.subr.mxu0 0.0
        %2538 = vmatpush2.msra.mxu0 0.0
        %2539 = vmatprep.subr.mxu0 0.0
        %2540 = vmatpush2.msra.mxu0 0.0
        %2541 = vmatprep.mubr.f32.mxu0 0.0
        %2542 = vmatmul.mubr.f32.gmra.mxu0 %v2475
        %v2543 = vpop.f32.mrf.mxu0
        %v2544 = vadd.f32 0.0, %v2543
        %v2545 = vpop.f32.mrf.mxu0
        %2546 = vdwg.mxu0
        %v2547 = vmax.f32 %v2469, %v2544
        %v2548 = vld [vmem:[%s9] sm:$0xff]
        %v2549 = vld [vmem:[%s9 + $0x8] sm:$0xff]
        %v2550 = vld [vmem:[%s9 + $0x10] sm:$0xff]
        %v2551 = vld [vmem:[%s9 + $0x18] sm:$0xff]
        %v2552 = vld [vmem:[%s9 + $0x20] sm:$0xff]
        %v2553 = vld [vmem:[%s9 + $0x28] sm:$0xff]
        %v2554 = vld [vmem:[%s9 + $0x30] sm:$0xff]
        %v2555 = vld [vmem:[%s9 + $0x38] sm:$0xff]
        %v2556 = vld [vmem:[%s9 + $0x40] sm:$0xff]
        %v2557 = vld [vmem:[%s9 + $0x48] sm:$0xff]
        %s2558 = scalar_lea.vmem %s9, 80
        %v2559 = vld [vmem:[%s2558] sm:$0xff]
        %v2560 = vld [vmem:[%s2558 + $0x8] sm:$0xff]
        %v2561 = vld [vmem:[%s2558 + $0x10] sm:$0xff]
        %v2562 = vld [vmem:[%s2558 + $0x18] sm:$0xff]
        %v2563 = vld [vmem:[%s2558 + $0x20] sm:$0xff]
        %v2564 = vld [vmem:[%s2558 + $0x28] sm:$0xff]
        %v2565 = vld [vmem:[%s2558 + $0x30] sm:$0xff]
        %v2566 = vld [vmem:[%s2558 + $0x38] sm:$0xff]
        %v2567 = vld [vmem:[%s2558 + $0x40] sm:$0xff]
        %v2568 = vld [vmem:[%s2558 + $0x48] sm:$0xff]
        %v2570 = vrot.slane %v2547, 1
        %vm2571 = vcmask 654336
        %v2572 = vsel %vm2571, %v2570, 0
        %2574 = vmatprep.subr.mxu0 0.0
        %2575 = vmatpush1.msra.mxu0 0.0
        %2576 = vmatprep.subr.mxu0 0.0
        %2577 = vmatpush1.msra.mxu0 0.0
        %2578 = vmatprep.subr.mxu0 0.0
        %2579 = vmatpush1.msra.mxu0 0.0
        %2580 = vmatprep.subr.mxu0 0.0
        %2581 = vmatpush1.msra.mxu0 0.0
        %2582 = vmatprep.subr.mxu0 0.0
        %2583 = vmatpush1.msra.mxu0 0.0
        %2584 = vmatprep.subr.mxu0 0.0
        %2585 = vmatpush1.msra.mxu0 0.0
        %2586 = vmatprep.subr.mxu0 0.0
        %2587 = vmatpush1.msra.mxu0 %v2568
        %2588 = vmatprep.subr.mxu0 0.0
        %2589 = vmatpush1.msra.mxu0 %v2567
        %2590 = vmatprep.subr.mxu0 0.0
        %2591 = vmatpush1.msra.mxu0 %v2566
        %2592 = vmatprep.subr.mxu0 0.0
        %2593 = vmatpush1.msra.mxu0 %v2565
        %2594 = vmatprep.subr.mxu0 0.0
        %2595 = vmatpush1.msra.mxu0 %v2564
        %2596 = vmatprep.subr.mxu0 0.0
        %2597 = vmatpush1.msra.mxu0 %v2563
        %2598 = vmatprep.subr.mxu0 0.0
        %2599 = vmatpush1.msra.mxu0 %v2562
        %2600 = vmatprep.subr.mxu0 0.0
        %2601 = vmatpush1.msra.mxu0 %v2561
        %2602 = vmatprep.subr.mxu0 0.0
        %2603 = vmatpush1.msra.mxu0 %v2560
        %2604 = vmatprep.subr.mxu0 0.0
        %2605 = vmatpush1.msra.mxu0 %v2559
        %2606 = vmatprep.subr.mxu0 0.0
        %2607 = vmatpush2.msra.mxu0 0.0
        %2608 = vmatprep.subr.mxu0 0.0
        %2609 = vmatpush2.msra.mxu0 0.0
        %2610 = vmatprep.subr.mxu0 0.0
        %2611 = vmatpush2.msra.mxu0 0.0
        %2612 = vmatprep.subr.mxu0 0.0
        %2613 = vmatpush2.msra.mxu0 0.0
        %2614 = vmatprep.subr.mxu0 0.0
        %2615 = vmatpush2.msra.mxu0 0.0
        %2616 = vmatprep.subr.mxu0 0.0
        %2617 = vmatpush2.msra.mxu0 0.0
        %2618 = vmatprep.subr.mxu0 0.0
        %2619 = vmatpush2.msra.mxu0 0.0
        %2620 = vmatprep.subr.mxu0 0.0
        %2621 = vmatpush2.msra.mxu0 0.0
        %2622 = vmatprep.subr.mxu0 0.0
        %2623 = vmatpush2.msra.mxu0 0.0
        %2624 = vmatprep.subr.mxu0 0.0
        %2625 = vmatpush2.msra.mxu0 0.0
        %2626 = vmatprep.subr.mxu0 0.0
        %2627 = vmatpush2.msra.mxu0 0.0
        %2628 = vmatprep.subr.mxu0 0.0
        %2629 = vmatpush2.msra.mxu0 0.0
        %2630 = vmatprep.subr.mxu0 0.0
        %2631 = vmatpush2.msra.mxu0 0.0
        %2632 = vmatprep.subr.mxu0 0.0
        %2633 = vmatpush2.msra.mxu0 0.0
        %2634 = vmatprep.subr.mxu0 0.0
        %2635 = vmatpush2.msra.mxu0 0.0
        %2636 = vmatprep.subr.mxu0 0.0
        %2637 = vmatpush2.msra.mxu0 0.0
        %2638 = vmatprep.mubr.f32.mxu0 0.0
        %2639 = vmatmul.mubr.f32.gmra.mxu0 %v2572
        %v2640 = vpop.f32.mrf.mxu0
        %v2641 = vadd.f32 0.0, %v2640
        %v2642 = vpop.f32.mrf.mxu0
        %2643 = vdwg.mxu0
        %v2644 = vsel %vm2571, %v2547, 0
        %2646 = vmatprep.subr.mxu0 0.0
        %2647 = vmatpush1.msra.mxu0 0.0
        %2648 = vmatprep.subr.mxu0 0.0
        %2649 = vmatpush1.msra.mxu0 0.0
        %2650 = vmatprep.subr.mxu0 0.0
        %2651 = vmatpush1.msra.mxu0 0.0
        %2652 = vmatprep.subr.mxu0 0.0
        %2653 = vmatpush1.msra.mxu0 0.0
        %2654 = vmatprep.subr.mxu0 0.0
        %2655 = vmatpush1.msra.mxu0 0.0
        %2656 = vmatprep.subr.mxu0 0.0
        %2657 = vmatpush1.msra.mxu0 0.0
        %2658 = vmatprep.subr.mxu0 0.0
        %2659 = vmatpush1.msra.mxu0 %v2557
        %2660 = vmatprep.subr.mxu0 0.0
        %2661 = vmatpush1.msra.mxu0 %v2556
        %2662 = vmatprep.subr.mxu0 0.0
        %2663 = vmatpush1.msra.mxu0 %v2555
        %2664 = vmatprep.subr.mxu0 0.0
        %2665 = vmatpush1.msra.mxu0 %v2554
        %2666 = vmatprep.subr.mxu0 0.0
        %2667 = vmatpush1.msra.mxu0 %v2553
        %2668 = vmatprep.subr.mxu0 0.0
        %2669 = vmatpush1.msra.mxu0 %v2552
        %2670 = vmatprep.subr.mxu0 0.0
        %2671 = vmatpush1.msra.mxu0 %v2551
        %2672 = vmatprep.subr.mxu0 0.0
        %2673 = vmatpush1.msra.mxu0 %v2550
        %2674 = vmatprep.subr.mxu0 0.0
        %2675 = vmatpush1.msra.mxu0 %v2549
        %2676 = vmatprep.subr.mxu0 0.0
        %2677 = vmatpush1.msra.mxu0 %v2548
        %2678 = vmatprep.subr.mxu0 0.0
        %2679 = vmatpush2.msra.mxu0 0.0
        %2680 = vmatprep.subr.mxu0 0.0
        %2681 = vmatpush2.msra.mxu0 0.0
        %2682 = vmatprep.subr.mxu0 0.0
        %2683 = vmatpush2.msra.mxu0 0.0
        %2684 = vmatprep.subr.mxu0 0.0
        %2685 = vmatpush2.msra.mxu0 0.0
        %2686 = vmatprep.subr.mxu0 0.0
        %2687 = vmatpush2.msra.mxu0 0.0
        %2688 = vmatprep.subr.mxu0 0.0
        %2689 = vmatpush2.msra.mxu0 0.0
        %2690 = vmatprep.subr.mxu0 0.0
        %2691 = vmatpush2.msra.mxu0 0.0
        %2692 = vmatprep.subr.mxu0 0.0
        %2693 = vmatpush2.msra.mxu0 0.0
        %2694 = vmatprep.subr.mxu0 0.0
        %2695 = vmatpush2.msra.mxu0 0.0
        %2696 = vmatprep.subr.mxu0 0.0
        %2697 = vmatpush2.msra.mxu0 0.0
        %2698 = vmatprep.subr.mxu0 0.0
        %2699 = vmatpush2.msra.mxu0 0.0
        %2700 = vmatprep.subr.mxu0 0.0
        %2701 = vmatpush2.msra.mxu0 0.0
        %2702 = vmatprep.subr.mxu0 0.0
        %2703 = vmatpush2.msra.mxu0 0.0
        %2704 = vmatprep.subr.mxu0 0.0
        %2705 = vmatpush2.msra.mxu0 0.0
        %2706 = vmatprep.subr.mxu0 0.0
        %2707 = vmatpush2.msra.mxu0 0.0
        %2708 = vmatprep.subr.mxu0 0.0
        %2709 = vmatpush2.msra.mxu0 0.0
        %2710 = vmatprep.mubr.f32.mxu0 0.0
        %2711 = vmatmul.mubr.f32.gmra.mxu0 %v2644
        %v2712 = vpop.f32.mrf.mxu0
        %v2713 = vadd.f32 %v2641, %v2712
        %v2714 = vpop.f32.mrf.mxu0
        %2715 = vdwg.mxu0
        %s2716 = scalar_lea.vmem %s9, 160
        %v2717 = vld [vmem:[%s2716] sm:$0xff]
        %v2718 = vld [vmem:[%s2716 + $0x8] sm:$0xff]
        %v2719 = vld [vmem:[%s2716 + $0x10] sm:$0xff]
        %v2720 = vld [vmem:[%s2716 + $0x18] sm:$0xff]
        %v2721 = vld [vmem:[%s2716 + $0x20] sm:$0xff]
        %v2722 = vld [vmem:[%s2716 + $0x28] sm:$0xff]
        %v2723 = vld [vmem:[%s2716 + $0x30] sm:$0xff]
        %v2724 = vld [vmem:[%s2716 + $0x38] sm:$0xff]
        %v2725 = vld [vmem:[%s2716 + $0x40] sm:$0xff]
        %v2726 = vld [vmem:[%s2716 + $0x48] sm:$0xff]
        %v2727 = vrot.slane %v2547, 2
        %v2728 = vsel %vm2571, %v2727, 0
        %2730 = vmatprep.subr.mxu0 0.0
        %2731 = vmatpush1.msra.mxu0 0.0
        %2732 = vmatprep.subr.mxu0 0.0
        %2733 = vmatpush1.msra.mxu0 0.0
        %2734 = vmatprep.subr.mxu0 0.0
        %2735 = vmatpush1.msra.mxu0 0.0
        %2736 = vmatprep.subr.mxu0 0.0
        %2737 = vmatpush1.msra.mxu0 0.0
        %2738 = vmatprep.subr.mxu0 0.0
        %2739 = vmatpush1.msra.mxu0 0.0
        %2740 = vmatprep.subr.mxu0 0.0
        %2741 = vmatpush1.msra.mxu0 0.0
        %2742 = vmatprep.subr.mxu0 0.0
        %2743 = vmatpush1.msra.mxu0 %v2726
        %2744 = vmatprep.subr.mxu0 0.0
        %2745 = vmatpush1.msra.mxu0 %v2725
        %2746 = vmatprep.subr.mxu0 0.0
        %2747 = vmatpush1.msra.mxu0 %v2724
        %2748 = vmatprep.subr.mxu0 0.0
        %2749 = vmatpush1.msra.mxu0 %v2723
        %2750 = vmatprep.subr.mxu0 0.0
        %2751 = vmatpush1.msra.mxu0 %v2722
        %2752 = vmatprep.subr.mxu0 0.0
        %2753 = vmatpush1.msra.mxu0 %v2721
        %2754 = vmatprep.subr.mxu0 0.0
        %2755 = vmatpush1.msra.mxu0 %v2720
        %2756 = vmatprep.subr.mxu0 0.0
        %2757 = vmatpush1.msra.mxu0 %v2719
        %2758 = vmatprep.subr.mxu0 0.0
        %2759 = vmatpush1.msra.mxu0 %v2718
        %2760 = vmatprep.subr.mxu0 0.0
        %2761 = vmatpush1.msra.mxu0 %v2717
        %2762 = vmatprep.subr.mxu0 0.0
        %2763 = vmatpush2.msra.mxu0 0.0
        %2764 = vmatprep.subr.mxu0 0.0
        %2765 = vmatpush2.msra.mxu0 0.0
        %2766 = vmatprep.subr.mxu0 0.0
        %2767 = vmatpush2.msra.mxu0 0.0
        %2768 = vmatprep.subr.mxu0 0.0
        %2769 = vmatpush2.msra.mxu0 0.0
        %2770 = vmatprep.subr.mxu0 0.0
        %2771 = vmatpush2.msra.mxu0 0.0
        %2772 = vmatprep.subr.mxu0 0.0
        %2773 = vmatpush2.msra.mxu0 0.0
        %2774 = vmatprep.subr.mxu0 0.0
        %2775 = vmatpush2.msra.mxu0 0.0
        %2776 = vmatprep.subr.mxu0 0.0
        %2777 = vmatpush2.msra.mxu0 0.0
        %2778 = vmatprep.subr.mxu0 0.0
        %2779 = vmatpush2.msra.mxu0 0.0
        %2780 = vmatprep.subr.mxu0 0.0
        %2781 = vmatpush2.msra.mxu0 0.0
        %2782 = vmatprep.subr.mxu0 0.0
        %2783 = vmatpush2.msra.mxu0 0.0
        %2784 = vmatprep.subr.mxu0 0.0
        %2785 = vmatpush2.msra.mxu0 0.0
        %2786 = vmatprep.subr.mxu0 0.0
        %2787 = vmatpush2.msra.mxu0 0.0
        %2788 = vmatprep.subr.mxu0 0.0
        %2789 = vmatpush2.msra.mxu0 0.0
        %2790 = vmatprep.subr.mxu0 0.0
        %2791 = vmatpush2.msra.mxu0 0.0
        %2792 = vmatprep.subr.mxu0 0.0
        %2793 = vmatpush2.msra.mxu0 0.0
        %2794 = vmatprep.mubr.f32.mxu0 0.0
        %2795 = vmatmul.mubr.f32.gmra.mxu0 %v2728
        %v2796 = vpop.f32.mrf.mxu0
        %v2797 = vadd.f32 0.0, %v2796
        %v2798 = vpop.f32.mrf.mxu0
        %2799 = vdwg.mxu0
        %v2800 = vadd.f32 %v2713, %v2797
        %s2801 = scalar_lea.vmem %s9, 240
        %v2802 = vld [vmem:[%s2801] sm:$0xff]
        %v2803 = vld [vmem:[%s2801 + $0x8] sm:$0xff]
        %v2804 = vld [vmem:[%s2801 + $0x10] sm:$0xff]
        %v2805 = vld [vmem:[%s2801 + $0x18] sm:$0xff]
        %v2806 = vld [vmem:[%s2801 + $0x20] sm:$0xff]
        %v2807 = vld [vmem:[%s2801 + $0x28] sm:$0xff]
        %v2808 = vld [vmem:[%s2801 + $0x30] sm:$0xff]
        %v2809 = vld [vmem:[%s2801 + $0x38] sm:$0xff]
        %v2810 = vld [vmem:[%s2801 + $0x40] sm:$0xff]
        %v2811 = vld [vmem:[%s2801 + $0x48] sm:$0xff]
        %v2812 = vrot.slane %v2547, 3
        %v2813 = vsel %vm2571, %v2812, 0
        %2815 = vmatprep.subr.mxu0 0.0
        %2816 = vmatpush1.msra.mxu0 0.0
        %2817 = vmatprep.subr.mxu0 0.0
        %2818 = vmatpush1.msra.mxu0 0.0
        %2819 = vmatprep.subr.mxu0 0.0
        %2820 = vmatpush1.msra.mxu0 0.0
        %2821 = vmatprep.subr.mxu0 0.0
        %2822 = vmatpush1.msra.mxu0 0.0
        %2823 = vmatprep.subr.mxu0 0.0
        %2824 = vmatpush1.msra.mxu0 0.0
        %2825 = vmatprep.subr.mxu0 0.0
        %2826 = vmatpush1.msra.mxu0 0.0
        %2827 = vmatprep.subr.mxu0 0.0
        %2828 = vmatpush1.msra.mxu0 %v2811
        %2829 = vmatprep.subr.mxu0 0.0
        %2830 = vmatpush1.msra.mxu0 %v2810
        %2831 = vmatprep.subr.mxu0 0.0
        %2832 = vmatpush1.msra.mxu0 %v2809
        %2833 = vmatprep.subr.mxu0 0.0
        %2834 = vmatpush1.msra.mxu0 %v2808
        %2835 = vmatprep.subr.mxu0 0.0
        %2836 = vmatpush1.msra.mxu0 %v2807
        %2837 = vmatprep.subr.mxu0 0.0
        %2838 = vmatpush1.msra.mxu0 %v2806
        %2839 = vmatprep.subr.mxu0 0.0
        %2840 = vmatpush1.msra.mxu0 %v2805
        %2841 = vmatprep.subr.mxu0 0.0
        %2842 = vmatpush1.msra.mxu0 %v2804
        %2843 = vmatprep.subr.mxu0 0.0
        %2844 = vmatpush1.msra.mxu0 %v2803
        %2845 = vmatprep.subr.mxu0 0.0
        %2846 = vmatpush1.msra.mxu0 %v2802
        %2847 = vmatprep.subr.mxu0 0.0
        %2848 = vmatpush2.msra.mxu0 0.0
        %2849 = vmatprep.subr.mxu0 0.0
        %2850 = vmatpush2.msra.mxu0 0.0
        %2851 = vmatprep.subr.mxu0 0.0
        %2852 = vmatpush2.msra.mxu0 0.0
        %2853 = vmatprep.subr.mxu0 0.0
        %2854 = vmatpush2.msra.mxu0 0.0
        %2855 = vmatprep.subr.mxu0 0.0
        %2856 = vmatpush2.msra.mxu0 0.0
        %2857 = vmatprep.subr.mxu0 0.0
        %2858 = vmatpush2.msra.mxu0 0.0
        %2859 = vmatprep.subr.mxu0 0.0
        %2860 = vmatpush2.msra.mxu0 0.0
        %2861 = vmatprep.subr.mxu0 0.0
        %2862 = vmatpush2.msra.mxu0 0.0
        %2863 = vmatprep.subr.mxu0 0.0
        %2864 = vmatpush2.msra.mxu0 0.0
        %2865 = vmatprep.subr.mxu0 0.0
        %2866 = vmatpush2.msra.mxu0 0.0
        %2867 = vmatprep.subr.mxu0 0.0
        %2868 = vmatpush2.msra.mxu0 0.0
        %2869 = vmatprep.subr.mxu0 0.0
        %2870 = vmatpush2.msra.mxu0 0.0
        %2871 = vmatprep.subr.mxu0 0.0
        %2872 = vmatpush2.msra.mxu0 0.0
        %2873 = vmatprep.subr.mxu0 0.0
        %2874 = vmatpush2.msra.mxu0 0.0
        %2875 = vmatprep.subr.mxu0 0.0
        %2876 = vmatpush2.msra.mxu0 0.0
        %2877 = vmatprep.subr.mxu0 0.0
        %2878 = vmatpush2.msra.mxu0 0.0
        %2879 = vmatprep.mubr.f32.mxu0 0.0
        %2880 = vmatmul.mubr.f32.gmra.mxu0 %v2813
        %v2881 = vpop.f32.mrf.mxu0
        %v2882 = vadd.f32 0.0, %v2881
        %v2883 = vpop.f32.mrf.mxu0
        %2884 = vdwg.mxu0
        %v2885 = vadd.f32 %v2800, %v2882
        %s2886 = scalar_lea.vmem %s9, 320
        %v2887 = vld [vmem:[%s2886] sm:$0xff]
        %v2888 = vld [vmem:[%s2886 + $0x8] sm:$0xff]
        %v2889 = vld [vmem:[%s2886 + $0x10] sm:$0xff]
        %v2890 = vld [vmem:[%s2886 + $0x18] sm:$0xff]
        %v2891 = vld [vmem:[%s2886 + $0x20] sm:$0xff]
        %v2892 = vld [vmem:[%s2886 + $0x28] sm:$0xff]
        %v2893 = vld [vmem:[%s2886 + $0x30] sm:$0xff]
        %v2894 = vld [vmem:[%s2886 + $0x38] sm:$0xff]
        %v2895 = vld [vmem:[%s2886 + $0x40] sm:$0xff]
        %v2896 = vld [vmem:[%s2886 + $0x48] sm:$0xff]
        %v2897 = vrot.slane %v2547, 4
        %v2898 = vsel %vm2571, %v2897, 0
        %2900 = vmatprep.subr.mxu0 0.0
        %2901 = vmatpush1.msra.mxu0 0.0
        %2902 = vmatprep.subr.mxu0 0.0
        %2903 = vmatpush1.msra.mxu0 0.0
        %2904 = vmatprep.subr.mxu0 0.0
        %2905 = vmatpush1.msra.mxu0 0.0
        %2906 = vmatprep.subr.mxu0 0.0
        %2907 = vmatpush1.msra.mxu0 0.0
        %2908 = vmatprep.subr.mxu0 0.0
        %2909 = vmatpush1.msra.mxu0 0.0
        %2910 = vmatprep.subr.mxu0 0.0
        %2911 = vmatpush1.msra.mxu0 0.0
        %2912 = vmatprep.subr.mxu0 0.0
        %2913 = vmatpush1.msra.mxu0 %v2896
        %2914 = vmatprep.subr.mxu0 0.0
        %2915 = vmatpush1.msra.mxu0 %v2895
        %2916 = vmatprep.subr.mxu0 0.0
        %2917 = vmatpush1.msra.mxu0 %v2894
        %2918 = vmatprep.subr.mxu0 0.0
        %2919 = vmatpush1.msra.mxu0 %v2893
        %2920 = vmatprep.subr.mxu0 0.0
        %2921 = vmatpush1.msra.mxu0 %v2892
        %2922 = vmatprep.subr.mxu0 0.0
        %2923 = vmatpush1.msra.mxu0 %v2891
        %2924 = vmatprep.subr.mxu0 0.0
        %2925 = vmatpush1.msra.mxu0 %v2890
        %2926 = vmatprep.subr.mxu0 0.0
        %2927 = vmatpush1.msra.mxu0 %v2889
        %2928 = vmatprep.subr.mxu0 0.0
        %2929 = vmatpush1.msra.mxu0 %v2888
        %2930 = vmatprep.subr.mxu0 0.0
        %2931 = vmatpush1.msra.mxu0 %v2887
        %2932 = vmatprep.subr.mxu0 0.0
        %2933 = vmatpush2.msra.mxu0 0.0
        %2934 = vmatprep.subr.mxu0 0.0
        %2935 = vmatpush2.msra.mxu0 0.0
        %2936 = vmatprep.subr.mxu0 0.0
        %2937 = vmatpush2.msra.mxu0 0.0
        %2938 = vmatprep.subr.mxu0 0.0
        %2939 = vmatpush2.msra.mxu0 0.0
        %2940 = vmatprep.subr.mxu0 0.0
        %2941 = vmatpush2.msra.mxu0 0.0
        %2942 = vmatprep.subr.mxu0 0.0
        %2943 = vmatpush2.msra.mxu0 0.0
        %2944 = vmatprep.subr.mxu0 0.0
        %2945 = vmatpush2.msra.mxu0 0.0
        %2946 = vmatprep.subr.mxu0 0.0
        %2947 = vmatpush2.msra.mxu0 0.0
        %2948 = vmatprep.subr.mxu0 0.0
        %2949 = vmatpush2.msra.mxu0 0.0
        %2950 = vmatprep.subr.mxu0 0.0
        %2951 = vmatpush2.msra.mxu0 0.0
        %2952 = vmatprep.subr.mxu0 0.0
        %2953 = vmatpush2.msra.mxu0 0.0
        %2954 = vmatprep.subr.mxu0 0.0
        %2955 = vmatpush2.msra.mxu0 0.0
        %2956 = vmatprep.subr.mxu0 0.0
        %2957 = vmatpush2.msra.mxu0 0.0
        %2958 = vmatprep.subr.mxu0 0.0
        %2959 = vmatpush2.msra.mxu0 0.0
        %2960 = vmatprep.subr.mxu0 0.0
        %2961 = vmatpush2.msra.mxu0 0.0
        %2962 = vmatprep.subr.mxu0 0.0
        %2963 = vmatpush2.msra.mxu0 0.0
        %2964 = vmatprep.mubr.f32.mxu0 0.0
        %2965 = vmatmul.mubr.f32.gmra.mxu0 %v2898
        %v2966 = vpop.f32.mrf.mxu0
        %v2967 = vadd.f32 0.0, %v2966
        %v2968 = vpop.f32.mrf.mxu0
        %2969 = vdwg.mxu0
        %v2970 = vadd.f32 %v2885, %v2967
        %v2971 = vld [vmem:[%s10] sm:$0x1]
        %v2972 = vadd.f32 %v2970, %v2971
        %v2973 = vmax.f32 %v2972, 0.0
        %v2974 = vld [vmem:[%s11] sm:$0xff]
        %v2975 = vld [vmem:[%s11 + $0x8] sm:$0xff]
        %v2976 = vld [vmem:[%s11 + $0x10] sm:$0xff]
        %v2977 = vld [vmem:[%s11 + $0x18] sm:$0xff]
        %v2978 = vld [vmem:[%s11 + $0x20] sm:$0xff]
        %v2979 = vld [vmem:[%s11 + $0x28] sm:$0xff]
        %v2980 = vld [vmem:[%s11 + $0x30] sm:$0xff]
        %v2981 = vld [vmem:[%s11 + $0x38] sm:$0xff]
        %v2982 = vld [vmem:[%s11 + $0x40] sm:$0xff]
        %v2983 = vld [vmem:[%s11 + $0x48] sm:$0xff]
        %v2984 = vld [vmem:[%s11 + $0x50] sm:$0xff]
        %v2985 = vld [vmem:[%s11 + $0x58] sm:$0xff]
        %v2986 = vld [vmem:[%s11 + $0x60] sm:$0xff]
        %v2987 = vld [vmem:[%s11 + $0x68] sm:$0xff]
        %v2988 = vld [vmem:[%s11 + $0x70] sm:$0xff]
        %v2989 = vld [vmem:[%s12] sm:$0x1]
        %vm2990 = vcmask 982016
        %v2992 = vsel %vm2990, %v2973, 0
        %2994 = vmatprep.subr.mxu0 0.0
        %2995 = vmatpush1.msra.mxu0 0.0
        %2996 = vmatprep.subr.mxu0 0.0
        %2997 = vmatpush1.msra.mxu0 %v2988
        %2998 = vmatprep.subr.mxu0 0.0
        %2999 = vmatpush1.msra.mxu0 %v2987
        %3000 = vmatprep.subr.mxu0 0.0
        %3001 = vmatpush1.msra.mxu0 %v2986
        %3002 = vmatprep.subr.mxu0 0.0
        %3003 = vmatpush1.msra.mxu0 %v2985
        %3004 = vmatprep.subr.mxu0 0.0
        %3005 = vmatpush1.msra.mxu0 %v2984
        %3006 = vmatprep.subr.mxu0 0.0
        %3007 = vmatpush1.msra.mxu0 %v2983
        %3008 = vmatprep.subr.mxu0 0.0
        %3009 = vmatpush1.msra.mxu0 %v2982
        %3010 = vmatprep.subr.mxu0 0.0
        %3011 = vmatpush1.msra.mxu0 %v2981
        %3012 = vmatprep.subr.mxu0 0.0
        %3013 = vmatpush1.msra.mxu0 %v2980
        %3014 = vmatprep.subr.mxu0 0.0
        %3015 = vmatpush1.msra.mxu0 %v2979
        %3016 = vmatprep.subr.mxu0 0.0
        %3017 = vmatpush1.msra.mxu0 %v2978
        %3018 = vmatprep.subr.mxu0 0.0
        %3019 = vmatpush1.msra.mxu0 %v2977
        %3020 = vmatprep.subr.mxu0 0.0
        %3021 = vmatpush1.msra.mxu0 %v2976
        %3022 = vmatprep.subr.mxu0 0.0
        %3023 = vmatpush1.msra.mxu0 %v2975
        %3024 = vmatprep.subr.mxu0 0.0
        %3025 = vmatpush1.msra.mxu0 %v2974
        %3026 = vmatprep.subr.mxu0 0.0
        %3027 = vmatpush2.msra.mxu0 0.0
        %3028 = vmatprep.subr.mxu0 0.0
        %3029 = vmatpush2.msra.mxu0 0.0
        %3030 = vmatprep.subr.mxu0 0.0
        %3031 = vmatpush2.msra.mxu0 0.0
        %3032 = vmatprep.subr.mxu0 0.0
        %3033 = vmatpush2.msra.mxu0 0.0
        %3034 = vmatprep.subr.mxu0 0.0
        %3035 = vmatpush2.msra.mxu0 0.0
        %3036 = vmatprep.subr.mxu0 0.0
        %3037 = vmatpush2.msra.mxu0 0.0
        %3038 = vmatprep.subr.mxu0 0.0
        %3039 = vmatpush2.msra.mxu0 0.0
        %3040 = vmatprep.subr.mxu0 0.0
        %3041 = vmatpush2.msra.mxu0 0.0
        %3042 = vmatprep.subr.mxu0 0.0
        %3043 = vmatpush2.msra.mxu0 0.0
        %3044 = vmatprep.subr.mxu0 0.0
        %3045 = vmatpush2.msra.mxu0 0.0
        %3046 = vmatprep.subr.mxu0 0.0
        %3047 = vmatpush2.msra.mxu0 0.0
        %3048 = vmatprep.subr.mxu0 0.0
        %3049 = vmatpush2.msra.mxu0 0.0
        %3050 = vmatprep.subr.mxu0 0.0
        %3051 = vmatpush2.msra.mxu0 0.0
        %3052 = vmatprep.subr.mxu0 0.0
        %3053 = vmatpush2.msra.mxu0 0.0
        %3054 = vmatprep.subr.mxu0 0.0
        %3055 = vmatpush2.msra.mxu0 0.0
        %3056 = vmatprep.subr.mxu0 0.0
        %3057 = vmatpush2.msra.mxu0 0.0
        %3058 = vmatprep.mubr.f32.mxu0 0.0
        %3059 = vmatmul.mubr.f32.gmra.mxu0 %v2992
        %v3060 = vpop.f32.mrf.mxu0
        %v3061 = vadd.f32 %v2989, %v3060
        %v3062 = vpop.f32.mrf.mxu0
        %3063 = vdwg.mxu0
        %v3064 = vmax.f32 %v3061, 0.0
        %v3065 = vld [vmem:[%s13] sm:$0xff]
        %v3066 = vld [vmem:[%s13 + $0x8] sm:$0xff]
        %v3067 = vld [vmem:[%s13 + $0x10] sm:$0xff]
        %v3068 = vld [vmem:[%s13 + $0x18] sm:$0xff]
        %v3069 = vld [vmem:[%s13 + $0x20] sm:$0xff]
        %v3070 = vld [vmem:[%s13 + $0x28] sm:$0xff]
        %v3071 = vld [vmem:[%s13 + $0x30] sm:$0xff]
        %v3072 = vld [vmem:[%s13 + $0x38] sm:$0xff]
        %v3073 = vld [vmem:[%s13 + $0x40] sm:$0xff]
        %v3074 = vld [vmem:[%s13 + $0x48] sm:$0xff]
        %v3075 = vld [vmem:[%s13 + $0x50] sm:$0xf]
        %v3076 = vld [vmem:[%s14] sm:$0x1]
        %v3078 = vsel %vm1647, %v3064, 0
        %v3081 = vsel %vm1053, %v3075, 0
        %3083 = vmatprep.subr.mxu0 0.0
        %3084 = vmatpush1.msra.mxu0 0.0
        %3085 = vmatprep.subr.mxu0 0.0
        %3086 = vmatpush1.msra.mxu0 0.0
        %3087 = vmatprep.subr.mxu0 0.0
        %3088 = vmatpush1.msra.mxu0 0.0
        %3089 = vmatprep.subr.mxu0 0.0
        %3090 = vmatpush1.msra.mxu0 0.0
        %3091 = vmatprep.subr.mxu0 0.0
        %3092 = vmatpush1.msra.mxu0 0.0
        %3093 = vmatprep.subr.mxu0 0.0
        %3094 = vmatpush1.msra.mxu0 %v3081
        %3095 = vmatprep.subr.mxu0 0.0
        %3096 = vmatpush1.msra.mxu0 %v3074
        %3097 = vmatprep.subr.mxu0 0.0
        %3098 = vmatpush1.msra.mxu0 %v3073
        %3099 = vmatprep.subr.mxu0 0.0
        %3100 = vmatpush1.msra.mxu0 %v3072
        %3101 = vmatprep.subr.mxu0 0.0
        %3102 = vmatpush1.msra.mxu0 %v3071
        %3103 = vmatprep.subr.mxu0 0.0
        %3104 = vmatpush1.msra.mxu0 %v3070
        %3105 = vmatprep.subr.mxu0 0.0
        %3106 = vmatpush1.msra.mxu0 %v3069
        %3107 = vmatprep.subr.mxu0 0.0
        %3108 = vmatpush1.msra.mxu0 %v3068
        %3109 = vmatprep.subr.mxu0 0.0
        %3110 = vmatpush1.msra.mxu0 %v3067
        %3111 = vmatprep.subr.mxu0 0.0
        %3112 = vmatpush1.msra.mxu0 %v3066
        %3113 = vmatprep.subr.mxu0 0.0
        %3114 = vmatpush1.msra.mxu0 %v3065
        %3115 = vmatprep.subr.mxu0 0.0
        %3116 = vmatpush2.msra.mxu0 0.0
        %3117 = vmatprep.subr.mxu0 0.0
        %3118 = vmatpush2.msra.mxu0 0.0
        %3119 = vmatprep.subr.mxu0 0.0
        %3120 = vmatpush2.msra.mxu0 0.0
        %3121 = vmatprep.subr.mxu0 0.0
        %3122 = vmatpush2.msra.mxu0 0.0
        %3123 = vmatprep.subr.mxu0 0.0
        %3124 = vmatpush2.msra.mxu0 0.0
        %3125 = vmatprep.subr.mxu0 0.0
        %3126 = vmatpush2.msra.mxu0 0.0
        %3127 = vmatprep.subr.mxu0 0.0
        %3128 = vmatpush2.msra.mxu0 0.0
        %3129 = vmatprep.subr.mxu0 0.0
        %3130 = vmatpush2.msra.mxu0 0.0
        %3131 = vmatprep.subr.mxu0 0.0
        %3132 = vmatpush2.msra.mxu0 0.0
        %3133 = vmatprep.subr.mxu0 0.0
        %3134 = vmatpush2.msra.mxu0 0.0
        %3135 = vmatprep.subr.mxu0 0.0
        %3136 = vmatpush2.msra.mxu0 0.0
        %3137 = vmatprep.subr.mxu0 0.0
        %3138 = vmatpush2.msra.mxu0 0.0
        %3139 = vmatprep.subr.mxu0 0.0
        %3140 = vmatpush2.msra.mxu0 0.0
        %3141 = vmatprep.subr.mxu0 0.0
        %3142 = vmatpush2.msra.mxu0 0.0
        %3143 = vmatprep.subr.mxu0 0.0
        %3144 = vmatpush2.msra.mxu0 0.0
        %3145 = vmatprep.subr.mxu0 0.0
        %3146 = vmatpush2.msra.mxu0 0.0
        %3147 = vmatprep.mubr.f32.mxu0 0.0
        %3148 = vmatmul.mubr.f32.gmra.mxu0 %v3078
        %v3149 = vpop.f32.mrf.mxu0
        %v3150 = vadd.f32 %v3076, %v3149
        %v3151 = vpop.f32.mrf.mxu0
        %3152 = vdwg.mxu0
        %vm3153 = vcmask 73728
        %3154 = vst.msk [vmem:[%s486] sm:$0x1] %vm3153, %v3150
        %s3155 = sand.u32 %s357, 1
        %s3156 = scalar_lea.sflag [#allocation3], %s3155
        %s3157 = sand.u32 %s357, 1
        %s3158 = scalar_lea.vmem [#allocation2], %s3157
        // Predicated region
        $region81: #{the_model_forward.1} parent=79 // pred_check
          %p3159 = pneg %p367
        $region82: #{the_model_forward.1} parent=79 // pred_check_branch
          %3161 = sbr.rel (%p3159) target = $region84
        $region83: #{the_model_forward.1} parent=79 // pred_region
          %s3163 = ssub.s32 16, 16
          %3164 = vsyncadd %s3156, %s3163
          %s3165 = smul.addr %s29, 16
          %s3166 = scalar_lea.hbm %s15, %s3165
          %s3168 = sshll.u32 %s3158, 4
          %s3169 = int_to_ptr.vmem [resolvable:$true] %s3168
          %3171 = dma.vmem_to_hbm [thread:$0]  %s3169, 16, %s3166, %s3156
        $region84: #{the_model_forward.1} parent=79 // pred_fallthru
          _
      $region80: #{the_model_forward.1} parent=5 // pred_fallthru
        _
      %p3172 = scmp.le.s32.totalorder 2, %s24
      // Predicated region
      $region85: #{the_model_forward.1} parent=5 // pred_check
        %p3173 = pneg %p3172
      $region86: #{the_model_forward.1} parent=5 // pred_check_branch
        %3175 = sbr.rel (%p3173) target = $region88
      $region87: #{the_model_forward.1} parent=5 // pred_region
        %s3176 = ssub.s32 %s24, 2
        // Predicated region
        $region89: #{the_model_forward.1} parent=87 // pred_check
          %p3177 = pneg %p373
        $region90: #{the_model_forward.1} parent=87 // pred_check_branch
          %3179 = sbr.rel (%p3177) target = $region92
        $region91: #{the_model_forward.1} parent=87 // pred_region
          %s3180 = sand.u32 %s358, 1
          %s3181 = scalar_lea.sflag [#allocation3], %s3180
          %s3182 = sand.u32 %s358, 1
          %s3183 = scalar_lea.vmem [#allocation2], %s3182
          %3184 = dma.done %s3181, 16
        $region92: #{the_model_forward.1} parent=87 // pred_fallthru
          _
      $region88: #{the_model_forward.1} parent=5 // pred_fallthru
        _
    $region6: #{the_model_forward.1} parent=1 // loop_footer
      %s28 = sadd.s32 1, %s24
    $region7: #{the_model_forward.1} parent=1 // loop_footer_branch
      %23 = sbr.rel target = $region3
    $region8: #{the_model_forward.1} parent=1 // loop_exit
      _
    %3185 = vsyncpa [#allocation3], 1
    %s3186 = scalar_lea.sflag [#allocation3], 1
    %3187 = vsyncpa %s3186, 1

</llo_original>
